<compile_context>
chip_gen: v7x
topology: tpu7x:2x2x1
jax: 0.10.0
libtpu: 0.0.40
codegen_flags: <defaults>
</compile_context>

<pallas_src>
import functools

import jax
import jax.numpy as jnp
from jax import lax
from jax.experimental import pallas as pl
from jax.experimental.pallas import tpu as pltpu


def lstm_cat_kernel(x_ref,            # (T*BP, D)  f32, time-major, batch-padded
                    wih0_ref,         # (D, 4H)    bf16, gate order [i,f,o,g]
                    whh0_ref,         # (H, 4H)    bf16
                    b0_ref,           # (1, 4H)    f32
                    w1_ref,           # (2H, 4H)   bf16, [W_ih1; W_hh1]
                    b1_ref,           # (1, 4H)    f32
                    wl0_ref,          # (H, 16)    f32
                    bl0_ref,          # (1, 16)    f32
                    wl1_ref,          # (16, PP)   f32, zero lane-padded
                    bl1_ref,          # (1, PP)    f32
                    out_ref,          # (BP, PP)   f32
                    xg_ref,           # scratch VMEM (T*BP, 4H) f32
                    hcat_ref):        # scratch VMEM (BP, 2H)   bf16  [h1|h2]
    BP = out_ref.shape[0]
    H = whh0_ref.shape[0]
    T = x_ref.shape[0] // BP
    f32 = jnp.float32
    bf16 = jnp.bfloat16

    # Layer-0 input projection for ALL timesteps at once (bias folded in),
    # staged into VMEM scratch so only one 8-row slice is live per step.
    xg_ref[...] = (jnp.dot(x_ref[...].astype(bf16), wih0_ref[...],
                           preferred_element_type=f32) + b0_ref[...])

    whh0 = whh0_ref[...]                              # bf16, resident
    w1 = w1_ref[...]                                  # bf16, resident
    b1 = jnp.broadcast_to(b1_ref[...], (BP, 4 * H))   # hoisted broadcast

    def gate_act(g):
        # gate order [i, f, o, g]: one contiguous sigmoid slab + one tanh slab
        s = jax.nn.sigmoid(g[:, 0:3 * H])
        return (s[:, 0:H], s[:, H:2 * H], s[:, 2 * H:3 * H],
                jnp.tanh(g[:, 3 * H:4 * H]))

    c1 = jnp.zeros((BP, H), f32)
    c2 = jnp.zeros((BP, H), f32)
    h2 = jnp.zeros((BP, H), f32)
    hcat_ref[...] = jnp.zeros((BP, 2 * H), bf16)      # h1 and h2 start at 0

    # Prologue: h1(-1) == 0, so g0(0) is just the projected input block.
    g0 = xg_ref[0:BP, :]

    # TODO(synk): dropout_inside / dropout_outside are training-only; this is
    # the eval-mode forward (identity).
    for t in range(T):                                # T=8 static -> unrolled
        # ---- layer 0, step t ----
        i0, f0, o0, gc0 = gate_act(g0)
        c1 = f0 * c1 + i0 * gc0
        h1 = o0 * jnp.tanh(c1)
        h1b = h1.astype(bf16)
        hcat_ref[:, 0:H] = h1b

        # 1-step skew: issue next step's layer-0 recurrent matmul now so the
        # MXU runs under the layer-1 EUP (sigmoid/tanh) work of this step.
        if t + 1 < T:
            g0 = (xg_ref[(t + 1) * BP:(t + 2) * BP, :]
                  + jnp.dot(h1b, whh0, preferred_element_type=f32))

        # ---- layer 1, step t: fused [h1|h2] @ [W_ih1; W_hh1] ----
        g1 = jnp.dot(hcat_ref[...], w1, preferred_element_type=f32) + b1
        i1, f1, o1, gc1 = gate_act(g1)
        c2 = f1 * c2 + i1 * gc1
        h2 = o1 * jnp.tanh(c2)
        if t + 1 < T:
            hcat_ref[:, H:2 * H] = h2.astype(bf16)

    # Head on the last hidden state: Linear(H,16) -> LeakyReLU(0.01) -> Linear.
    z = jnp.dot(h2, wl0_ref[...], preferred_element_type=f32) + bl0_ref[...]
    z = jnp.where(z >= 0, z, 0.01 * z)
    y = jnp.dot(z, wl1_ref[...], preferred_element_type=f32) + bl1_ref[...]
    out_ref[...] = y.astype(out_ref.dtype)            # unmasked lane-dense store


def prepare_params(params):
    """One-time, hoisted weight prep: gate reorder [i,f,g,o]->[i,f,o,g],
    layer-1 ih/hh concat, bf16 casts for matmul RHS, head lane-padding."""
    H = params["whh0"].shape[0]
    P = params["bl1"].shape[-1]
    PP = 128

    def reorder(w):   # permute 4H columns from torch order [i,f,g,o] to [i,f,o,g]
        return jnp.concatenate(
            [w[..., 0:H], w[..., H:2 * H], w[..., 3 * H:4 * H],
             w[..., 2 * H:3 * H]], axis=-1)

    w1_cat = jnp.concatenate([params["wih1"], params["whh1"]], axis=0)  # (2H,4H)
    return {
        "wih0": reorder(params["wih0"]).astype(jnp.bfloat16),
        "whh0": reorder(params["whh0"]).astype(jnp.bfloat16),
        "b0": reorder(params["b0"]),
        "w1": reorder(w1_cat).astype(jnp.bfloat16),
        "b1": reorder(params["b1"]),
        "wl0": params["wl0"],
        "bl0": params["bl0"],
        "wl1": jnp.pad(params["wl1"], ((0, 0), (0, PP - P))),
        "bl1": jnp.pad(params["bl1"], ((0, 0), (0, PP - P))),
    }


@functools.partial(jax.jit, static_argnames=("to_pred",))
def lstm_cat_forward(x_btd, prep, *, to_pred):
    """x_btd: (B, T, D) float32 (batch_first, like the PyTorch module)."""
    B, T, D = x_btd.shape
    H = prep["whh0"].shape[0]
    PP = prep["bl1"].shape[-1]
    BP = pl.cdiv(B, 8) * 8                  # pad batch to full sublanes

    # time-major, batch-padded, flattened to (T*BP, D) for the one-shot
    # layer-0 input projection inside the kernel
    x_tbd = jnp.transpose(x_btd, (1, 0, 2))
    x_pad = jnp.pad(x_tbd, ((0, 0), (0, BP - B), (0, 0)))
    x_flat = x_pad.reshape(T * BP, D)

    inputs = (x_flat, prep["wih0"], prep["whh0"], prep["b0"],
              prep["w1"], prep["b1"], prep["wl0"], prep["bl0"],
              prep["wl1"], prep["bl1"])

    out = pl.pallas_call(
        lstm_cat_kernel,
        out_shape=jax.ShapeDtypeStruct((BP, PP), jnp.float32),
        # single invocation, everything resident in VMEM (working set < 1 MiB)
        in_specs=[pl.BlockSpec(memory_space=pltpu.MemorySpace.VMEM)
                  for _ in inputs],
        out_specs=pl.BlockSpec(memory_space=pltpu.MemorySpace.VMEM),
        scratch_shapes=[pltpu.VMEM((T * BP, 4 * H), jnp.float32),   # xg_all
                        pltpu.VMEM((BP, 2 * H), jnp.bfloat16)],     # [h1|h2]
    )(*inputs)
    return out[:B, :to_pred]


def reference_forward(x_btd, params):
    """Pure-JAX (f32) eval-mode reference of LSTM_cat_model.forward."""
    B = x_btd.shape[0]
    H = params["whh0"].shape[0]

    def cell(h, c, inp, wih, whh, b):
        gates = jnp.dot(inp, wih) + jnp.dot(h, whh) + b
        i, f, g, o = jnp.split(gates, 4, axis=-1)
        c = jax.nn.sigmoid(f) * c + jax.nn.sigmoid(i) * jnp.tanh(g)
        h = jax.nn.sigmoid(o) * jnp.tanh(c)
        return h, c

    def step(carry, x_t):
        h1, c1, h2, c2 = carry
        h1, c1 = cell(h1, c1, x_t, params["wih0"], params["whh0"], params["b0"])
        h2, c2 = cell(h2, c2, h1, params["wih1"], params["whh1"], params["b1"])
        return (h1, c1, h2, c2), None

    init = tuple(jnp.zeros((B, H), jnp.float32) for _ in range(4))
    (h1, c1, h2, c2), _ = lax.scan(step, init, jnp.transpose(x_btd, (1, 0, 2)))
    z = jnp.dot(h2, params["wl0"]) + params["bl0"]
    z = jnp.where(z >= 0, z, 0.01 * z)
    return jnp.dot(z, params["wl1"]) + params["bl1"]


def init_params(key, input_size=32, hidden_size=128, to_pred=7):
    """Deterministic init mirroring torch's uniform(-1/sqrt(fan), 1/sqrt(fan)).
    Gate order is the torch order [i, f, g, o]; bias = b_ih + b_hh combined."""
    H = hidden_size
    keys = jax.random.split(key, 12)
    k_lstm = 1.0 / jnp.sqrt(H)
    k_l0 = 1.0 / jnp.sqrt(H)
    k_l1 = 1.0 / jnp.sqrt(16)
    u = lambda k, shape, scale: jax.random.uniform(
        k, shape, jnp.float32, -scale, scale)
    return {
        "wih0": u(keys[0], (input_size, 4 * H), k_lstm),
        "whh0": u(keys[1], (H, 4 * H), k_lstm),
        "b0":   u(keys[2], (1, 4 * H), k_lstm) + u(keys[3], (1, 4 * H), k_lstm),
        "wih1": u(keys[4], (H, 4 * H), k_lstm),
        "whh1": u(keys[5], (H, 4 * H), k_lstm),
        "b1":   u(keys[6], (1, 4 * H), k_lstm) + u(keys[7], (1, 4 * H), k_lstm),
        "wl0": u(keys[8], (H, 16), k_l0),
        "bl0": u(keys[9], (1, 16), k_l0),
        "wl1": u(keys[10], (16, to_pred), k_l1),
        "bl1": u(keys[11], (1, to_pred), k_l1),
    }


if __name__ == "__main__":
    B, T, D, H, P = 2, 8, 32, 128, 7
    root = jax.random.PRNGKey(0)
    k_x, k_p = jax.random.split(root)
    x = jax.random.normal(k_x, (B, T, D), jnp.float32)
    params = init_params(k_p, input_size=D, hidden_size=H, to_pred=P)

    prep = prepare_params(params)     # one-time hoisted weight prep
    out = jax.block_until_ready(lstm_cat_forward(x, prep, to_pred=P))
    ref = jax.block_until_ready(reference_forward(x, params))

    assert out.shape == (B, P), out.shape
    # Tolerance covers the explicit bf16 matmul-operand quantization in the
    # kernel vs. the f32 (default-precision) reference.
    assert jnp.allclose(out, ref, atol=2e-2, rtol=2e-2), (
        f"max abs diff {jnp.max(jnp.abs(out - ref))}")
    print("KERNEL_OK")
</pallas_src>

<mosaic_0001>
module attributes {stable_mosaic.version = 11 : i64} {
  func.func @lstm_cat_kernel(%arg0: memref<64x32xf32, #tpu.memory_space<vmem>>, %arg1: memref<32x512xbf16, #tpu.memory_space<vmem>>, %arg2: memref<128x512xbf16, #tpu.memory_space<vmem>>, %arg3: memref<1x512xf32, #tpu.memory_space<vmem>>, %arg4: memref<256x512xbf16, #tpu.memory_space<vmem>>, %arg5: memref<1x512xf32, #tpu.memory_space<vmem>>, %arg6: memref<128x16xf32, #tpu.memory_space<vmem>>, %arg7: memref<1x16xf32, #tpu.memory_space<vmem>>, %arg8: memref<16x128xf32, #tpu.memory_space<vmem>>, %arg9: memref<1x128xf32, #tpu.memory_space<vmem>>, %arg10: memref<8x128xf32, #tpu.memory_space<vmem>>, %arg11: memref<64x512xf32, #tpu.memory_space<vmem>>, %arg12: memref<8x256xbf16, #tpu.memory_space<vmem>>) attributes {dimension_semantics = [], scalar_prefetch = 0 : i64, scratch_operands = 2 : i64, tpu.core_type = #tpu.core_type<tc>} {
    %c0 = arith.constant 0 : index
    %c0_0 = arith.constant 0 : index
    %0 = vector.load %arg0[%c0, %c0_0] : memref<64x32xf32, #tpu.memory_space<vmem>>, vector<64x32xf32>
    %1 = arith.truncf %0 : vector<64x32xf32> to vector<64x32xbf16>
    %c0_1 = arith.constant 0 : index
    %c0_2 = arith.constant 0 : index
    %2 = vector.load %arg1[%c0_1, %c0_2] : memref<32x512xbf16, #tpu.memory_space<vmem>>, vector<32x512xbf16>
    %cst = arith.constant dense<0.000000e+00> : vector<64x512xf32>
    %3 = tpu.matmul %1, %2, %cst {dimension_numbers = #tpu.dot_dimension_numbers<[1], [0], [0], [1], [0, 0, 1, 1], [], []>} : vector<64x32xbf16>, vector<32x512xbf16>, vector<64x512xf32> -> vector<64x512xf32>
    %c0_3 = arith.constant 0 : index
    %c0_4 = arith.constant 0 : index
    %4 = vector.load %arg3[%c0_3, %c0_4] : memref<1x512xf32, #tpu.memory_space<vmem>>, vector<1x512xf32>
    %5 = vector.broadcast %4 : vector<1x512xf32> to vector<64x512xf32>
    %6 = arith.addf %3, %5 : vector<64x512xf32>
    %c0_5 = arith.constant 0 : index
    %c0_6 = arith.constant 0 : index
    %7 = vector.load %arg11[%c0_5, %c0_6] : memref<64x512xf32, #tpu.memory_space<vmem>>, vector<64x512xf32>
    tpu.vector_store %arg11[%c0_5, %c0_6], %6 {strides = array<i32>} : memref<64x512xf32, #tpu.memory_space<vmem>>, vector<64x512xf32>,
    %c0_7 = arith.constant 0 : index
    %c0_8 = arith.constant 0 : index
    %8 = vector.load %arg2[%c0_7, %c0_8] : memref<128x512xbf16, #tpu.memory_space<vmem>>, vector<128x512xbf16>
    %c0_9 = arith.constant 0 : index
    %c0_10 = arith.constant 0 : index
    %9 = vector.load %arg4[%c0_9, %c0_10] : memref<256x512xbf16, #tpu.memory_space<vmem>>, vector<256x512xbf16>
    %c0_11 = arith.constant 0 : index
    %c0_12 = arith.constant 0 : index
    %10 = vector.load %arg5[%c0_11, %c0_12] : memref<1x512xf32, #tpu.memory_space<vmem>>, vector<1x512xf32>
    %11 = vector.shape_cast %10 : vector<1x512xf32> to vector<1x512xf32>
    %12 = vector.broadcast %11 : vector<1x512xf32> to vector<8x512xf32>
    %cst_13 = arith.constant 0.000000e+00 : f32
    %13 = vector.broadcast %cst_13 : f32 to vector<8x128xf32>
    %cst_14 = arith.constant 0.000000e+00 : f32
    %14 = vector.broadcast %cst_14 : f32 to vector<8x128xf32>
    %cst_15 = arith.constant 0.000000e+00 : bf16
    %15 = vector.broadcast %cst_15 : bf16 to vector<8x256xbf16>
    %c0_16 = arith.constant 0 : index
    %c0_17 = arith.constant 0 : index
    %16 = vector.load %arg12[%c0_16, %c0_17] : memref<8x256xbf16, #tpu.memory_space<vmem>>, vector<8x256xbf16>
    tpu.vector_store %arg12[%c0_16, %c0_17], %15 {strides = array<i32>} : memref<8x256xbf16, #tpu.memory_space<vmem>>, vector<8x256xbf16>,
    %c0_18 = arith.constant 0 : index
    %c0_19 = arith.constant 0 : index
    %17 = vector.load %arg11[%c0_18, %c0_19] : memref<64x512xf32, #tpu.memory_space<vmem>>, vector<8x512xf32>
    %18 = vector.extract_strided_slice %17 {offsets = [0, 0], sizes = [8, 384], strides = [1, 1]} : vector<8x512xf32> to vector<8x384xf32>
    %19 = arith.negf %18 : vector<8x384xf32>
    %20 = math.exp %19 : vector<8x384xf32>
    %cst_20 = arith.constant 1.000000e+00 : f32
    %21 = vector.broadcast %cst_20 : f32 to vector<8x384xf32>
    %22 = arith.addf %21, %20 : vector<8x384xf32>
    %23 = arith.divf %21, %22 : vector<8x384xf32>
    %24 = vector.extract_strided_slice %23 {offsets = [0, 0], sizes = [8, 128], strides = [1, 1]} : vector<8x384xf32> to vector<8x128xf32>
    %25 = vector.extract_strided_slice %23 {offsets = [0, 128], sizes = [8, 128], strides = [1, 1]} : vector<8x384xf32> to vector<8x128xf32>
    %26 = vector.extract_strided_slice %23 {offsets = [0, 256], sizes = [8, 128], strides = [1, 1]} : vector<8x384xf32> to vector<8x128xf32>
    %27 = vector.extract_strided_slice %17 {offsets = [0, 384], sizes = [8, 128], strides = [1, 1]} : vector<8x512xf32> to vector<8x128xf32>
    %28 = math.tanh %27 : vector<8x128xf32>
    %29 = arith.mulf %25, %13 : vector<8x128xf32>
    %30 = arith.mulf %24, %28 : vector<8x128xf32>
    %31 = arith.addf %29, %30 : vector<8x128xf32>
    %32 = math.tanh %31 : vector<8x128xf32>
    %33 = arith.mulf %26, %32 : vector<8x128xf32>
    %34 = arith.truncf %33 : vector<8x128xf32> to vector<8x128xbf16>
    %c0_21 = arith.constant 0 : index
    %c0_22 = arith.constant 0 : index
    %35 = vector.load %arg12[%c0_21, %c0_22] : memref<8x256xbf16, #tpu.memory_space<vmem>>, vector<8x128xbf16>
    tpu.vector_store %arg12[%c0_21, %c0_22], %34 {strides = array<i32>} : memref<8x256xbf16, #tpu.memory_space<vmem>>, vector<8x128xbf16>,
    %c8 = arith.constant 8 : index
    %c0_23 = arith.constant 0 : index
    %36 = vector.load %arg11[%c8, %c0_23] : memref<64x512xf32, #tpu.memory_space<vmem>>, vector<8x512xf32>
    %cst_24 = arith.constant dense<0.000000e+00> : vector<8x512xf32>
    %37 = tpu.matmul %34, %8, %cst_24 {dimension_numbers = #tpu.dot_dimension_numbers<[1], [0], [0], [1], [0, 0, 1, 1], [], []>} : vector<8x128xbf16>, vector<128x512xbf16>, vector<8x512xf32> -> vector<8x512xf32>
    %38 = arith.addf %36, %37 : vector<8x512xf32>
    %c0_25 = arith.constant 0 : index
    %c0_26 = arith.constant 0 : index
    %39 = vector.load %arg12[%c0_25, %c0_26] : memref<8x256xbf16, #tpu.memory_space<vmem>>, vector<8x256xbf16>
    %cst_27 = arith.constant dense<0.000000e+00> : vector<8x512xf32>
    %40 = tpu.matmul %39, %9, %cst_27 {dimension_numbers = #tpu.dot_dimension_numbers<[1], [0], [0], [1], [0, 0, 1, 1], [], []>} : vector<8x256xbf16>, vector<256x512xbf16>, vector<8x512xf32> -> vector<8x512xf32>
    %41 = arith.addf %40, %12 : vector<8x512xf32>
    %42 = vector.extract_strided_slice %41 {offsets = [0, 0], sizes = [8, 384], strides = [1, 1]} : vector<8x512xf32> to vector<8x384xf32>
    %43 = arith.negf %42 : vector<8x384xf32>
    %44 = math.exp %43 : vector<8x384xf32>
    %cst_28 = arith.constant 1.000000e+00 : f32
    %45 = vector.broadcast %cst_28 : f32 to vector<8x384xf32>
    %46 = arith.addf %45, %44 : vector<8x384xf32>
    %47 = arith.divf %45, %46 : vector<8x384xf32>
    %48 = vector.extract_strided_slice %47 {offsets = [0, 0], sizes = [8, 128], strides = [1, 1]} : vector<8x384xf32> to vector<8x128xf32>
    %49 = vector.extract_strided_slice %47 {offsets = [0, 128], sizes = [8, 128], strides = [1, 1]} : vector<8x384xf32> to vector<8x128xf32>
    %50 = vector.extract_strided_slice %47 {offsets = [0, 256], sizes = [8, 128], strides = [1, 1]} : vector<8x384xf32> to vector<8x128xf32>
    %51 = vector.extract_strided_slice %41 {offsets = [0, 384], sizes = [8, 128], strides = [1, 1]} : vector<8x512xf32> to vector<8x128xf32>
    %52 = math.tanh %51 : vector<8x128xf32>
    %53 = arith.mulf %49, %14 : vector<8x128xf32>
    %54 = arith.mulf %48, %52 : vector<8x128xf32>
    %55 = arith.addf %53, %54 : vector<8x128xf32>
    %56 = math.tanh %55 : vector<8x128xf32>
    %57 = arith.mulf %50, %56 : vector<8x128xf32>
    %58 = arith.truncf %57 : vector<8x128xf32> to vector<8x128xbf16>
    %c0_29 = arith.constant 0 : index
    %c128 = arith.constant 128 : index
    %59 = vector.load %arg12[%c0_29, %c128] : memref<8x256xbf16, #tpu.memory_space<vmem>>, vector<8x128xbf16>
    tpu.vector_store %arg12[%c0_29, %c128], %58 {strides = array<i32>} : memref<8x256xbf16, #tpu.memory_space<vmem>>, vector<8x128xbf16>,
    %60 = vector.extract_strided_slice %38 {offsets = [0, 0], sizes = [8, 384], strides = [1, 1]} : vector<8x512xf32> to vector<8x384xf32>
    %61 = arith.negf %60 : vector<8x384xf32>
    %62 = math.exp %61 : vector<8x384xf32>
    %cst_30 = arith.constant 1.000000e+00 : f32
    %63 = vector.broadcast %cst_30 : f32 to vector<8x384xf32>
    %64 = arith.addf %63, %62 : vector<8x384xf32>
    %65 = arith.divf %63, %64 : vector<8x384xf32>
    %66 = vector.extract_strided_slice %65 {offsets = [0, 0], sizes = [8, 128], strides = [1, 1]} : vector<8x384xf32> to vector<8x128xf32>
    %67 = vector.extract_strided_slice %65 {offsets = [0, 128], sizes = [8, 128], strides = [1, 1]} : vector<8x384xf32> to vector<8x128xf32>
    %68 = vector.extract_strided_slice %65 {offsets = [0, 256], sizes = [8, 128], strides = [1, 1]} : vector<8x384xf32> to vector<8x128xf32>
    %69 = vector.extract_strided_slice %38 {offsets = [0, 384], sizes = [8, 128], strides = [1, 1]} : vector<8x512xf32> to vector<8x128xf32>
    %70 = math.tanh %69 : vector<8x128xf32>
    %71 = arith.mulf %67, %31 : vector<8x128xf32>
    %72 = arith.mulf %66, %70 : vector<8x128xf32>
    %73 = arith.addf %71, %72 : vector<8x128xf32>
    %74 = math.tanh %73 : vector<8x128xf32>
    %75 = arith.mulf %68, %74 : vector<8x128xf32>
    %76 = arith.truncf %75 : vector<8x128xf32> to vector<8x128xbf16>
    %c0_31 = arith.constant 0 : index
    %c0_32 = arith.constant 0 : index
    %77 = vector.load %arg12[%c0_31, %c0_32] : memref<8x256xbf16, #tpu.memory_space<vmem>>, vector<8x128xbf16>
    tpu.vector_store %arg12[%c0_31, %c0_32], %76 {strides = array<i32>} : memref<8x256xbf16, #tpu.memory_space<vmem>>, vector<8x128xbf16>,
    %c16 = arith.constant 16 : index
    %c0_33 = arith.constant 0 : index
    %78 = vector.load %arg11[%c16, %c0_33] : memref<64x512xf32, #tpu.memory_space<vmem>>, vector<8x512xf32>
    %cst_34 = arith.constant dense<0.000000e+00> : vector<8x512xf32>
    %79 = tpu.matmul %76, %8, %cst_34 {dimension_numbers = #tpu.dot_dimension_numbers<[1], [0], [0], [1], [0, 0, 1, 1], [], []>} : vector<8x128xbf16>, vector<128x512xbf16>, vector<8x512xf32> -> vector<8x512xf32>
    %80 = arith.addf %78, %79 : vector<8x512xf32>
    %c0_35 = arith.constant 0 : index
    %c0_36 = arith.constant 0 : index
    %81 = vector.load %arg12[%c0_35, %c0_36] : memref<8x256xbf16, #tpu.memory_space<vmem>>, vector<8x256xbf16>
    %cst_37 = arith.constant dense<0.000000e+00> : vector<8x512xf32>
    %82 = tpu.matmul %81, %9, %cst_37 {dimension_numbers = #tpu.dot_dimension_numbers<[1], [0], [0], [1], [0, 0, 1, 1], [], []>} : vector<8x256xbf16>, vector<256x512xbf16>, vector<8x512xf32> -> vector<8x512xf32>
    %83 = arith.addf %82, %12 : vector<8x512xf32>
    %84 = vector.extract_strided_slice %83 {offsets = [0, 0], sizes = [8, 384], strides = [1, 1]} : vector<8x512xf32> to vector<8x384xf32>
    %85 = arith.negf %84 : vector<8x384xf32>
    %86 = math.exp %85 : vector<8x384xf32>
    %cst_38 = arith.constant 1.000000e+00 : f32
    %87 = vector.broadcast %cst_38 : f32 to vector<8x384xf32>
    %88 = arith.addf %87, %86 : vector<8x384xf32>
    %89 = arith.divf %87, %88 : vector<8x384xf32>
    %90 = vector.extract_strided_slice %89 {offsets = [0, 0], sizes = [8, 128], strides = [1, 1]} : vector<8x384xf32> to vector<8x128xf32>
    %91 = vector.extract_strided_slice %89 {offsets = [0, 128], sizes = [8, 128], strides = [1, 1]} : vector<8x384xf32> to vector<8x128xf32>
    %92 = vector.extract_strided_slice %89 {offsets = [0, 256], sizes = [8, 128], strides = [1, 1]} : vector<8x384xf32> to vector<8x128xf32>
    %93 = vector.extract_strided_slice %83 {offsets = [0, 384], sizes = [8, 128], strides = [1, 1]} : vector<8x512xf32> to vector<8x128xf32>
    %94 = math.tanh %93 : vector<8x128xf32>
    %95 = arith.mulf %91, %55 : vector<8x128xf32>
    %96 = arith.mulf %90, %94 : vector<8x128xf32>
    %97 = arith.addf %95, %96 : vector<8x128xf32>
    %98 = math.tanh %97 : vector<8x128xf32>
    %99 = arith.mulf %92, %98 : vector<8x128xf32>
    %100 = arith.truncf %99 : vector<8x128xf32> to vector<8x128xbf16>
    %c0_39 = arith.constant 0 : index
    %c128_40 = arith.constant 128 : index
    %101 = vector.load %arg12[%c0_39, %c128_40] : memref<8x256xbf16, #tpu.memory_space<vmem>>, vector<8x128xbf16>
    tpu.vector_store %arg12[%c0_39, %c128_40], %100 {strides = array<i32>} : memref<8x256xbf16, #tpu.memory_space<vmem>>, vector<8x128xbf16>,
    %102 = vector.extract_strided_slice %80 {offsets = [0, 0], sizes = [8, 384], strides = [1, 1]} : vector<8x512xf32> to vector<8x384xf32>
    %103 = arith.negf %102 : vector<8x384xf32>
    %104 = math.exp %103 : vector<8x384xf32>
    %cst_41 = arith.constant 1.000000e+00 : f32
    %105 = vector.broadcast %cst_41 : f32 to vector<8x384xf32>
    %106 = arith.addf %105, %104 : vector<8x384xf32>
    %107 = arith.divf %105, %106 : vector<8x384xf32>
    %108 = vector.extract_strided_slice %107 {offsets = [0, 0], sizes = [8, 128], strides = [1, 1]} : vector<8x384xf32> to vector<8x128xf32>
    %109 = vector.extract_strided_slice %107 {offsets = [0, 128], sizes = [8, 128], strides = [1, 1]} : vector<8x384xf32> to vector<8x128xf32>
    %110 = vector.extract_strided_slice %107 {offsets = [0, 256], sizes = [8, 128], strides = [1, 1]} : vector<8x384xf32> to vector<8x128xf32>
    %111 = vector.extract_strided_slice %80 {offsets = [0, 384], sizes = [8, 128], strides = [1, 1]} : vector<8x512xf32> to vector<8x128xf32>
    %112 = math.tanh %111 : vector<8x128xf32>
    %113 = arith.mulf %109, %73 : vector<8x128xf32>
    %114 = arith.mulf %108, %112 : vector<8x128xf32>
    %115 = arith.addf %113, %114 : vector<8x128xf32>
    %116 = math.tanh %115 : vector<8x128xf32>
    %117 = arith.mulf %110, %116 : vector<8x128xf32>
    %118 = arith.truncf %117 : vector<8x128xf32> to vector<8x128xbf16>
    %c0_42 = arith.constant 0 : index
    %c0_43 = arith.constant 0 : index
    %119 = vector.load %arg12[%c0_42, %c0_43] : memref<8x256xbf16, #tpu.memory_space<vmem>>, vector<8x128xbf16>
    tpu.vector_store %arg12[%c0_42, %c0_43], %118 {strides = array<i32>} : memref<8x256xbf16, #tpu.memory_space<vmem>>, vector<8x128xbf16>,
    %c24 = arith.constant 24 : index
    %c0_44 = arith.constant 0 : index
    %120 = vector.load %arg11[%c24, %c0_44] : memref<64x512xf32, #tpu.memory_space<vmem>>, vector<8x512xf32>
    %cst_45 = arith.constant dense<0.000000e+00> : vector<8x512xf32>
    %121 = tpu.matmul %118, %8, %cst_45 {dimension_numbers = #tpu.dot_dimension_numbers<[1], [0], [0], [1], [0, 0, 1, 1], [], []>} : vector<8x128xbf16>, vector<128x512xbf16>, vector<8x512xf32> -> vector<8x512xf32>
    %122 = arith.addf %120, %121 : vector<8x512xf32>
    %c0_46 = arith.constant 0 : index
    %c0_47 = arith.constant 0 : index
    %123 = vector.load %arg12[%c0_46, %c0_47] : memref<8x256xbf16, #tpu.memory_space<vmem>>, vector<8x256xbf16>
    %cst_48 = arith.constant dense<0.000000e+00> : vector<8x512xf32>
    %124 = tpu.matmul %123, %9, %cst_48 {dimension_numbers = #tpu.dot_dimension_numbers<[1], [0], [0], [1], [0, 0, 1, 1], [], []>} : vector<8x256xbf16>, vector<256x512xbf16>, vector<8x512xf32> -> vector<8x512xf32>
    %125 = arith.addf %124, %12 : vector<8x512xf32>
    %126 = vector.extract_strided_slice %125 {offsets = [0, 0], sizes = [8, 384], strides = [1, 1]} : vector<8x512xf32> to vector<8x384xf32>
    %127 = arith.negf %126 : vector<8x384xf32>
    %128 = math.exp %127 : vector<8x384xf32>
    %cst_49 = arith.constant 1.000000e+00 : f32
    %129 = vector.broadcast %cst_49 : f32 to vector<8x384xf32>
    %130 = arith.addf %129, %128 : vector<8x384xf32>
    %131 = arith.divf %129, %130 : vector<8x384xf32>
    %132 = vector.extract_strided_slice %131 {offsets = [0, 0], sizes = [8, 128], strides = [1, 1]} : vector<8x384xf32> to vector<8x128xf32>
    %133 = vector.extract_strided_slice %131 {offsets = [0, 128], sizes = [8, 128], strides = [1, 1]} : vector<8x384xf32> to vector<8x128xf32>
    %134 = vector.extract_strided_slice %131 {offsets = [0, 256], sizes = [8, 128], strides = [1, 1]} : vector<8x384xf32> to vector<8x128xf32>
    %135 = vector.extract_strided_slice %125 {offsets = [0, 384], sizes = [8, 128], strides = [1, 1]} : vector<8x512xf32> to vector<8x128xf32>
    %136 = math.tanh %135 : vector<8x128xf32>
    %137 = arith.mulf %133, %97 : vector<8x128xf32>
    %138 = arith.mulf %132, %136 : vector<8x128xf32>
    %139 = arith.addf %137, %138 : vector<8x128xf32>
    %140 = math.tanh %139 : vector<8x128xf32>
    %141 = arith.mulf %134, %140 : vector<8x128xf32>
    %142 = arith.truncf %141 : vector<8x128xf32> to vector<8x128xbf16>
    %c0_50 = arith.constant 0 : index
    %c128_51 = arith.constant 128 : index
    %143 = vector.load %arg12[%c0_50, %c128_51] : memref<8x256xbf16, #tpu.memory_space<vmem>>, vector<8x128xbf16>
    tpu.vector_store %arg12[%c0_50, %c128_51], %142 {strides = array<i32>} : memref<8x256xbf16, #tpu.memory_space<vmem>>, vector<8x128xbf16>,
    %144 = vector.extract_strided_slice %122 {offsets = [0, 0], sizes = [8, 384], strides = [1, 1]} : vector<8x512xf32> to vector<8x384xf32>
    %145 = arith.negf %144 : vector<8x384xf32>
    %146 = math.exp %145 : vector<8x384xf32>
    %cst_52 = arith.constant 1.000000e+00 : f32
    %147 = vector.broadcast %cst_52 : f32 to vector<8x384xf32>
    %148 = arith.addf %147, %146 : vector<8x384xf32>
    %149 = arith.divf %147, %148 : vector<8x384xf32>
    %150 = vector.extract_strided_slice %149 {offsets = [0, 0], sizes = [8, 128], strides = [1, 1]} : vector<8x384xf32> to vector<8x128xf32>
    %151 = vector.extract_strided_slice %149 {offsets = [0, 128], sizes = [8, 128], strides = [1, 1]} : vector<8x384xf32> to vector<8x128xf32>
    %152 = vector.extract_strided_slice %149 {offsets = [0, 256], sizes = [8, 128], strides = [1, 1]} : vector<8x384xf32> to vector<8x128xf32>
    %153 = vector.extract_strided_slice %122 {offsets = [0, 384], sizes = [8, 128], strides = [1, 1]} : vector<8x512xf32> to vector<8x128xf32>
    %154 = math.tanh %153 : vector<8x128xf32>
    %155 = arith.mulf %151, %115 : vector<8x128xf32>
    %156 = arith.mulf %150, %154 : vector<8x128xf32>
    %157 = arith.addf %155, %156 : vector<8x128xf32>
    %158 = math.tanh %157 : vector<8x128xf32>
    %159 = arith.mulf %152, %158 : vector<8x128xf32>
    %160 = arith.truncf %159 : vector<8x128xf32> to vector<8x128xbf16>
    %c0_53 = arith.constant 0 : index
    %c0_54 = arith.constant 0 : index
    %161 = vector.load %arg12[%c0_53, %c0_54] : memref<8x256xbf16, #tpu.memory_space<vmem>>, vector<8x128xbf16>
    tpu.vector_store %arg12[%c0_53, %c0_54], %160 {strides = array<i32>} : memref<8x256xbf16, #tpu.memory_space<vmem>>, vector<8x128xbf16>,
    %c32 = arith.constant 32 : index
    %c0_55 = arith.constant 0 : index
    %162 = vector.load %arg11[%c32, %c0_55] : memref<64x512xf32, #tpu.memory_space<vmem>>, vector<8x512xf32>
    %cst_56 = arith.constant dense<0.000000e+00> : vector<8x512xf32>
    %163 = tpu.matmul %160, %8, %cst_56 {dimension_numbers = #tpu.dot_dimension_numbers<[1], [0], [0], [1], [0, 0, 1, 1], [], []>} : vector<8x128xbf16>, vector<128x512xbf16>, vector<8x512xf32> -> vector<8x512xf32>
    %164 = arith.addf %162, %163 : vector<8x512xf32>
    %c0_57 = arith.constant 0 : index
    %c0_58 = arith.constant 0 : index
    %165 = vector.load %arg12[%c0_57, %c0_58] : memref<8x256xbf16, #tpu.memory_space<vmem>>, vector<8x256xbf16>
    %cst_59 = arith.constant dense<0.000000e+00> : vector<8x512xf32>
    %166 = tpu.matmul %165, %9, %cst_59 {dimension_numbers = #tpu.dot_dimension_numbers<[1], [0], [0], [1], [0, 0, 1, 1], [], []>} : vector<8x256xbf16>, vector<256x512xbf16>, vector<8x512xf32> -> vector<8x512xf32>
    %167 = arith.addf %166, %12 : vector<8x512xf32>
    %168 = vector.extract_strided_slice %167 {offsets = [0, 0], sizes = [8, 384], strides = [1, 1]} : vector<8x512xf32> to vector<8x384xf32>
    %169 = arith.negf %168 : vector<8x384xf32>
    %170 = math.exp %169 : vector<8x384xf32>
    %cst_60 = arith.constant 1.000000e+00 : f32
    %171 = vector.broadcast %cst_60 : f32 to vector<8x384xf32>
    %172 = arith.addf %171, %170 : vector<8x384xf32>
    %173 = arith.divf %171, %172 : vector<8x384xf32>
    %174 = vector.extract_strided_slice %173 {offsets = [0, 0], sizes = [8, 128], strides = [1, 1]} : vector<8x384xf32> to vector<8x128xf32>
    %175 = vector.extract_strided_slice %173 {offsets = [0, 128], sizes = [8, 128], strides = [1, 1]} : vector<8x384xf32> to vector<8x128xf32>
    %176 = vector.extract_strided_slice %173 {offsets = [0, 256], sizes = [8, 128], strides = [1, 1]} : vector<8x384xf32> to vector<8x128xf32>
    %177 = vector.extract_strided_slice %167 {offsets = [0, 384], sizes = [8, 128], strides = [1, 1]} : vector<8x512xf32> to vector<8x128xf32>
    %178 = math.tanh %177 : vector<8x128xf32>
    %179 = arith.mulf %175, %139 : vector<8x128xf32>
    %180 = arith.mulf %174, %178 : vector<8x128xf32>
    %181 = arith.addf %179, %180 : vector<8x128xf32>
    %182 = math.tanh %181 : vector<8x128xf32>
    %183 = arith.mulf %176, %182 : vector<8x128xf32>
    %184 = arith.truncf %183 : vector<8x128xf32> to vector<8x128xbf16>
    %c0_61 = arith.constant 0 : index
    %c128_62 = arith.constant 128 : index
    %185 = vector.load %arg12[%c0_61, %c128_62] : memref<8x256xbf16, #tpu.memory_space<vmem>>, vector<8x128xbf16>
    tpu.vector_store %arg12[%c0_61, %c128_62], %184 {strides = array<i32>} : memref<8x256xbf16, #tpu.memory_space<vmem>>, vector<8x128xbf16>,
    %186 = vector.extract_strided_slice %164 {offsets = [0, 0], sizes = [8, 384], strides = [1, 1]} : vector<8x512xf32> to vector<8x384xf32>
    %187 = arith.negf %186 : vector<8x384xf32>
    %188 = math.exp %187 : vector<8x384xf32>
    %cst_63 = arith.constant 1.000000e+00 : f32
    %189 = vector.broadcast %cst_63 : f32 to vector<8x384xf32>
    %190 = arith.addf %189, %188 : vector<8x384xf32>
    %191 = arith.divf %189, %190 : vector<8x384xf32>
    %192 = vector.extract_strided_slice %191 {offsets = [0, 0], sizes = [8, 128], strides = [1, 1]} : vector<8x384xf32> to vector<8x128xf32>
    %193 = vector.extract_strided_slice %191 {offsets = [0, 128], sizes = [8, 128], strides = [1, 1]} : vector<8x384xf32> to vector<8x128xf32>
    %194 = vector.extract_strided_slice %191 {offsets = [0, 256], sizes = [8, 128], strides = [1, 1]} : vector<8x384xf32> to vector<8x128xf32>
    %195 = vector.extract_strided_slice %164 {offsets = [0, 384], sizes = [8, 128], strides = [1, 1]} : vector<8x512xf32> to vector<8x128xf32>
    %196 = math.tanh %195 : vector<8x128xf32>
    %197 = arith.mulf %193, %157 : vector<8x128xf32>
    %198 = arith.mulf %192, %196 : vector<8x128xf32>
    %199 = arith.addf %197, %198 : vector<8x128xf32>
    %200 = math.tanh %199 : vector<8x128xf32>
    %201 = arith.mulf %194, %200 : vector<8x128xf32>
    %202 = arith.truncf %201 : vector<8x128xf32> to vector<8x128xbf16>
    %c0_64 = arith.constant 0 : index
    %c0_65 = arith.constant 0 : index
    %203 = vector.load %arg12[%c0_64, %c0_65] : memref<8x256xbf16, #tpu.memory_space<vmem>>, vector<8x128xbf16>
    tpu.vector_store %arg12[%c0_64, %c0_65], %202 {strides = array<i32>} : memref<8x256xbf16, #tpu.memory_space<vmem>>, vector<8x128xbf16>,
    %c40 = arith.constant 40 : index
    %c0_66 = arith.constant 0 : index
    %204 = vector.load %arg11[%c40, %c0_66] : memref<64x512xf32, #tpu.memory_space<vmem>>, vector<8x512xf32>
    %cst_67 = arith.constant dense<0.000000e+00> : vector<8x512xf32>
    %205 = tpu.matmul %202, %8, %cst_67 {dimension_numbers = #tpu.dot_dimension_numbers<[1], [0], [0], [1], [0, 0, 1, 1], [], []>} : vector<8x128xbf16>, vector<128x512xbf16>, vector<8x512xf32> -> vector<8x512xf32>
    %206 = arith.addf %204, %205 : vector<8x512xf32>
    %c0_68 = arith.constant 0 : index
    %c0_69 = arith.constant 0 : index
    %207 = vector.load %arg12[%c0_68, %c0_69] : memref<8x256xbf16, #tpu.memory_space<vmem>>, vector<8x256xbf16>
    %cst_70 = arith.constant dense<0.000000e+00> : vector<8x512xf32>
    %208 = tpu.matmul %207, %9, %cst_70 {dimension_numbers = #tpu.dot_dimension_numbers<[1], [0], [0], [1], [0, 0, 1, 1], [], []>} : vector<8x256xbf16>, vector<256x512xbf16>, vector<8x512xf32> -> vector<8x512xf32>
    %209 = arith.addf %208, %12 : vector<8x512xf32>
    %210 = vector.extract_strided_slice %209 {offsets = [0, 0], sizes = [8, 384], strides = [1, 1]} : vector<8x512xf32> to vector<8x384xf32>
    %211 = arith.negf %210 : vector<8x384xf32>
    %212 = math.exp %211 : vector<8x384xf32>
    %cst_71 = arith.constant 1.000000e+00 : f32
    %213 = vector.broadcast %cst_71 : f32 to vector<8x384xf32>
    %214 = arith.addf %213, %212 : vector<8x384xf32>
    %215 = arith.divf %213, %214 : vector<8x384xf32>
    %216 = vector.extract_strided_slice %215 {offsets = [0, 0], sizes = [8, 128], strides = [1, 1]} : vector<8x384xf32> to vector<8x128xf32>
    %217 = vector.extract_strided_slice %215 {offsets = [0, 128], sizes = [8, 128], strides = [1, 1]} : vector<8x384xf32> to vector<8x128xf32>
    %218 = vector.extract_strided_slice %215 {offsets = [0, 256], sizes = [8, 128], strides = [1, 1]} : vector<8x384xf32> to vector<8x128xf32>
    %219 = vector.extract_strided_slice %209 {offsets = [0, 384], sizes = [8, 128], strides = [1, 1]} : vector<8x512xf32> to vector<8x128xf32>
    %220 = math.tanh %219 : vector<8x128xf32>
    %221 = arith.mulf %217, %181 : vector<8x128xf32>
    %222 = arith.mulf %216, %220 : vector<8x128xf32>
    %223 = arith.addf %221, %222 : vector<8x128xf32>
    %224 = math.tanh %223 : vector<8x128xf32>
    %225 = arith.mulf %218, %224 : vector<8x128xf32>
    %226 = arith.truncf %225 : vector<8x128xf32> to vector<8x128xbf16>
    %c0_72 = arith.constant 0 : index
    %c128_73 = arith.constant 128 : index
    %227 = vector.load %arg12[%c0_72, %c128_73] : memref<8x256xbf16, #tpu.memory_space<vmem>>, vector<8x128xbf16>
    tpu.vector_store %arg12[%c0_72, %c128_73], %226 {strides = array<i32>} : memref<8x256xbf16, #tpu.memory_space<vmem>>, vector<8x128xbf16>,
    %228 = vector.extract_strided_slice %206 {offsets = [0, 0], sizes = [8, 384], strides = [1, 1]} : vector<8x512xf32> to vector<8x384xf32>
    %229 = arith.negf %228 : vector<8x384xf32>
    %230 = math.exp %229 : vector<8x384xf32>
    %cst_74 = arith.constant 1.000000e+00 : f32
    %231 = vector.broadcast %cst_74 : f32 to vector<8x384xf32>
    %232 = arith.addf %231, %230 : vector<8x384xf32>
    %233 = arith.divf %231, %232 : vector<8x384xf32>
    %234 = vector.extract_strided_slice %233 {offsets = [0, 0], sizes = [8, 128], strides = [1, 1]} : vector<8x384xf32> to vector<8x128xf32>
    %235 = vector.extract_strided_slice %233 {offsets = [0, 128], sizes = [8, 128], strides = [1, 1]} : vector<8x384xf32> to vector<8x128xf32>
    %236 = vector.extract_strided_slice %233 {offsets = [0, 256], sizes = [8, 128], strides = [1, 1]} : vector<8x384xf32> to vector<8x128xf32>
    %237 = vector.extract_strided_slice %206 {offsets = [0, 384], sizes = [8, 128], strides = [1, 1]} : vector<8x512xf32> to vector<8x128xf32>
    %238 = math.tanh %237 : vector<8x128xf32>
    %239 = arith.mulf %235, %199 : vector<8x128xf32>
    %240 = arith.mulf %234, %238 : vector<8x128xf32>
    %241 = arith.addf %239, %240 : vector<8x128xf32>
    %242 = math.tanh %241 : vector<8x128xf32>
    %243 = arith.mulf %236, %242 : vector<8x128xf32>
    %244 = arith.truncf %243 : vector<8x128xf32> to vector<8x128xbf16>
    %c0_75 = arith.constant 0 : index
    %c0_76 = arith.constant 0 : index
    %245 = vector.load %arg12[%c0_75, %c0_76] : memref<8x256xbf16, #tpu.memory_space<vmem>>, vector<8x128xbf16>
    tpu.vector_store %arg12[%c0_75, %c0_76], %244 {strides = array<i32>} : memref<8x256xbf16, #tpu.memory_space<vmem>>, vector<8x128xbf16>,
    %c48 = arith.constant 48 : index
    %c0_77 = arith.constant 0 : index
    %246 = vector.load %arg11[%c48, %c0_77] : memref<64x512xf32, #tpu.memory_space<vmem>>, vector<8x512xf32>
    %cst_78 = arith.constant dense<0.000000e+00> : vector<8x512xf32>
    %247 = tpu.matmul %244, %8, %cst_78 {dimension_numbers = #tpu.dot_dimension_numbers<[1], [0], [0], [1], [0, 0, 1, 1], [], []>} : vector<8x128xbf16>, vector<128x512xbf16>, vector<8x512xf32> -> vector<8x512xf32>
    %248 = arith.addf %246, %247 : vector<8x512xf32>
    %c0_79 = arith.constant 0 : index
    %c0_80 = arith.constant 0 : index
    %249 = vector.load %arg12[%c0_79, %c0_80] : memref<8x256xbf16, #tpu.memory_space<vmem>>, vector<8x256xbf16>
    %cst_81 = arith.constant dense<0.000000e+00> : vector<8x512xf32>
    %250 = tpu.matmul %249, %9, %cst_81 {dimension_numbers = #tpu.dot_dimension_numbers<[1], [0], [0], [1], [0, 0, 1, 1], [], []>} : vector<8x256xbf16>, vector<256x512xbf16>, vector<8x512xf32> -> vector<8x512xf32>
    %251 = arith.addf %250, %12 : vector<8x512xf32>
    %252 = vector.extract_strided_slice %251 {offsets = [0, 0], sizes = [8, 384], strides = [1, 1]} : vector<8x512xf32> to vector<8x384xf32>
    %253 = arith.negf %252 : vector<8x384xf32>
    %254 = math.exp %253 : vector<8x384xf32>
    %cst_82 = arith.constant 1.000000e+00 : f32
    %255 = vector.broadcast %cst_82 : f32 to vector<8x384xf32>
    %256 = arith.addf %255, %254 : vector<8x384xf32>
    %257 = arith.divf %255, %256 : vector<8x384xf32>
    %258 = vector.extract_strided_slice %257 {offsets = [0, 0], sizes = [8, 128], strides = [1, 1]} : vector<8x384xf32> to vector<8x128xf32>
    %259 = vector.extract_strided_slice %257 {offsets = [0, 128], sizes = [8, 128], strides = [1, 1]} : vector<8x384xf32> to vector<8x128xf32>
    %260 = vector.extract_strided_slice %257 {offsets = [0, 256], sizes = [8, 128], strides = [1, 1]} : vector<8x384xf32> to vector<8x128xf32>
    %261 = vector.extract_strided_slice %251 {offsets = [0, 384], sizes = [8, 128], strides = [1, 1]} : vector<8x512xf32> to vector<8x128xf32>
    %262 = math.tanh %261 : vector<8x128xf32>
    %263 = arith.mulf %259, %223 : vector<8x128xf32>
    %264 = arith.mulf %258, %262 : vector<8x128xf32>
    %265 = arith.addf %263, %264 : vector<8x128xf32>
    %266 = math.tanh %265 : vector<8x128xf32>
    %267 = arith.mulf %260, %266 : vector<8x128xf32>
    %268 = arith.truncf %267 : vector<8x128xf32> to vector<8x128xbf16>
    %c0_83 = arith.constant 0 : index
    %c128_84 = arith.constant 128 : index
    %269 = vector.load %arg12[%c0_83, %c128_84] : memref<8x256xbf16, #tpu.memory_space<vmem>>, vector<8x128xbf16>
    tpu.vector_store %arg12[%c0_83, %c128_84], %268 {strides = array<i32>} : memref<8x256xbf16, #tpu.memory_space<vmem>>, vector<8x128xbf16>,
    %270 = vector.extract_strided_slice %248 {offsets = [0, 0], sizes = [8, 384], strides = [1, 1]} : vector<8x512xf32> to vector<8x384xf32>
    %271 = arith.negf %270 : vector<8x384xf32>
    %272 = math.exp %271 : vector<8x384xf32>
    %cst_85 = arith.constant 1.000000e+00 : f32
    %273 = vector.broadcast %cst_85 : f32 to vector<8x384xf32>
    %274 = arith.addf %273, %272 : vector<8x384xf32>
    %275 = arith.divf %273, %274 : vector<8x384xf32>
    %276 = vector.extract_strided_slice %275 {offsets = [0, 0], sizes = [8, 128], strides = [1, 1]} : vector<8x384xf32> to vector<8x128xf32>
    %277 = vector.extract_strided_slice %275 {offsets = [0, 128], sizes = [8, 128], strides = [1, 1]} : vector<8x384xf32> to vector<8x128xf32>
    %278 = vector.extract_strided_slice %275 {offsets = [0, 256], sizes = [8, 128], strides = [1, 1]} : vector<8x384xf32> to vector<8x128xf32>
    %279 = vector.extract_strided_slice %248 {offsets = [0, 384], sizes = [8, 128], strides = [1, 1]} : vector<8x512xf32> to vector<8x128xf32>
    %280 = math.tanh %279 : vector<8x128xf32>
    %281 = arith.mulf %277, %241 : vector<8x128xf32>
    %282 = arith.mulf %276, %280 : vector<8x128xf32>
    %283 = arith.addf %281, %282 : vector<8x128xf32>
    %284 = math.tanh %283 : vector<8x128xf32>
    %285 = arith.mulf %278, %284 : vector<8x128xf32>
    %286 = arith.truncf %285 : vector<8x128xf32> to vector<8x128xbf16>
    %c0_86 = arith.constant 0 : index
    %c0_87 = arith.constant 0 : index
    %287 = vector.load %arg12[%c0_86, %c0_87] : memref<8x256xbf16, #tpu.memory_space<vmem>>, vector<8x128xbf16>
    tpu.vector_store %arg12[%c0_86, %c0_87], %286 {strides = array<i32>} : memref<8x256xbf16, #tpu.memory_space<vmem>>, vector<8x128xbf16>,
    %c56 = arith.constant 56 : index
    %c0_88 = arith.constant 0 : index
    %288 = vector.load %arg11[%c56, %c0_88] : memref<64x512xf32, #tpu.memory_space<vmem>>, vector<8x512xf32>
    %cst_89 = arith.constant dense<0.000000e+00> : vector<8x512xf32>
    %289 = tpu.matmul %286, %8, %cst_89 {dimension_numbers = #tpu.dot_dimension_numbers<[1], [0], [0], [1], [0, 0, 1, 1], [], []>} : vector<8x128xbf16>, vector<128x512xbf16>, vector<8x512xf32> -> vector<8x512xf32>
    %290 = arith.addf %288, %289 : vector<8x512xf32>
    %c0_90 = arith.constant 0 : index
    %c0_91 = arith.constant 0 : index
    %291 = vector.load %arg12[%c0_90, %c0_91] : memref<8x256xbf16, #tpu.memory_space<vmem>>, vector<8x256xbf16>
    %cst_92 = arith.constant dense<0.000000e+00> : vector<8x512xf32>
    %292 = tpu.matmul %291, %9, %cst_92 {dimension_numbers = #tpu.dot_dimension_numbers<[1], [0], [0], [1], [0, 0, 1, 1], [], []>} : vector<8x256xbf16>, vector<256x512xbf16>, vector<8x512xf32> -> vector<8x512xf32>
    %293 = arith.addf %292, %12 : vector<8x512xf32>
    %294 = vector.extract_strided_slice %293 {offsets = [0, 0], sizes = [8, 384], strides = [1, 1]} : vector<8x512xf32> to vector<8x384xf32>
    %295 = arith.negf %294 : vector<8x384xf32>
    %296 = math.exp %295 : vector<8x384xf32>
    %cst_93 = arith.constant 1.000000e+00 : f32
    %297 = vector.broadcast %cst_93 : f32 to vector<8x384xf32>
    %298 = arith.addf %297, %296 : vector<8x384xf32>
    %299 = arith.divf %297, %298 : vector<8x384xf32>
    %300 = vector.extract_strided_slice %299 {offsets = [0, 0], sizes = [8, 128], strides = [1, 1]} : vector<8x384xf32> to vector<8x128xf32>
    %301 = vector.extract_strided_slice %299 {offsets = [0, 128], sizes = [8, 128], strides = [1, 1]} : vector<8x384xf32> to vector<8x128xf32>
    %302 = vector.extract_strided_slice %299 {offsets = [0, 256], sizes = [8, 128], strides = [1, 1]} : vector<8x384xf32> to vector<8x128xf32>
    %303 = vector.extract_strided_slice %293 {offsets = [0, 384], sizes = [8, 128], strides = [1, 1]} : vector<8x512xf32> to vector<8x128xf32>
    %304 = math.tanh %303 : vector<8x128xf32>
    %305 = arith.mulf %301, %265 : vector<8x128xf32>
    %306 = arith.mulf %300, %304 : vector<8x128xf32>
    %307 = arith.addf %305, %306 : vector<8x128xf32>
    %308 = math.tanh %307 : vector<8x128xf32>
    %309 = arith.mulf %302, %308 : vector<8x128xf32>
    %310 = arith.truncf %309 : vector<8x128xf32> to vector<8x128xbf16>
    %c0_94 = arith.constant 0 : index
    %c128_95 = arith.constant 128 : index
    %311 = vector.load %arg12[%c0_94, %c128_95] : memref<8x256xbf16, #tpu.memory_space<vmem>>, vector<8x128xbf16>
    tpu.vector_store %arg12[%c0_94, %c128_95], %310 {strides = array<i32>} : memref<8x256xbf16, #tpu.memory_space<vmem>>, vector<8x128xbf16>,
    %312 = vector.extract_strided_slice %290 {offsets = [0, 0], sizes = [8, 384], strides = [1, 1]} : vector<8x512xf32> to vector<8x384xf32>
    %313 = arith.negf %312 : vector<8x384xf32>
    %314 = math.exp %313 : vector<8x384xf32>
    %cst_96 = arith.constant 1.000000e+00 : f32
    %315 = vector.broadcast %cst_96 : f32 to vector<8x384xf32>
    %316 = arith.addf %315, %314 : vector<8x384xf32>
    %317 = arith.divf %315, %316 : vector<8x384xf32>
    %318 = vector.extract_strided_slice %317 {offsets = [0, 0], sizes = [8, 128], strides = [1, 1]} : vector<8x384xf32> to vector<8x128xf32>
    %319 = vector.extract_strided_slice %317 {offsets = [0, 128], sizes = [8, 128], strides = [1, 1]} : vector<8x384xf32> to vector<8x128xf32>
    %320 = vector.extract_strided_slice %317 {offsets = [0, 256], sizes = [8, 128], strides = [1, 1]} : vector<8x384xf32> to vector<8x128xf32>
    %321 = vector.extract_strided_slice %290 {offsets = [0, 384], sizes = [8, 128], strides = [1, 1]} : vector<8x512xf32> to vector<8x128xf32>
    %322 = math.tanh %321 : vector<8x128xf32>
    %323 = arith.mulf %319, %283 : vector<8x128xf32>
    %324 = arith.mulf %318, %322 : vector<8x128xf32>
    %325 = arith.addf %323, %324 : vector<8x128xf32>
    %326 = math.tanh %325 : vector<8x128xf32>
    %327 = arith.mulf %320, %326 : vector<8x128xf32>
    %328 = arith.truncf %327 : vector<8x128xf32> to vector<8x128xbf16>
    %c0_97 = arith.constant 0 : index
    %c0_98 = arith.constant 0 : index
    %329 = vector.load %arg12[%c0_97, %c0_98] : memref<8x256xbf16, #tpu.memory_space<vmem>>, vector<8x128xbf16>
    tpu.vector_store %arg12[%c0_97, %c0_98], %328 {strides = array<i32>} : memref<8x256xbf16, #tpu.memory_space<vmem>>, vector<8x128xbf16>,
    %c0_99 = arith.constant 0 : index
    %c0_100 = arith.constant 0 : index
    %330 = vector.load %arg12[%c0_99, %c0_100] : memref<8x256xbf16, #tpu.memory_space<vmem>>, vector<8x256xbf16>
    %cst_101 = arith.constant dense<0.000000e+00> : vector<8x512xf32>
    %331 = tpu.matmul %330, %9, %cst_101 {dimension_numbers = #tpu.dot_dimension_numbers<[1], [0], [0], [1], [0, 0, 1, 1], [], []>} : vector<8x256xbf16>, vector<256x512xbf16>, vector<8x512xf32> -> vector<8x512xf32>
    %332 = arith.addf %331, %12 : vector<8x512xf32>
    %333 = vector.extract_strided_slice %332 {offsets = [0, 0], sizes = [8, 384], strides = [1, 1]} : vector<8x512xf32> to vector<8x384xf32>
    %334 = arith.negf %333 : vector<8x384xf32>
    %335 = math.exp %334 : vector<8x384xf32>
    %cst_102 = arith.constant 1.000000e+00 : f32
    %336 = vector.broadcast %cst_102 : f32 to vector<8x384xf32>
    %337 = arith.addf %336, %335 : vector<8x384xf32>
    %338 = arith.divf %336, %337 : vector<8x384xf32>
    %339 = vector.extract_strided_slice %338 {offsets = [0, 0], sizes = [8, 128], strides = [1, 1]} : vector<8x384xf32> to vector<8x128xf32>
    %340 = vector.extract_strided_slice %338 {offsets = [0, 128], sizes = [8, 128], strides = [1, 1]} : vector<8x384xf32> to vector<8x128xf32>
    %341 = vector.extract_strided_slice %338 {offsets = [0, 256], sizes = [8, 128], strides = [1, 1]} : vector<8x384xf32> to vector<8x128xf32>
    %342 = vector.extract_strided_slice %332 {offsets = [0, 384], sizes = [8, 128], strides = [1, 1]} : vector<8x512xf32> to vector<8x128xf32>
    %343 = math.tanh %342 : vector<8x128xf32>
    %344 = arith.mulf %340, %307 : vector<8x128xf32>
    %345 = arith.mulf %339, %343 : vector<8x128xf32>
    %346 = arith.addf %344, %345 : vector<8x128xf32>
    %347 = math.tanh %346 : vector<8x128xf32>
    %348 = arith.mulf %341, %347 : vector<8x128xf32>
    %c0_103 = arith.constant 0 : index
    %c0_104 = arith.constant 0 : index
    %349 = vector.load %arg6[%c0_103, %c0_104] : memref<128x16xf32, #tpu.memory_space<vmem>>, vector<128x16xf32>
    %cst_105 = arith.constant dense<0.000000e+00> : vector<8x16xf32>
    %350 = tpu.matmul %348, %349, %cst_105 {dimension_numbers = #tpu.dot_dimension_numbers<[1], [0], [0], [1], [0, 0, 1, 1], [], []>} : vector<8x128xf32>, vector<128x16xf32>, vector<8x16xf32> -> vector<8x16xf32>
    %c0_106 = arith.constant 0 : index
    %c0_107 = arith.constant 0 : index
    %351 = vector.load %arg7[%c0_106, %c0_107] : memref<1x16xf32, #tpu.memory_space<vmem>>, vector<1x16xf32>
    %352 = vector.broadcast %351 : vector<1x16xf32> to vector<8x16xf32>
    %353 = arith.addf %350, %352 : vector<8x16xf32>
    %cst_108 = arith.constant 0.000000e+00 : f32
    %354 = vector.broadcast %cst_108 : f32 to vector<8x16xf32>
    %355 = arith.cmpf oge, %353, %354 : vector<8x16xf32>
    %cst_109 = arith.constant 0.00999999977 : f32
    %356 = vector.broadcast %cst_109 : f32 to vector<8x16xf32>
    %357 = arith.mulf %356, %353 : vector<8x16xf32>
    %358 = arith.select %355, %353, %357 : vector<8x16xi1>, vector<8x16xf32>
    %c0_110 = arith.constant 0 : index
    %c0_111 = arith.constant 0 : index
    %359 = vector.load %arg8[%c0_110, %c0_111] : memref<16x128xf32, #tpu.memory_space<vmem>>, vector<16x128xf32>
    %cst_112 = arith.constant dense<0.000000e+00> : vector<8x128xf32>
    %360 = tpu.matmul %358, %359, %cst_112 {dimension_numbers = #tpu.dot_dimension_numbers<[1], [0], [0], [1], [0, 0, 1, 1], [], []>} : vector<8x16xf32>, vector<16x128xf32>, vector<8x128xf32> -> vector<8x128xf32>
    %c0_113 = arith.constant 0 : index
    %c0_114 = arith.constant 0 : index
    %361 = vector.load %arg9[%c0_113, %c0_114] : memref<1x128xf32, #tpu.memory_space<vmem>>, vector<1x128xf32>
    %362 = vector.broadcast %361 : vector<1x128xf32> to vector<8x128xf32>
    %363 = arith.addf %360, %362 : vector<8x128xf32>
    %c0_115 = arith.constant 0 : index
    %c0_116 = arith.constant 0 : index
    %364 = vector.load %arg10[%c0_115, %c0_116] : memref<8x128xf32, #tpu.memory_space<vmem>>, vector<8x128xf32>
    tpu.vector_store %arg10[%c0_115, %c0_116], %363 {strides = array<i32>} : memref<8x128xf32, #tpu.memory_space<vmem>>, vector<8x128xf32>,
    return
  }
}

</mosaic_0001>

<llo_original>
// kernel: lstm_cat_forward.1
$region0: #{lstm_cat_forward.1}
  #allocation0 [shape = 'u32[]', space=smem, size = 0x4, offset = 0x4, fixed_abs, tag = 'smem constant byte address 0x4 - core index']
  #allocation1 [shape = 'u32[144,128]{1,0:T(1,128)}', space=vmem, size = 0x12000, scoped, tag = 'internal scratch']
  #allocation2 [shape = 'f32[64,512]{1,0:T(8,128)}', space=vmem, size = 0x20000, scoped, tag = 'scratch operand']
  #allocation3 [shape = 'bf16[8,256]{1,0:T(8,128)(2,1)}', space=vmem, size = 0x1000, scoped, tag = 'scratch operand']
  %s0 = inlined_call_operand.vmem [shape: f32[64,32], index: 0, kind: input, shape index: {}]
  %s1 = inlined_call_operand.hbm [shape: bf16[32,512], index: 1, kind: input, shape index: {}]
  %s2 = inlined_call_operand.vmem [shape: bf16[128,512], index: 2, kind: input, shape index: {}]
  %s3 = inlined_call_operand.hbm [shape: f32[1,512], index: 3, kind: input, shape index: {}]
  %s4 = inlined_call_operand.hbm [shape: bf16[256,512], index: 4, kind: input, shape index: {}]
  %s5 = inlined_call_operand.hbm [shape: f32[1,512], index: 5, kind: input, shape index: {}]
  %s6 = inlined_call_operand.vmem [shape: f32[128,16], index: 6, kind: input, shape index: {}]
  %s7 = inlined_call_operand.vmem [shape: f32[1,16], index: 7, kind: input, shape index: {}]
  %s8 = inlined_call_operand.vmem [shape: f32[16,128], index: 8, kind: input, shape index: {}]
  %s9 = inlined_call_operand.vmem [shape: f32[1,128], index: 9, kind: input, shape index: {}]
  %s10 = inlined_call_operand.vmem [shape: f32[8,128], index: 10, kind: output, shape index: {}]
  %s11 = sld [smem:[#allocation0]]
  $region66: #{lstm_cat_forward.1} parent=0
    _
  %s13 = ssub.s32 1, %s11
  %s14 = scalar_select 0, %s13, %s11
  $region1: #{lstm_cat_forward.1} parent=0
    #allocation4 [shape = 'u8[32768]{0}', space=vmem, size = 0x8000, scoped, tag = 'input window, operand 1, single buffered']
    #allocation5 [shape = 's32[1]{0}', space=sflag, size = 0x4, scoped, tag = 'scoped memory for lstm_cat_forward.1']
    #allocation6 [shape = 'u8[2048]{0}', space=vmem, size = 0x800, scoped, tag = 'input window, operand 3, single buffered']
    #allocation7 [shape = 's32[1]{0}', space=sflag, size = 0x4, scoped, tag = 'scoped memory for lstm_cat_forward.1']
    #allocation8 [shape = 'u8[262144]{0}', space=vmem, size = 0x40000, scoped, tag = 'input window, operand 4, single buffered']
    #allocation9 [shape = 'u8[2048]{0}', space=vmem, size = 0x800, scoped, tag = 'input window, operand 5, single buffered']
    #allocation10 [shape = 's32[1]{0}', space=sflag, size = 0x4, scoped, tag = 'scoped memory for lstm_cat_forward.1']
    %15 = vsyncpa [#allocation5], 0
    %16 = vsyncpa [#allocation7], 0
    %17 = vsyncpa [#allocation10], 0
    // Predicated region
    $region2: #{lstm_cat_forward.1} parent=1 // pred_check
      _
    $region3: #{lstm_cat_forward.1} parent=1 // pred_check_branch
      %19 = sbr.rel (0) target = $region5
    $region4: #{lstm_cat_forward.1} parent=1 // pred_region
      _
    $region5: #{lstm_cat_forward.1} parent=1 // pred_fallthru
      _
    // Predicated region
    $region6: #{lstm_cat_forward.1} parent=1 // pred_check
      _
    $region7: #{lstm_cat_forward.1} parent=1 // pred_check_branch
      %21 = sbr.rel (0) target = $region9
    $region8: #{lstm_cat_forward.1} parent=1 // pred_region
      %s23 = ssub.s32 1024, 1024
      %24 = vsyncadd [#allocation5], %s23
      %s25 = sshll.u32 [#allocation4], 4
      %s26 = int_to_ptr.vmem [resolvable:$true] %s25
      %31 = dma.hbm_to_vmem [thread:$0]  %s1, 1024, %s26, [#allocation5], 256, 256, 16
    $region9: #{lstm_cat_forward.1} parent=1 // pred_fallthru
      _
    // Predicated region
    $region10: #{lstm_cat_forward.1} parent=1 // pred_check
      _
    $region11: #{lstm_cat_forward.1} parent=1 // pred_check_branch
      %33 = sbr.rel (0) target = $region13
    $region12: #{lstm_cat_forward.1} parent=1 // pred_region
      _
    $region13: #{lstm_cat_forward.1} parent=1 // pred_fallthru
      _
    // Predicated region
    $region14: #{lstm_cat_forward.1} parent=1 // pred_check
      _
    $region15: #{lstm_cat_forward.1} parent=1 // pred_check_branch
      %35 = sbr.rel (0) target = $region17
    $region16: #{lstm_cat_forward.1} parent=1 // pred_region
      %s37 = ssub.s32 64, 64
      %38 = vsyncadd [#allocation7], %s37
      %s40 = sshll.u32 [#allocation6], 4
      %s41 = int_to_ptr.vmem [resolvable:$true] %s40
      %43 = dma.hbm_to_vmem [thread:$0]  %s3, 64, %s41, [#allocation7]
    $region17: #{lstm_cat_forward.1} parent=1 // pred_fallthru
      _
    // Predicated region
    $region18: #{lstm_cat_forward.1} parent=1 // pred_check
      _
    $region19: #{lstm_cat_forward.1} parent=1 // pred_check_branch
      %45 = sbr.rel (0) target = $region21
    $region20: #{lstm_cat_forward.1} parent=1 // pred_region
      %s47 = ssub.s32 8192, 8192
      %48 = vsyncadd [#allocation7], %s47
      %s49 = sshll.u32 [#allocation8], 4
      %s50 = int_to_ptr.vmem [resolvable:$true] %s49
      %55 = dma.hbm_to_vmem [thread:$0]  %s4, 8192, %s50, [#allocation7], 256, 256, 16
    $region21: #{lstm_cat_forward.1} parent=1 // pred_fallthru
      _
    // Predicated region
    $region22: #{lstm_cat_forward.1} parent=1 // pred_check
      _
    $region23: #{lstm_cat_forward.1} parent=1 // pred_check_branch
      %57 = sbr.rel (0) target = $region25
    $region24: #{lstm_cat_forward.1} parent=1 // pred_region
      %s59 = ssub.s32 64, 64
      %60 = vsyncadd [#allocation10], %s59
      %s62 = sshll.u32 [#allocation9], 4
      %s63 = int_to_ptr.vmem [resolvable:$true] %s62
      %65 = dma.hbm_to_vmem [thread:$0]  %s5, 64, %s63, [#allocation10]
    $region25: #{lstm_cat_forward.1} parent=1 // pred_fallthru
      _
    // Predicated region
    $region26: #{lstm_cat_forward.1} parent=1 // pred_check
      _
    $region27: #{lstm_cat_forward.1} parent=1 // pred_check_branch
      %67 = sbr.rel (0) target = $region29
    $region28: #{lstm_cat_forward.1} parent=1 // pred_region
      _
    $region29: #{lstm_cat_forward.1} parent=1 // pred_fallthru
      _
    // Predicated region
    $region30: #{lstm_cat_forward.1} parent=1 // pred_check
      _
    $region31: #{lstm_cat_forward.1} parent=1 // pred_check_branch
      %69 = sbr.rel (0) target = $region33
    $region32: #{lstm_cat_forward.1} parent=1 // pred_region
      _
    $region33: #{lstm_cat_forward.1} parent=1 // pred_fallthru
      _
    // Predicated region
    $region34: #{lstm_cat_forward.1} parent=1 // pred_check
      _
    $region35: #{lstm_cat_forward.1} parent=1 // pred_check_branch
      %71 = sbr.rel (0) target = $region37
    $region36: #{lstm_cat_forward.1} parent=1 // pred_region
      _
    $region37: #{lstm_cat_forward.1} parent=1 // pred_fallthru
      _
    // Predicated region
    $region38: #{lstm_cat_forward.1} parent=1 // pred_check
      _
    $region39: #{lstm_cat_forward.1} parent=1 // pred_check_branch
      %73 = sbr.rel (0) target = $region41
    $region40: #{lstm_cat_forward.1} parent=1 // pred_region
      _
    $region41: #{lstm_cat_forward.1} parent=1 // pred_fallthru
      _
    // Predicated region
    $region42: #{lstm_cat_forward.1} parent=1 // pred_check
      _
    $region43: #{lstm_cat_forward.1} parent=1 // pred_check_branch
      %75 = sbr.rel (0) target = $region45
    $region44: #{lstm_cat_forward.1} parent=1 // pred_region
      %76 = dma.done [#allocation5], 1024
    $region45: #{lstm_cat_forward.1} parent=1 // pred_fallthru
      _
    // Predicated region
    $region46: #{lstm_cat_forward.1} parent=1 // pred_check
      _
    $region47: #{lstm_cat_forward.1} parent=1 // pred_check_branch
      %78 = sbr.rel (0) target = $region49
    $region48: #{lstm_cat_forward.1} parent=1 // pred_region
      %79 = dma.done [#allocation7], 64
    $region49: #{lstm_cat_forward.1} parent=1 // pred_fallthru
      _
    // Predicated region
    $region50: #{lstm_cat_forward.1} parent=1 // pred_check
      _
    $region51: #{lstm_cat_forward.1} parent=1 // pred_check_branch
      %81 = sbr.rel (0) target = $region53
    $region52: #{lstm_cat_forward.1} parent=1 // pred_region
      %82 = dma.done [#allocation7], 8192
    $region53: #{lstm_cat_forward.1} parent=1 // pred_fallthru
      _
    // Predicated region
    $region54: #{lstm_cat_forward.1} parent=1 // pred_check
      _
    $region55: #{lstm_cat_forward.1} parent=1 // pred_check_branch
      %84 = sbr.rel (0) target = $region57
    $region56: #{lstm_cat_forward.1} parent=1 // pred_region
      %85 = dma.done [#allocation10], 64
    $region57: #{lstm_cat_forward.1} parent=1 // pred_fallthru
      _
    %v87 = vld [vmem:[%s0] sm:$0xff]
    %v88 = vld [vmem:[%s0 + $0x8] sm:$0xff]
    %v89 = vld [vmem:[%s0 + $0x10] sm:$0xff]
    %v90 = vld [vmem:[%s0 + $0x18] sm:$0xff]
    %v91 = vld [vmem:[%s0 + $0x20] sm:$0xff]
    %v92 = vld [vmem:[%s0 + $0x28] sm:$0xff]
    %v93 = vld [vmem:[%s0 + $0x30] sm:$0xff]
    %v94 = vld [vmem:[%s0 + $0x38] sm:$0xff]
    %v95 = vpack.c.bf16 %v88, %v87
    %v96 = vpack.c.bf16 %v90, %v89
    %v97 = vpack.c.bf16 %v92, %v91
    %v98 = vpack.c.bf16 %v94, %v93
    %v99 = vld [vmem:[#allocation4] sm:$0xff]
    %v100 = vld [vmem:[#allocation4 + $0x8] sm:$0xff]
    %v101 = vld [vmem:[#allocation4 + $0x10] sm:$0xff]
    %v102 = vld [vmem:[#allocation4 + $0x18] sm:$0xff]
    %v103 = vld [vmem:[#allocation4 + $0x20] sm:$0xff]
    %v104 = vld [vmem:[#allocation4 + $0x28] sm:$0xff]
    %v105 = vld [vmem:[#allocation4 + $0x30] sm:$0xff]
    %v106 = vld [vmem:[#allocation4 + $0x38] sm:$0xff]
    %v107 = vld [vmem:[#allocation6] sm:$0xf]
    %v109 = vlaneseq
    %v110 = vshrl.u32 %v109, 7
    %v111 = vsub.s32 0, %v110
    %v112 = vrot.slane %v107, %v111
    %v113 = vlaneseq
    %v114 = vshrl.u32 %v113, 7
    %v115 = vsub.s32 1, %v114
    %v116 = vrot.slane %v107, %v115
    %v117 = vlaneseq
    %v118 = vshrl.u32 %v117, 7
    %v119 = vsub.s32 2, %v118
    %v120 = vrot.slane %v107, %v119
    %v121 = vlaneseq
    %v122 = vshrl.u32 %v121, 7
    %v123 = vsub.s32 3, %v122
    %v124 = vrot.slane %v107, %v123
    %v137 = vunpack.c.l.b16 %v99
    %v138 = vunpack.c.h.b16 %v99
    %v139 = vunpack.c.l.b16 %v100
    %v140 = vunpack.c.h.b16 %v100
    %v141 = vunpack.c.l.b16 %v101
    %v142 = vunpack.c.h.b16 %v101
    %v143 = vunpack.c.l.b16 %v102
    %v144 = vunpack.c.h.b16 %v102
    %v145 = vunpack.c.l.b16 %v103
    %v146 = vunpack.c.h.b16 %v103
    %v147 = vunpack.c.l.b16 %v104
    %v148 = vunpack.c.h.b16 %v104
    %v149 = vunpack.c.l.b16 %v105
    %v150 = vunpack.c.h.b16 %v105
    %v151 = vunpack.c.l.b16 %v106
    %v152 = vunpack.c.h.b16 %v106
    %v153 = vpack.c.b16 %v141, %v137
    %v154 = vpack.c.b16 %v142, %v138
    %v155 = vpack.c.b16 %v143, %v139
    %v156 = vpack.c.b16 %v144, %v140
    %v157 = vpack.c.b16 %v149, %v145
    %v158 = vpack.c.b16 %v150, %v146
    %v159 = vpack.c.b16 %v151, %v147
    %v160 = vpack.c.b16 %v152, %v148
    %vm169 = vcmask 261120
    %v171 = vsel %vm169, %v95, 0
    %v174 = vsel %vm169, %v96, 0
    %v177 = vsel %vm169, %v97, 0
    %v180 = vsel %vm169, %v98, 0
    %182 = vmatprep.subr.bf16.mxu0 %v154
    %183 = vmatpush1.bf16.msra.mxu0 %v153
    %184 = vmatprep.subr.bf16.mxu0 %v158
    %185 = vmatpush1.bf16.msra.mxu0 %v157
    %186 = vmatprep.subr.bf16.mxu0 0
    %187 = vmatpush1.bf16.msra.mxu0 0
    %188 = vmatprep.subr.bf16.mxu0 0
    %189 = vmatpush1.bf16.msra.mxu0 0
    %190 = vmatprep.subr.bf16.mxu0 0
    %191 = vmatpush1.bf16.msra.mxu0 0
    %192 = vmatprep.subr.bf16.mxu0 0
    %193 = vmatpush1.bf16.msra.mxu0 0
    %194 = vmatprep.subr.bf16.mxu0 0
    %195 = vmatpush1.bf16.msra.mxu0 0
    %196 = vmatprep.subr.bf16.mxu0 0
    %197 = vmatpush1.bf16.msra.mxu0 0
    %198 = vmatprep.subr.bf16.mxu0 0
    %199 = vmatpush1.bf16.msra.mxu0 0
    %200 = vmatprep.subr.bf16.mxu0 0
    %201 = vmatpush1.bf16.msra.mxu0 0
    %202 = vmatprep.subr.bf16.mxu0 0
    %203 = vmatpush1.bf16.msra.mxu0 0
    %204 = vmatprep.subr.bf16.mxu0 0
    %205 = vmatpush1.bf16.msra.mxu0 0
    %206 = vmatprep.subr.bf16.mxu0 0
    %207 = vmatpush1.bf16.msra.mxu0 0
    %208 = vmatprep.subr.bf16.mxu0 0
    %209 = vmatpush1.bf16.msra.mxu0 0
    %210 = vmatprep.subr.bf16.mxu0 0
    %211 = vmatpush1.bf16.msra.mxu0 0
    %212 = vmatprep.subr.bf16.mxu0 0
    %213 = vmatpush1.bf16.msra.mxu0 0
    %214 = vmatprep.mubr.bf16.mxu0 0
    %215 = vmatmul.mubr.bf16.gmra.mrb[0].mxu0 %v171
    %v216 = vpop.f32.mrb[0].mxu0
    %v217 = vadd.f32 %v112, %v216
    %v218 = vpop.f32.mrb[0].mxu0
    %v219 = vadd.f32 %v116, %v218
    %v220 = vpop.f32.mrb[0].mxu0
    %v221 = vadd.f32 %v112, %v220
    %v222 = vpop.f32.mrb[0].mxu0
    %v223 = vadd.f32 %v116, %v222
    %224 = vmatprep.mubr.bf16.mxu0 0
    %225 = vmatmul.mubr.bf16.gmra.mrb[0].mxu0 %v174
    %v226 = vpop.f32.mrb[0].mxu0
    %v227 = vadd.f32 %v112, %v226
    %v228 = vpop.f32.mrb[0].mxu0
    %v229 = vadd.f32 %v116, %v228
    %v230 = vpop.f32.mrb[0].mxu0
    %v231 = vadd.f32 %v112, %v230
    %v232 = vpop.f32.mrb[0].mxu0
    %v233 = vadd.f32 %v116, %v232
    %234 = vmatprep.mubr.bf16.mxu0 0
    %235 = vmatmul.mubr.bf16.gmra.mrb[0].mxu0 %v177
    %v236 = vpop.f32.mrb[0].mxu0
    %v237 = vadd.f32 %v112, %v236
    %v238 = vpop.f32.mrb[0].mxu0
    %v239 = vadd.f32 %v116, %v238
    %v240 = vpop.f32.mrb[0].mxu0
    %v241 = vadd.f32 %v112, %v240
    %v242 = vpop.f32.mrb[0].mxu0
    %v243 = vadd.f32 %v116, %v242
    %244 = vmatprep.mubr.bf16.mxu0 0
    %245 = vmatmul.mubr.bf16.gmra.mrb[0].mxu0 %v180
    %v246 = vpop.f32.mrb[0].mxu0
    %v247 = vadd.f32 %v112, %v246
    %v248 = vpop.f32.mrb[0].mxu0
    %v249 = vadd.f32 %v116, %v248
    %v250 = vpop.f32.mrb[0].mxu0
    %v251 = vadd.f32 %v112, %v250
    %v252 = vpop.f32.mrb[0].mxu0
    %v253 = vadd.f32 %v116, %v252
    %254 = vdwg.mxu0
    %255 = vmatprep.subr.bf16.mxu0 %v156
    %256 = vmatpush1.bf16.msra.mxu0 %v155
    %257 = vmatprep.subr.bf16.mxu0 %v160
    %258 = vmatpush1.bf16.msra.mxu0 %v159
    %259 = vmatprep.subr.bf16.mxu0 0
    %260 = vmatpush1.bf16.msra.mxu0 0
    %261 = vmatprep.subr.bf16.mxu0 0
    %262 = vmatpush1.bf16.msra.mxu0 0
    %263 = vmatprep.subr.bf16.mxu0 0
    %264 = vmatpush1.bf16.msra.mxu0 0
    %265 = vmatprep.subr.bf16.mxu0 0
    %266 = vmatpush1.bf16.msra.mxu0 0
    %267 = vmatprep.subr.bf16.mxu0 0
    %268 = vmatpush1.bf16.msra.mxu0 0
    %269 = vmatprep.subr.bf16.mxu0 0
    %270 = vmatpush1.bf16.msra.mxu0 0
    %271 = vmatprep.subr.bf16.mxu0 0
    %272 = vmatpush1.bf16.msra.mxu0 0
    %273 = vmatprep.subr.bf16.mxu0 0
    %274 = vmatpush1.bf16.msra.mxu0 0
    %275 = vmatprep.subr.bf16.mxu0 0
    %276 = vmatpush1.bf16.msra.mxu0 0
    %277 = vmatprep.subr.bf16.mxu0 0
    %278 = vmatpush1.bf16.msra.mxu0 0
    %279 = vmatprep.subr.bf16.mxu0 0
    %280 = vmatpush1.bf16.msra.mxu0 0
    %281 = vmatprep.subr.bf16.mxu0 0
    %282 = vmatpush1.bf16.msra.mxu0 0
    %283 = vmatprep.subr.bf16.mxu0 0
    %284 = vmatpush1.bf16.msra.mxu0 0
    %285 = vmatprep.subr.bf16.mxu0 0
    %286 = vmatpush1.bf16.msra.mxu0 0
    %287 = vmatprep.mubr.bf16.mxu0 0
    %288 = vmatmul.mubr.bf16.gmra.mrb[0].mxu0 %v171
    %v289 = vpop.f32.mrb[0].mxu0
    %v290 = vadd.f32 %v120, %v289
    %v291 = vpop.f32.mrb[0].mxu0
    %v292 = vadd.f32 %v124, %v291
    %v293 = vpop.f32.mrb[0].mxu0
    %v294 = vadd.f32 %v120, %v293
    %v295 = vpop.f32.mrb[0].mxu0
    %v296 = vadd.f32 %v124, %v295
    %297 = vmatprep.mubr.bf16.mxu0 0
    %298 = vmatmul.mubr.bf16.gmra.mrb[0].mxu0 %v174
    %v299 = vpop.f32.mrb[0].mxu0
    %v300 = vadd.f32 %v120, %v299
    %v301 = vpop.f32.mrb[0].mxu0
    %v302 = vadd.f32 %v124, %v301
    %v303 = vpop.f32.mrb[0].mxu0
    %v304 = vadd.f32 %v120, %v303
    %v305 = vpop.f32.mrb[0].mxu0
    %v306 = vadd.f32 %v124, %v305
    %307 = vmatprep.mubr.bf16.mxu0 0
    %308 = vmatmul.mubr.bf16.gmra.mrb[0].mxu0 %v177
    %v309 = vpop.f32.mrb[0].mxu0
    %v310 = vadd.f32 %v120, %v309
    %v311 = vpop.f32.mrb[0].mxu0
    %v312 = vadd.f32 %v124, %v311
    %v313 = vpop.f32.mrb[0].mxu0
    %v314 = vadd.f32 %v120, %v313
    %v315 = vpop.f32.mrb[0].mxu0
    %v316 = vadd.f32 %v124, %v315
    %317 = vmatprep.mubr.bf16.mxu0 0
    %318 = vmatmul.mubr.bf16.gmra.mrb[0].mxu0 %v180
    %v319 = vpop.f32.mrb[0].mxu0
    %v320 = vadd.f32 %v120, %v319
    %v321 = vpop.f32.mrb[0].mxu0
    %v322 = vadd.f32 %v124, %v321
    %v323 = vpop.f32.mrb[0].mxu0
    %v324 = vadd.f32 %v120, %v323
    %v325 = vpop.f32.mrb[0].mxu0
    %v326 = vadd.f32 %v124, %v325
    %327 = vdwg.mxu0
    %328 = vst [vmem:[#allocation2] sm:$0xff] %v217
    %329 = vst [vmem:[#allocation2 + $0x8] sm:$0xff] %v219
    %330 = vst [vmem:[#allocation2 + $0x10] sm:$0xff] %v290
    %331 = vst [vmem:[#allocation2 + $0x18] sm:$0xff] %v292
    %332 = vst [vmem:[#allocation2 + $0x20] sm:$0xff] %v221
    %333 = vst [vmem:[#allocation2 + $0x28] sm:$0xff] %v223
    %334 = vst [vmem:[#allocation2 + $0x30] sm:$0xff] %v294
    %335 = vst [vmem:[#allocation2 + $0x38] sm:$0xff] %v296
    %336 = vst [vmem:[#allocation2 + $0x40] sm:$0xff] %v227
    %337 = vst [vmem:[#allocation2 + $0x48] sm:$0xff] %v229
    %338 = vst [vmem:[#allocation2 + $0x50] sm:$0xff] %v300
    %339 = vst [vmem:[#allocation2 + $0x58] sm:$0xff] %v302
    %340 = vst [vmem:[#allocation2 + $0x60] sm:$0xff] %v231
    %341 = vst [vmem:[#allocation2 + $0x68] sm:$0xff] %v233
    %342 = vst [vmem:[#allocation2 + $0x70] sm:$0xff] %v304
    %343 = vst [vmem:[#allocation2 + $0x78] sm:$0xff] %v306
    %344 = vst [vmem:[#allocation2 + $0x80] sm:$0xff] %v237
    %345 = vst [vmem:[#allocation2 + $0x88] sm:$0xff] %v239
    %346 = vst [vmem:[#allocation2 + $0x90] sm:$0xff] %v310
    %347 = vst [vmem:[#allocation2 + $0x98] sm:$0xff] %v312
    %348 = vst [vmem:[#allocation2 + $0xa0] sm:$0xff] %v241
    %349 = vst [vmem:[#allocation2 + $0xa8] sm:$0xff] %v243
    %350 = vst [vmem:[#allocation2 + $0xb0] sm:$0xff] %v314
    %351 = vst [vmem:[#allocation2 + $0xb8] sm:$0xff] %v316
    %352 = vst [vmem:[#allocation2 + $0xc0] sm:$0xff] %v247
    %353 = vst [vmem:[#allocation2 + $0xc8] sm:$0xff] %v249
    %354 = vst [vmem:[#allocation2 + $0xd0] sm:$0xff] %v320
    %355 = vst [vmem:[#allocation2 + $0xd8] sm:$0xff] %v322
    %356 = vst [vmem:[#allocation2 + $0xe0] sm:$0xff] %v251
    %357 = vst [vmem:[#allocation2 + $0xe8] sm:$0xff] %v253
    %358 = vst [vmem:[#allocation2 + $0xf0] sm:$0xff] %v324
    %359 = vst [vmem:[#allocation2 + $0xf8] sm:$0xff] %v326
    %v360 = vld [vmem:[%s2] sm:$0xff]
    %v361 = vld [vmem:[%s2 + $0x8] sm:$0xff]
    %v362 = vld [vmem:[%s2 + $0x10] sm:$0xff]
    %v363 = vld [vmem:[%s2 + $0x18] sm:$0xff]
    %v364 = vld [vmem:[%s2 + $0x20] sm:$0xff]
    %v365 = vld [vmem:[%s2 + $0x28] sm:$0xff]
    %v366 = vld [vmem:[%s2 + $0x30] sm:$0xff]
    %v367 = vld [vmem:[%s2 + $0x38] sm:$0xff]
    %v368 = vld [vmem:[%s2 + $0x40] sm:$0xff]
    %v369 = vld [vmem:[%s2 + $0x48] sm:$0xff]
    %v370 = vld [vmem:[%s2 + $0x50] sm:$0xff]
    %v371 = vld [vmem:[%s2 + $0x58] sm:$0xff]
    %v372 = vld [vmem:[%s2 + $0x60] sm:$0xff]
    %v373 = vld [vmem:[%s2 + $0x68] sm:$0xff]
    %v374 = vld [vmem:[%s2 + $0x70] sm:$0xff]
    %v375 = vld [vmem:[%s2 + $0x78] sm:$0xff]
    %v376 = vld [vmem:[%s2 + $0x80] sm:$0xff]
    %v377 = vld [vmem:[%s2 + $0x88] sm:$0xff]
    %v378 = vld [vmem:[%s2 + $0x90] sm:$0xff]
    %v379 = vld [vmem:[%s2 + $0x98] sm:$0xff]
    %v380 = vld [vmem:[%s2 + $0xa0] sm:$0xff]
    %v381 = vld [vmem:[%s2 + $0xa8] sm:$0xff]
    %v382 = vld [vmem:[%s2 + $0xb0] sm:$0xff]
    %v383 = vld [vmem:[%s2 + $0xb8] sm:$0xff]
    %v384 = vld [vmem:[%s2 + $0xc0] sm:$0xff]
    %v385 = vld [vmem:[%s2 + $0xc8] sm:$0xff]
    %v386 = vld [vmem:[%s2 + $0xd0] sm:$0xff]
    %v387 = vld [vmem:[%s2 + $0xd8] sm:$0xff]
    %v388 = vld [vmem:[%s2 + $0xe0] sm:$0xff]
    %v389 = vld [vmem:[%s2 + $0xe8] sm:$0xff]
    %v390 = vld [vmem:[%s2 + $0xf0] sm:$0xff]
    %v391 = vld [vmem:[%s2 + $0xf8] sm:$0xff]
    %v392 = vld [vmem:[#allocation8] sm:$0xff]
    %v393 = vld [vmem:[#allocation8 + $0x8] sm:$0xff]
    %v394 = vld [vmem:[#allocation8 + $0x10] sm:$0xff]
    %v395 = vld [vmem:[#allocation8 + $0x18] sm:$0xff]
    %v396 = vld [vmem:[#allocation8 + $0x20] sm:$0xff]
    %v397 = vld [vmem:[#allocation8 + $0x28] sm:$0xff]
    %v398 = vld [vmem:[#allocation8 + $0x30] sm:$0xff]
    %v399 = vld [vmem:[#allocation8 + $0x38] sm:$0xff]
    %v400 = vld [vmem:[#allocation8 + $0x40] sm:$0xff]
    %v401 = vld [vmem:[#allocation8 + $0x48] sm:$0xff]
    %v402 = vld [vmem:[#allocation8 + $0x50] sm:$0xff]
    %v403 = vld [vmem:[#allocation8 + $0x58] sm:$0xff]
    %v404 = vld [vmem:[#allocation8 + $0x60] sm:$0xff]
    %v405 = vld [vmem:[#allocation8 + $0x68] sm:$0xff]
    %v406 = vld [vmem:[#allocation8 + $0x70] sm:$0xff]
    %v407 = vld [vmem:[#allocation8 + $0x78] sm:$0xff]
    %v408 = vld [vmem:[#allocation8 + $0x80] sm:$0xff]
    %v409 = vld [vmem:[#allocation8 + $0x88] sm:$0xff]
    %v410 = vld [vmem:[#allocation8 + $0x90] sm:$0xff]
    %v411 = vld [vmem:[#allocation8 + $0x98] sm:$0xff]
    %v412 = vld [vmem:[#allocation8 + $0xa0] sm:$0xff]
    %v413 = vld [vmem:[#allocation8 + $0xa8] sm:$0xff]
    %v414 = vld [vmem:[#allocation8 + $0xb0] sm:$0xff]
    %v415 = vld [vmem:[#allocation8 + $0xb8] sm:$0xff]
    %v416 = vld [vmem:[#allocation8 + $0xc0] sm:$0xff]
    %v417 = vld [vmem:[#allocation8 + $0xc8] sm:$0xff]
    %v418 = vld [vmem:[#allocation8 + $0xd0] sm:$0xff]
    %v419 = vld [vmem:[#allocation8 + $0xd8] sm:$0xff]
    %v420 = vld [vmem:[#allocation8 + $0xe0] sm:$0xff]
    %v421 = vld [vmem:[#allocation8 + $0xe8] sm:$0xff]
    %v422 = vld [vmem:[#allocation8 + $0xf0] sm:$0xff]
    %v423 = vld [vmem:[#allocation8 + $0xf8] sm:$0xff]
    %v424 = vld [vmem:[#allocation8 + $0x100] sm:$0xff]
    %v425 = vld [vmem:[#allocation8 + $0x108] sm:$0xff]
    %v426 = vld [vmem:[#allocation8 + $0x110] sm:$0xff]
    %v427 = vld [vmem:[#allocation8 + $0x118] sm:$0xff]
    %v428 = vld [vmem:[#allocation8 + $0x120] sm:$0xff]
    %v429 = vld [vmem:[#allocation8 + $0x128] sm:$0xff]
    %v430 = vld [vmem:[#allocation8 + $0x130] sm:$0xff]
    %v431 = vld [vmem:[#allocation8 + $0x138] sm:$0xff]
    %v432 = vld [vmem:[#allocation8 + $0x140] sm:$0xff]
    %v433 = vld [vmem:[#allocation8 + $0x148] sm:$0xff]
    %v434 = vld [vmem:[#allocation8 + $0x150] sm:$0xff]
    %v435 = vld [vmem:[#allocation8 + $0x158] sm:$0xff]
    %v436 = vld [vmem:[#allocation8 + $0x160] sm:$0xff]
    %v437 = vld [vmem:[#allocation8 + $0x168] sm:$0xff]
    %v438 = vld [vmem:[#allocation8 + $0x170] sm:$0xff]
    %v439 = vld [vmem:[#allocation8 + $0x178] sm:$0xff]
    %v440 = vld [vmem:[#allocation8 + $0x180] sm:$0xff]
    %v441 = vld [vmem:[#allocation8 + $0x188] sm:$0xff]
    %v442 = vld [vmem:[#allocation8 + $0x190] sm:$0xff]
    %v443 = vld [vmem:[#allocation8 + $0x198] sm:$0xff]
    %v444 = vld [vmem:[#allocation8 + $0x1a0] sm:$0xff]
    %v445 = vld [vmem:[#allocation8 + $0x1a8] sm:$0xff]
    %v446 = vld [vmem:[#allocation8 + $0x1b0] sm:$0xff]
    %v447 = vld [vmem:[#allocation8 + $0x1b8] sm:$0xff]
    %v448 = vld [vmem:[#allocation8 + $0x1c0] sm:$0xff]
    %v449 = vld [vmem:[#allocation8 + $0x1c8] sm:$0xff]
    %v450 = vld [vmem:[#allocation8 + $0x1d0] sm:$0xff]
    %v451 = vld [vmem:[#allocation8 + $0x1d8] sm:$0xff]
    %v452 = vld [vmem:[#allocation8 + $0x1e0] sm:$0xff]
    %v453 = vld [vmem:[#allocation8 + $0x1e8] sm:$0xff]
    %v454 = vld [vmem:[#allocation8 + $0x1f0] sm:$0xff]
    %v455 = vld [vmem:[#allocation8 + $0x1f8] sm:$0xff]
    %v456 = vld [vmem:[#allocation9] sm:$0xf]
    %v458 = vlaneseq
    %v459 = vshrl.u32 %v458, 7
    %v460 = vsub.s32 0, %v459
    %v461 = vrot.slane %v456, %v460
    %v462 = vlaneseq
    %v463 = vshrl.u32 %v462, 7
    %v464 = vsub.s32 1, %v463
    %v465 = vrot.slane %v456, %v464
    %v466 = vlaneseq
    %v467 = vshrl.u32 %v466, 7
    %v468 = vsub.s32 2, %v467
    %v469 = vrot.slane %v456, %v468
    %v470 = vlaneseq
    %v471 = vshrl.u32 %v470, 7
    %v472 = vsub.s32 3, %v471
    %v473 = vrot.slane %v456, %v472
    %478 = vst [vmem:[#allocation3] sm:$0xff] 0
    %v479 = vld [vmem:[#allocation2] sm:$0xff]
    %v480 = vld [vmem:[#allocation2 + $0x8] sm:$0xff]
    %v481 = vld [vmem:[#allocation2 + $0x10] sm:$0xff]
    %v482 = vld [vmem:[#allocation2 + $0x18] sm:$0xff]
    %v483 = vxor.u32 %v479, 2147483648
    %v484 = vxor.u32 %v480, 2147483648
    %v485 = vxor.u32 %v481, 2147483648
    %v486 = vmul.f32 %v483, 1.442695
    %v487 = vpow.pop %v486
    %v488 = vmul.f32 %v484, 1.442695
    %v489 = vpow.pop %v488
    %v490 = vmul.f32 %v485, 1.442695
    %v491 = vpow.pop %v490
    %v492 = vadd.f32 %v487, 1.0
    %v493 = vadd.f32 %v489, 1.0
    %v494 = vadd.f32 %v491, 1.0
    %v495 = vrcp.pop %v492
    %v496 = vmul.f32 1.0, %v495
    %v497 = vrcp.pop %v493
    %v498 = vmul.f32 1.0, %v497
    %v499 = vrcp.pop %v494
    %v500 = vmul.f32 1.0, %v499
    %v501 = vtanh.pop %v482
    %v502 = vmul.f32 %v498, 0.0
    %v503 = vmul.f32 %v496, %v501
    %v504 = vadd.f32 %v502, %v503
    %v505 = vtanh.pop %v504
    %v506 = vmul.f32 %v500, %v505
    %v507 = vpack.c.bf16 %v506, %v506
    %508 = vst [vmem:[#allocation3] sm:$0xf] %v507
    %v509 = vld [vmem:[#allocation2 + $0x20] sm:$0xff]
    %v510 = vld [vmem:[#allocation2 + $0x28] sm:$0xff]
    %v511 = vld [vmem:[#allocation2 + $0x30] sm:$0xff]
    %v512 = vld [vmem:[#allocation2 + $0x38] sm:$0xff]
    %v545 = vunpack.c.l.b16 %v360
    %v546 = vunpack.c.h.b16 %v360
    %v547 = vunpack.c.l.b16 %v361
    %v548 = vunpack.c.h.b16 %v361
    %v549 = vunpack.c.l.b16 %v362
    %v550 = vunpack.c.h.b16 %v362
    %v551 = vunpack.c.l.b16 %v363
    %v552 = vunpack.c.h.b16 %v363
    %v553 = vunpack.c.l.b16 %v364
    %v554 = vunpack.c.h.b16 %v364
    %v555 = vunpack.c.l.b16 %v365
    %v556 = vunpack.c.h.b16 %v365
    %v557 = vunpack.c.l.b16 %v366
    %v558 = vunpack.c.h.b16 %v366
    %v559 = vunpack.c.l.b16 %v367
    %v560 = vunpack.c.h.b16 %v367
    %v561 = vunpack.c.l.b16 %v368
    %v562 = vunpack.c.h.b16 %v368
    %v563 = vunpack.c.l.b16 %v369
    %v564 = vunpack.c.h.b16 %v369
    %v565 = vunpack.c.l.b16 %v370
    %v566 = vunpack.c.h.b16 %v370
    %v567 = vunpack.c.l.b16 %v371
    %v568 = vunpack.c.h.b16 %v371
    %v569 = vunpack.c.l.b16 %v372
    %v570 = vunpack.c.h.b16 %v372
    %v571 = vunpack.c.l.b16 %v373
    %v572 = vunpack.c.h.b16 %v373
    %v573 = vunpack.c.l.b16 %v374
    %v574 = vunpack.c.h.b16 %v374
    %v575 = vunpack.c.l.b16 %v375
    %v576 = vunpack.c.h.b16 %v375
    %v577 = vunpack.c.l.b16 %v376
    %v578 = vunpack.c.h.b16 %v376
    %v579 = vunpack.c.l.b16 %v377
    %v580 = vunpack.c.h.b16 %v377
    %v581 = vunpack.c.l.b16 %v378
    %v582 = vunpack.c.h.b16 %v378
    %v583 = vunpack.c.l.b16 %v379
    %v584 = vunpack.c.h.b16 %v379
    %v585 = vunpack.c.l.b16 %v380
    %v586 = vunpack.c.h.b16 %v380
    %v587 = vunpack.c.l.b16 %v381
    %v588 = vunpack.c.h.b16 %v381
    %v589 = vunpack.c.l.b16 %v382
    %v590 = vunpack.c.h.b16 %v382
    %v591 = vunpack.c.l.b16 %v383
    %v592 = vunpack.c.h.b16 %v383
    %v593 = vunpack.c.l.b16 %v384
    %v594 = vunpack.c.h.b16 %v384
    %v595 = vunpack.c.l.b16 %v385
    %v596 = vunpack.c.h.b16 %v385
    %v597 = vunpack.c.l.b16 %v386
    %v598 = vunpack.c.h.b16 %v386
    %v599 = vunpack.c.l.b16 %v387
    %v600 = vunpack.c.h.b16 %v387
    %v601 = vunpack.c.l.b16 %v388
    %v602 = vunpack.c.h.b16 %v388
    %v603 = vunpack.c.l.b16 %v389
    %v604 = vunpack.c.h.b16 %v389
    %v605 = vunpack.c.l.b16 %v390
    %v606 = vunpack.c.h.b16 %v390
    %v607 = vunpack.c.l.b16 %v391
    %v608 = vunpack.c.h.b16 %v391
    %v609 = vpack.c.b16 %v549, %v545
    %v610 = vpack.c.b16 %v550, %v546
    %v611 = vpack.c.b16 %v551, %v547
    %v612 = vpack.c.b16 %v552, %v548
    %v613 = vpack.c.b16 %v557, %v553
    %v614 = vpack.c.b16 %v558, %v554
    %v615 = vpack.c.b16 %v559, %v555
    %v616 = vpack.c.b16 %v560, %v556
    %v617 = vpack.c.b16 %v565, %v561
    %v618 = vpack.c.b16 %v566, %v562
    %v619 = vpack.c.b16 %v567, %v563
    %v620 = vpack.c.b16 %v568, %v564
    %v621 = vpack.c.b16 %v573, %v569
    %v622 = vpack.c.b16 %v574, %v570
    %v623 = vpack.c.b16 %v575, %v571
    %v624 = vpack.c.b16 %v576, %v572
    %v625 = vpack.c.b16 %v581, %v577
    %v626 = vpack.c.b16 %v582, %v578
    %v627 = vpack.c.b16 %v583, %v579
    %v628 = vpack.c.b16 %v584, %v580
    %v629 = vpack.c.b16 %v589, %v585
    %v630 = vpack.c.b16 %v590, %v586
    %v631 = vpack.c.b16 %v591, %v587
    %v632 = vpack.c.b16 %v592, %v588
    %v633 = vpack.c.b16 %v597, %v593
    %v634 = vpack.c.b16 %v598, %v594
    %v635 = vpack.c.b16 %v599, %v595
    %v636 = vpack.c.b16 %v600, %v596
    %v637 = vpack.c.b16 %v605, %v601
    %v638 = vpack.c.b16 %v606, %v602
    %v639 = vpack.c.b16 %v607, %v603
    %v640 = vpack.c.b16 %v608, %v604
    %673 = vmatprep.subr.bf16.mxu0 %v610
    %674 = vmatpush1.bf16.msra.mxu0 %v609
    %675 = vmatprep.subr.bf16.mxu0 %v614
    %676 = vmatpush1.bf16.msra.mxu0 %v613
    %677 = vmatprep.subr.bf16.mxu0 %v618
    %678 = vmatpush1.bf16.msra.mxu0 %v617
    %679 = vmatprep.subr.bf16.mxu0 %v622
    %680 = vmatpush1.bf16.msra.mxu0 %v621
    %681 = vmatprep.subr.bf16.mxu0 %v626
    %682 = vmatpush1.bf16.msra.mxu0 %v625
    %683 = vmatprep.subr.bf16.mxu0 %v630
    %684 = vmatpush1.bf16.msra.mxu0 %v629
    %685 = vmatprep.subr.bf16.mxu0 %v634
    %686 = vmatpush1.bf16.msra.mxu0 %v633
    %687 = vmatprep.subr.bf16.mxu0 %v638
    %688 = vmatpush1.bf16.msra.mxu0 %v637
    %689 = vmatprep.subr.bf16.mxu0 0
    %690 = vmatpush1.bf16.msra.mxu0 0
    %691 = vmatprep.subr.bf16.mxu0 0
    %692 = vmatpush1.bf16.msra.mxu0 0
    %693 = vmatprep.subr.bf16.mxu0 0
    %694 = vmatpush1.bf16.msra.mxu0 0
    %695 = vmatprep.subr.bf16.mxu0 0
    %696 = vmatpush1.bf16.msra.mxu0 0
    %697 = vmatprep.subr.bf16.mxu0 0
    %698 = vmatpush1.bf16.msra.mxu0 0
    %699 = vmatprep.subr.bf16.mxu0 0
    %700 = vmatpush1.bf16.msra.mxu0 0
    %701 = vmatprep.subr.bf16.mxu0 0
    %702 = vmatpush1.bf16.msra.mxu0 0
    %703 = vmatprep.subr.bf16.mxu0 0
    %704 = vmatpush1.bf16.msra.mxu0 0
    %705 = vmatprep.mubr.bf16.mxu0 0
    %706 = vmatmul.mubr.bf16.gmra.mrb[0].mxu0 %v507
    %v707 = vpop.f32.mrb[0].mxu0
    %v708 = vadd.f32 0.0, %v707
    %v709 = vpop.f32.mrb[0].mxu0
    %v710 = vadd.f32 0.0, %v709
    %v711 = vpop.f32.mrb[0].mxu0
    %v712 = vpop.f32.mrb[0].mxu0
    %713 = vdwg.mxu0
    %714 = vmatprep.subr.bf16.mxu0 %v612
    %715 = vmatpush1.bf16.msra.mxu0 %v611
    %716 = vmatprep.subr.bf16.mxu0 %v616
    %717 = vmatpush1.bf16.msra.mxu0 %v615
    %718 = vmatprep.subr.bf16.mxu0 %v620
    %719 = vmatpush1.bf16.msra.mxu0 %v619
    %720 = vmatprep.subr.bf16.mxu0 %v624
    %721 = vmatpush1.bf16.msra.mxu0 %v623
    %722 = vmatprep.subr.bf16.mxu0 %v628
    %723 = vmatpush1.bf16.msra.mxu0 %v627
    %724 = vmatprep.subr.bf16.mxu0 %v632
    %725 = vmatpush1.bf16.msra.mxu0 %v631
    %726 = vmatprep.subr.bf16.mxu0 %v636
    %727 = vmatpush1.bf16.msra.mxu0 %v635
    %728 = vmatprep.subr.bf16.mxu0 %v640
    %729 = vmatpush1.bf16.msra.mxu0 %v639
    %730 = vmatprep.subr.bf16.mxu0 0
    %731 = vmatpush1.bf16.msra.mxu0 0
    %732 = vmatprep.subr.bf16.mxu0 0
    %733 = vmatpush1.bf16.msra.mxu0 0
    %734 = vmatprep.subr.bf16.mxu0 0
    %735 = vmatpush1.bf16.msra.mxu0 0
    %736 = vmatprep.subr.bf16.mxu0 0
    %737 = vmatpush1.bf16.msra.mxu0 0
    %738 = vmatprep.subr.bf16.mxu0 0
    %739 = vmatpush1.bf16.msra.mxu0 0
    %740 = vmatprep.subr.bf16.mxu0 0
    %741 = vmatpush1.bf16.msra.mxu0 0
    %742 = vmatprep.subr.bf16.mxu0 0
    %743 = vmatpush1.bf16.msra.mxu0 0
    %744 = vmatprep.subr.bf16.mxu0 0
    %745 = vmatpush1.bf16.msra.mxu0 0
    %746 = vmatprep.mubr.bf16.mxu0 0
    %747 = vmatmul.mubr.bf16.gmra.mrb[0].mxu0 %v507
    %v748 = vpop.f32.mrb[0].mxu0
    %v749 = vadd.f32 0.0, %v748
    %v750 = vpop.f32.mrb[0].mxu0
    %v751 = vadd.f32 0.0, %v750
    %v752 = vpop.f32.mrb[0].mxu0
    %v753 = vpop.f32.mrb[0].mxu0
    %754 = vdwg.mxu0
    %v755 = vadd.f32 %v509, %v708
    %v756 = vadd.f32 %v510, %v710
    %v757 = vadd.f32 %v511, %v749
    %v758 = vadd.f32 %v512, %v751
    %v759 = vld [vmem:[#allocation3] sm:$0xff]
    %v761 = vunpack.c.l.b16 %v759
    %v762 = vunpack.c.h.b16 %v759
    %v763 = vpack.c.b16 %v761, %v761
    %v764 = vpack.c.b16 %v762, %v762
    %v831 = vunpack.c.l.b16 %v392
    %v832 = vunpack.c.h.b16 %v392
    %v833 = vunpack.c.l.b16 %v393
    %v834 = vunpack.c.h.b16 %v393
    %v835 = vunpack.c.l.b16 %v394
    %v836 = vunpack.c.h.b16 %v394
    %v837 = vunpack.c.l.b16 %v395
    %v838 = vunpack.c.h.b16 %v395
    %v839 = vunpack.c.l.b16 %v396
    %v840 = vunpack.c.h.b16 %v396
    %v841 = vunpack.c.l.b16 %v397
    %v842 = vunpack.c.h.b16 %v397
    %v843 = vunpack.c.l.b16 %v398
    %v844 = vunpack.c.h.b16 %v398
    %v845 = vunpack.c.l.b16 %v399
    %v846 = vunpack.c.h.b16 %v399
    %v847 = vunpack.c.l.b16 %v400
    %v848 = vunpack.c.h.b16 %v400
    %v849 = vunpack.c.l.b16 %v401
    %v850 = vunpack.c.h.b16 %v401
    %v851 = vunpack.c.l.b16 %v402
    %v852 = vunpack.c.h.b16 %v402
    %v853 = vunpack.c.l.b16 %v403
    %v854 = vunpack.c.h.b16 %v403
    %v855 = vunpack.c.l.b16 %v404
    %v856 = vunpack.c.h.b16 %v404
    %v857 = vunpack.c.l.b16 %v405
    %v858 = vunpack.c.h.b16 %v405
    %v859 = vunpack.c.l.b16 %v406
    %v860 = vunpack.c.h.b16 %v406
    %v861 = vunpack.c.l.b16 %v407
    %v862 = vunpack.c.h.b16 %v407
    %v863 = vunpack.c.l.b16 %v408
    %v864 = vunpack.c.h.b16 %v408
    %v865 = vunpack.c.l.b16 %v409
    %v866 = vunpack.c.h.b16 %v409
    %v867 = vunpack.c.l.b16 %v410
    %v868 = vunpack.c.h.b16 %v410
    %v869 = vunpack.c.l.b16 %v411
    %v870 = vunpack.c.h.b16 %v411
    %v871 = vunpack.c.l.b16 %v412
    %v872 = vunpack.c.h.b16 %v412
    %v873 = vunpack.c.l.b16 %v413
    %v874 = vunpack.c.h.b16 %v413
    %v875 = vunpack.c.l.b16 %v414
    %v876 = vunpack.c.h.b16 %v414
    %v877 = vunpack.c.l.b16 %v415
    %v878 = vunpack.c.h.b16 %v415
    %v879 = vunpack.c.l.b16 %v416
    %v880 = vunpack.c.h.b16 %v416
    %v881 = vunpack.c.l.b16 %v417
    %v882 = vunpack.c.h.b16 %v417
    %v883 = vunpack.c.l.b16 %v418
    %v884 = vunpack.c.h.b16 %v418
    %v885 = vunpack.c.l.b16 %v419
    %v886 = vunpack.c.h.b16 %v419
    %v887 = vunpack.c.l.b16 %v420
    %v888 = vunpack.c.h.b16 %v420
    %v889 = vunpack.c.l.b16 %v421
    %v890 = vunpack.c.h.b16 %v421
    %v891 = vunpack.c.l.b16 %v422
    %v892 = vunpack.c.h.b16 %v422
    %v893 = vunpack.c.l.b16 %v423
    %v894 = vunpack.c.h.b16 %v423
    %v895 = vunpack.c.l.b16 %v424
    %v896 = vunpack.c.h.b16 %v424
    %v897 = vunpack.c.l.b16 %v425
    %v898 = vunpack.c.h.b16 %v425
    %v899 = vunpack.c.l.b16 %v426
    %v900 = vunpack.c.h.b16 %v426
    %v901 = vunpack.c.l.b16 %v427
    %v902 = vunpack.c.h.b16 %v427
    %v903 = vunpack.c.l.b16 %v428
    %v904 = vunpack.c.h.b16 %v428
    %v905 = vunpack.c.l.b16 %v429
    %v906 = vunpack.c.h.b16 %v429
    %v907 = vunpack.c.l.b16 %v430
    %v908 = vunpack.c.h.b16 %v430
    %v909 = vunpack.c.l.b16 %v431
    %v910 = vunpack.c.h.b16 %v431
    %v911 = vunpack.c.l.b16 %v432
    %v912 = vunpack.c.h.b16 %v432
    %v913 = vunpack.c.l.b16 %v433
    %v914 = vunpack.c.h.b16 %v433
    %v915 = vunpack.c.l.b16 %v434
    %v916 = vunpack.c.h.b16 %v434
    %v917 = vunpack.c.l.b16 %v435
    %v918 = vunpack.c.h.b16 %v435
    %v919 = vunpack.c.l.b16 %v436
    %v920 = vunpack.c.h.b16 %v436
    %v921 = vunpack.c.l.b16 %v437
    %v922 = vunpack.c.h.b16 %v437
    %v923 = vunpack.c.l.b16 %v438
    %v924 = vunpack.c.h.b16 %v438
    %v925 = vunpack.c.l.b16 %v439
    %v926 = vunpack.c.h.b16 %v439
    %v927 = vunpack.c.l.b16 %v440
    %v928 = vunpack.c.h.b16 %v440
    %v929 = vunpack.c.l.b16 %v441
    %v930 = vunpack.c.h.b16 %v441
    %v931 = vunpack.c.l.b16 %v442
    %v932 = vunpack.c.h.b16 %v442
    %v933 = vunpack.c.l.b16 %v443
    %v934 = vunpack.c.h.b16 %v443
    %v935 = vunpack.c.l.b16 %v444
    %v936 = vunpack.c.h.b16 %v444
    %v937 = vunpack.c.l.b16 %v445
    %v938 = vunpack.c.h.b16 %v445
    %v939 = vunpack.c.l.b16 %v446
    %v940 = vunpack.c.h.b16 %v446
    %v941 = vunpack.c.l.b16 %v447
    %v942 = vunpack.c.h.b16 %v447
    %v943 = vunpack.c.l.b16 %v448
    %v944 = vunpack.c.h.b16 %v448
    %v945 = vunpack.c.l.b16 %v449
    %v946 = vunpack.c.h.b16 %v449
    %v947 = vunpack.c.l.b16 %v450
    %v948 = vunpack.c.h.b16 %v450
    %v949 = vunpack.c.l.b16 %v451
    %v950 = vunpack.c.h.b16 %v451
    %v951 = vunpack.c.l.b16 %v452
    %v952 = vunpack.c.h.b16 %v452
    %v953 = vunpack.c.l.b16 %v453
    %v954 = vunpack.c.h.b16 %v453
    %v955 = vunpack.c.l.b16 %v454
    %v956 = vunpack.c.h.b16 %v454
    %v957 = vunpack.c.l.b16 %v455
    %v958 = vunpack.c.h.b16 %v455
    %v959 = vpack.c.b16 %v835, %v831
    %v960 = vpack.c.b16 %v836, %v832
    %v961 = vpack.c.b16 %v837, %v833
    %v962 = vpack.c.b16 %v838, %v834
    %v963 = vpack.c.b16 %v843, %v839
    %v964 = vpack.c.b16 %v844, %v840
    %v965 = vpack.c.b16 %v845, %v841
    %v966 = vpack.c.b16 %v846, %v842
    %v967 = vpack.c.b16 %v851, %v847
    %v968 = vpack.c.b16 %v852, %v848
    %v969 = vpack.c.b16 %v853, %v849
    %v970 = vpack.c.b16 %v854, %v850
    %v971 = vpack.c.b16 %v859, %v855
    %v972 = vpack.c.b16 %v860, %v856
    %v973 = vpack.c.b16 %v861, %v857
    %v974 = vpack.c.b16 %v862, %v858
    %v975 = vpack.c.b16 %v867, %v863
    %v976 = vpack.c.b16 %v868, %v864
    %v977 = vpack.c.b16 %v869, %v865
    %v978 = vpack.c.b16 %v870, %v866
    %v979 = vpack.c.b16 %v875, %v871
    %v980 = vpack.c.b16 %v876, %v872
    %v981 = vpack.c.b16 %v877, %v873
    %v982 = vpack.c.b16 %v878, %v874
    %v983 = vpack.c.b16 %v883, %v879
    %v984 = vpack.c.b16 %v884, %v880
    %v985 = vpack.c.b16 %v885, %v881
    %v986 = vpack.c.b16 %v886, %v882
    %v987 = vpack.c.b16 %v891, %v887
    %v988 = vpack.c.b16 %v892, %v888
    %v989 = vpack.c.b16 %v893, %v889
    %v990 = vpack.c.b16 %v894, %v890
    %v991 = vpack.c.b16 %v899, %v895
    %v992 = vpack.c.b16 %v900, %v896
    %v993 = vpack.c.b16 %v901, %v897
    %v994 = vpack.c.b16 %v902, %v898
    %v995 = vpack.c.b16 %v907, %v903
    %v996 = vpack.c.b16 %v908, %v904
    %v997 = vpack.c.b16 %v909, %v905
    %v998 = vpack.c.b16 %v910, %v906
    %v999 = vpack.c.b16 %v915, %v911
    %v1000 = vpack.c.b16 %v916, %v912
    %v1001 = vpack.c.b16 %v917, %v913
    %v1002 = vpack.c.b16 %v918, %v914
    %v1003 = vpack.c.b16 %v923, %v919
    %v1004 = vpack.c.b16 %v924, %v920
    %v1005 = vpack.c.b16 %v925, %v921
    %v1006 = vpack.c.b16 %v926, %v922
    %v1007 = vpack.c.b16 %v931, %v927
    %v1008 = vpack.c.b16 %v932, %v928
    %v1009 = vpack.c.b16 %v933, %v929
    %v1010 = vpack.c.b16 %v934, %v930
    %v1011 = vpack.c.b16 %v939, %v935
    %v1012 = vpack.c.b16 %v940, %v936
    %v1013 = vpack.c.b16 %v941, %v937
    %v1014 = vpack.c.b16 %v942, %v938
    %v1015 = vpack.c.b16 %v947, %v943
    %v1016 = vpack.c.b16 %v948, %v944
    %v1017 = vpack.c.b16 %v949, %v945
    %v1018 = vpack.c.b16 %v950, %v946
    %v1019 = vpack.c.b16 %v955, %v951
    %v1020 = vpack.c.b16 %v956, %v952
    %v1021 = vpack.c.b16 %v957, %v953
    %v1022 = vpack.c.b16 %v958, %v954
    %1087 = vmatprep.subr.bf16.mxu0 %v960
    %1088 = vmatpush1.bf16.msra.mxu0 %v959
    %1089 = vmatprep.subr.bf16.mxu0 %v964
    %1090 = vmatpush1.bf16.msra.mxu0 %v963
    %1091 = vmatprep.subr.bf16.mxu0 %v968
    %1092 = vmatpush1.bf16.msra.mxu0 %v967
    %1093 = vmatprep.subr.bf16.mxu0 %v972
    %1094 = vmatpush1.bf16.msra.mxu0 %v971
    %1095 = vmatprep.subr.bf16.mxu0 %v976
    %1096 = vmatpush1.bf16.msra.mxu0 %v975
    %1097 = vmatprep.subr.bf16.mxu0 %v980
    %1098 = vmatpush1.bf16.msra.mxu0 %v979
    %1099 = vmatprep.subr.bf16.mxu0 %v984
    %1100 = vmatpush1.bf16.msra.mxu0 %v983
    %1101 = vmatprep.subr.bf16.mxu0 %v988
    %1102 = vmatpush1.bf16.msra.mxu0 %v987
    %1103 = vmatprep.subr.bf16.mxu0 %v992
    %1104 = vmatpush1.bf16.msra.mxu0 %v991
    %1105 = vmatprep.subr.bf16.mxu0 %v996
    %1106 = vmatpush1.bf16.msra.mxu0 %v995
    %1107 = vmatprep.subr.bf16.mxu0 %v1000
    %1108 = vmatpush1.bf16.msra.mxu0 %v999
    %1109 = vmatprep.subr.bf16.mxu0 %v1004
    %1110 = vmatpush1.bf16.msra.mxu0 %v1003
    %1111 = vmatprep.subr.bf16.mxu0 %v1008
    %1112 = vmatpush1.bf16.msra.mxu0 %v1007
    %1113 = vmatprep.subr.bf16.mxu0 %v1012
    %1114 = vmatpush1.bf16.msra.mxu0 %v1011
    %1115 = vmatprep.subr.bf16.mxu0 %v1016
    %1116 = vmatpush1.bf16.msra.mxu0 %v1015
    %1117 = vmatprep.subr.bf16.mxu0 %v1020
    %1118 = vmatpush1.bf16.msra.mxu0 %v1019
    %1119 = vmatprep.mubr.bf16.mxu0 %v764
    %1120 = vmatmul.mubr.bf16.gmra.mrb[0].mxu0 %v763
    %v1121 = vpop.f32.mrb[0].mxu0
    %v1122 = vadd.f32 %v461, %v1121
    %v1123 = vpop.f32.mrb[0].mxu0
    %v1124 = vadd.f32 %v465, %v1123
    %v1125 = vpop.f32.mrb[0].mxu0
    %v1126 = vpop.f32.mrb[0].mxu0
    %1127 = vdwg.mxu0
    %1128 = vmatprep.subr.bf16.mxu0 %v962
    %1129 = vmatpush1.bf16.msra.mxu0 %v961
    %1130 = vmatprep.subr.bf16.mxu0 %v966
    %1131 = vmatpush1.bf16.msra.mxu0 %v965
    %1132 = vmatprep.subr.bf16.mxu0 %v970
    %1133 = vmatpush1.bf16.msra.mxu0 %v969
    %1134 = vmatprep.subr.bf16.mxu0 %v974
    %1135 = vmatpush1.bf16.msra.mxu0 %v973
    %1136 = vmatprep.subr.bf16.mxu0 %v978
    %1137 = vmatpush1.bf16.msra.mxu0 %v977
    %1138 = vmatprep.subr.bf16.mxu0 %v982
    %1139 = vmatpush1.bf16.msra.mxu0 %v981
    %1140 = vmatprep.subr.bf16.mxu0 %v986
    %1141 = vmatpush1.bf16.msra.mxu0 %v985
    %1142 = vmatprep.subr.bf16.mxu0 %v990
    %1143 = vmatpush1.bf16.msra.mxu0 %v989
    %1144 = vmatprep.subr.bf16.mxu0 %v994
    %1145 = vmatpush1.bf16.msra.mxu0 %v993
    %1146 = vmatprep.subr.bf16.mxu0 %v998
    %1147 = vmatpush1.bf16.msra.mxu0 %v997
    %1148 = vmatprep.subr.bf16.mxu0 %v1002
    %1149 = vmatpush1.bf16.msra.mxu0 %v1001
    %1150 = vmatprep.subr.bf16.mxu0 %v1006
    %1151 = vmatpush1.bf16.msra.mxu0 %v1005
    %1152 = vmatprep.subr.bf16.mxu0 %v1010
    %1153 = vmatpush1.bf16.msra.mxu0 %v1009
    %1154 = vmatprep.subr.bf16.mxu0 %v1014
    %1155 = vmatpush1.bf16.msra.mxu0 %v1013
    %1156 = vmatprep.subr.bf16.mxu0 %v1018
    %1157 = vmatpush1.bf16.msra.mxu0 %v1017
    %1158 = vmatprep.subr.bf16.mxu0 %v1022
    %1159 = vmatpush1.bf16.msra.mxu0 %v1021
    %1160 = vmatprep.mubr.bf16.mxu0 %v764
    %1161 = vmatmul.mubr.bf16.gmra.mrb[0].mxu0 %v763
    %v1162 = vpop.f32.mrb[0].mxu0
    %v1163 = vadd.f32 %v469, %v1162
    %v1164 = vpop.f32.mrb[0].mxu0
    %v1165 = vadd.f32 %v473, %v1164
    %v1166 = vpop.f32.mrb[0].mxu0
    %v1167 = vpop.f32.mrb[0].mxu0
    %1168 = vdwg.mxu0
    %v1169 = vxor.u32 %v1122, 2147483648
    %v1170 = vxor.u32 %v1124, 2147483648
    %v1171 = vxor.u32 %v1163, 2147483648
    %v1172 = vmul.f32 %v1169, 1.442695
    %v1173 = vpow.pop %v1172
    %v1174 = vmul.f32 %v1170, 1.442695
    %v1175 = vpow.pop %v1174
    %v1176 = vmul.f32 %v1171, 1.442695
    %v1177 = vpow.pop %v1176
    %v1178 = vadd.f32 %v1173, 1.0
    %v1179 = vadd.f32 %v1175, 1.0
    %v1180 = vadd.f32 %v1177, 1.0
    %v1181 = vrcp.pop %v1178
    %v1182 = vmul.f32 1.0, %v1181
    %v1183 = vrcp.pop %v1179
    %v1184 = vmul.f32 1.0, %v1183
    %v1185 = vrcp.pop %v1180
    %v1186 = vmul.f32 1.0, %v1185
    %v1187 = vtanh.pop %v1165
    %v1188 = vmul.f32 %v1184, 0.0
    %v1189 = vmul.f32 %v1182, %v1187
    %v1190 = vadd.f32 %v1188, %v1189
    %v1191 = vtanh.pop %v1190
    %v1192 = vmul.f32 %v1186, %v1191
    %v1193 = vpack.c.bf16 %v1192, %v1192
    %1194 = vst [vmem:[#allocation3 + $0x4] sm:$0xf] %v1193
    %v1195 = vxor.u32 %v755, 2147483648
    %v1196 = vxor.u32 %v756, 2147483648
    %v1197 = vxor.u32 %v757, 2147483648
    %v1198 = vmul.f32 %v1195, 1.442695
    %v1199 = vpow.pop %v1198
    %v1200 = vmul.f32 %v1196, 1.442695
    %v1201 = vpow.pop %v1200
    %v1202 = vmul.f32 %v1197, 1.442695
    %v1203 = vpow.pop %v1202
    %v1204 = vadd.f32 %v1199, 1.0
    %v1205 = vadd.f32 %v1201, 1.0
    %v1206 = vadd.f32 %v1203, 1.0
    %v1207 = vrcp.pop %v1204
    %v1208 = vmul.f32 1.0, %v1207
    %v1209 = vrcp.pop %v1205
    %v1210 = vmul.f32 1.0, %v1209
    %v1211 = vrcp.pop %v1206
    %v1212 = vmul.f32 1.0, %v1211
    %v1213 = vtanh.pop %v758
    %v1214 = vmul.f32 %v1210, %v504
    %v1215 = vmul.f32 %v1208, %v1213
    %v1216 = vadd.f32 %v1214, %v1215
    %v1217 = vtanh.pop %v1216
    %v1218 = vmul.f32 %v1212, %v1217
    %v1219 = vpack.c.bf16 %v1218, %v1218
    %1220 = vst [vmem:[#allocation3] sm:$0xf] %v1219
    %v1221 = vld [vmem:[#allocation2 + $0x40] sm:$0xff]
    %v1222 = vld [vmem:[#allocation2 + $0x48] sm:$0xff]
    %v1223 = vld [vmem:[#allocation2 + $0x50] sm:$0xff]
    %v1224 = vld [vmem:[#allocation2 + $0x58] sm:$0xff]
    %1225 = vmatprep.subr.bf16.mxu0 %v610
    %1226 = vmatpush1.bf16.msra.mxu0 %v609
    %1227 = vmatprep.subr.bf16.mxu0 %v614
    %1228 = vmatpush1.bf16.msra.mxu0 %v613
    %1229 = vmatprep.subr.bf16.mxu0 %v618
    %1230 = vmatpush1.bf16.msra.mxu0 %v617
    %1231 = vmatprep.subr.bf16.mxu0 %v622
    %1232 = vmatpush1.bf16.msra.mxu0 %v621
    %1233 = vmatprep.subr.bf16.mxu0 %v626
    %1234 = vmatpush1.bf16.msra.mxu0 %v625
    %1235 = vmatprep.subr.bf16.mxu0 %v630
    %1236 = vmatpush1.bf16.msra.mxu0 %v629
    %1237 = vmatprep.subr.bf16.mxu0 %v634
    %1238 = vmatpush1.bf16.msra.mxu0 %v633
    %1239 = vmatprep.subr.bf16.mxu0 %v638
    %1240 = vmatpush1.bf16.msra.mxu0 %v637
    %1241 = vmatprep.subr.bf16.mxu0 0
    %1242 = vmatpush1.bf16.msra.mxu0 0
    %1243 = vmatprep.subr.bf16.mxu0 0
    %1244 = vmatpush1.bf16.msra.mxu0 0
    %1245 = vmatprep.subr.bf16.mxu0 0
    %1246 = vmatpush1.bf16.msra.mxu0 0
    %1247 = vmatprep.subr.bf16.mxu0 0
    %1248 = vmatpush1.bf16.msra.mxu0 0
    %1249 = vmatprep.subr.bf16.mxu0 0
    %1250 = vmatpush1.bf16.msra.mxu0 0
    %1251 = vmatprep.subr.bf16.mxu0 0
    %1252 = vmatpush1.bf16.msra.mxu0 0
    %1253 = vmatprep.subr.bf16.mxu0 0
    %1254 = vmatpush1.bf16.msra.mxu0 0
    %1255 = vmatprep.subr.bf16.mxu0 0
    %1256 = vmatpush1.bf16.msra.mxu0 0
    %1257 = vmatprep.mubr.bf16.mxu0 0
    %1258 = vmatmul.mubr.bf16.gmra.mrb[0].mxu0 %v1219
    %v1259 = vpop.f32.mrb[0].mxu0
    %v1260 = vadd.f32 0.0, %v1259
    %v1261 = vpop.f32.mrb[0].mxu0
    %v1262 = vadd.f32 0.0, %v1261
    %v1263 = vpop.f32.mrb[0].mxu0
    %v1264 = vpop.f32.mrb[0].mxu0
    %1265 = vdwg.mxu0
    %1266 = vmatprep.subr.bf16.mxu0 %v612
    %1267 = vmatpush1.bf16.msra.mxu0 %v611
    %1268 = vmatprep.subr.bf16.mxu0 %v616
    %1269 = vmatpush1.bf16.msra.mxu0 %v615
    %1270 = vmatprep.subr.bf16.mxu0 %v620
    %1271 = vmatpush1.bf16.msra.mxu0 %v619
    %1272 = vmatprep.subr.bf16.mxu0 %v624
    %1273 = vmatpush1.bf16.msra.mxu0 %v623
    %1274 = vmatprep.subr.bf16.mxu0 %v628
    %1275 = vmatpush1.bf16.msra.mxu0 %v627
    %1276 = vmatprep.subr.bf16.mxu0 %v632
    %1277 = vmatpush1.bf16.msra.mxu0 %v631
    %1278 = vmatprep.subr.bf16.mxu0 %v636
    %1279 = vmatpush1.bf16.msra.mxu0 %v635
    %1280 = vmatprep.subr.bf16.mxu0 %v640
    %1281 = vmatpush1.bf16.msra.mxu0 %v639
    %1282 = vmatprep.subr.bf16.mxu0 0
    %1283 = vmatpush1.bf16.msra.mxu0 0
    %1284 = vmatprep.subr.bf16.mxu0 0
    %1285 = vmatpush1.bf16.msra.mxu0 0
    %1286 = vmatprep.subr.bf16.mxu0 0
    %1287 = vmatpush1.bf16.msra.mxu0 0
    %1288 = vmatprep.subr.bf16.mxu0 0
    %1289 = vmatpush1.bf16.msra.mxu0 0
    %1290 = vmatprep.subr.bf16.mxu0 0
    %1291 = vmatpush1.bf16.msra.mxu0 0
    %1292 = vmatprep.subr.bf16.mxu0 0
    %1293 = vmatpush1.bf16.msra.mxu0 0
    %1294 = vmatprep.subr.bf16.mxu0 0
    %1295 = vmatpush1.bf16.msra.mxu0 0
    %1296 = vmatprep.subr.bf16.mxu0 0
    %1297 = vmatpush1.bf16.msra.mxu0 0
    %1298 = vmatprep.mubr.bf16.mxu0 0
    %1299 = vmatmul.mubr.bf16.gmra.mrb[0].mxu0 %v1219
    %v1300 = vpop.f32.mrb[0].mxu0
    %v1301 = vadd.f32 0.0, %v1300
    %v1302 = vpop.f32.mrb[0].mxu0
    %v1303 = vadd.f32 0.0, %v1302
    %v1304 = vpop.f32.mrb[0].mxu0
    %v1305 = vpop.f32.mrb[0].mxu0
    %1306 = vdwg.mxu0
    %v1307 = vadd.f32 %v1221, %v1260
    %v1308 = vadd.f32 %v1222, %v1262
    %v1309 = vadd.f32 %v1223, %v1301
    %v1310 = vadd.f32 %v1224, %v1303
    %v1311 = vld [vmem:[#allocation3] sm:$0xff]
    %v1313 = vunpack.c.l.b16 %v1311
    %v1314 = vunpack.c.h.b16 %v1311
    %v1315 = vpack.c.b16 %v1313, %v1313
    %v1316 = vpack.c.b16 %v1314, %v1314
    %1319 = vmatprep.subr.bf16.mxu0 %v960
    %1320 = vmatpush1.bf16.msra.mxu0 %v959
    %1321 = vmatprep.subr.bf16.mxu0 %v964
    %1322 = vmatpush1.bf16.msra.mxu0 %v963
    %1323 = vmatprep.subr.bf16.mxu0 %v968
    %1324 = vmatpush1.bf16.msra.mxu0 %v967
    %1325 = vmatprep.subr.bf16.mxu0 %v972
    %1326 = vmatpush1.bf16.msra.mxu0 %v971
    %1327 = vmatprep.subr.bf16.mxu0 %v976
    %1328 = vmatpush1.bf16.msra.mxu0 %v975
    %1329 = vmatprep.subr.bf16.mxu0 %v980
    %1330 = vmatpush1.bf16.msra.mxu0 %v979
    %1331 = vmatprep.subr.bf16.mxu0 %v984
    %1332 = vmatpush1.bf16.msra.mxu0 %v983
    %1333 = vmatprep.subr.bf16.mxu0 %v988
    %1334 = vmatpush1.bf16.msra.mxu0 %v987
    %1335 = vmatprep.subr.bf16.mxu0 %v992
    %1336 = vmatpush1.bf16.msra.mxu0 %v991
    %1337 = vmatprep.subr.bf16.mxu0 %v996
    %1338 = vmatpush1.bf16.msra.mxu0 %v995
    %1339 = vmatprep.subr.bf16.mxu0 %v1000
    %1340 = vmatpush1.bf16.msra.mxu0 %v999
    %1341 = vmatprep.subr.bf16.mxu0 %v1004
    %1342 = vmatpush1.bf16.msra.mxu0 %v1003
    %1343 = vmatprep.subr.bf16.mxu0 %v1008
    %1344 = vmatpush1.bf16.msra.mxu0 %v1007
    %1345 = vmatprep.subr.bf16.mxu0 %v1012
    %1346 = vmatpush1.bf16.msra.mxu0 %v1011
    %1347 = vmatprep.subr.bf16.mxu0 %v1016
    %1348 = vmatpush1.bf16.msra.mxu0 %v1015
    %1349 = vmatprep.subr.bf16.mxu0 %v1020
    %1350 = vmatpush1.bf16.msra.mxu0 %v1019
    %1351 = vmatprep.mubr.bf16.mxu0 %v1316
    %1352 = vmatmul.mubr.bf16.gmra.mrb[0].mxu0 %v1315
    %v1353 = vpop.f32.mrb[0].mxu0
    %v1354 = vadd.f32 %v461, %v1353
    %v1355 = vpop.f32.mrb[0].mxu0
    %v1356 = vadd.f32 %v465, %v1355
    %v1357 = vpop.f32.mrb[0].mxu0
    %v1358 = vpop.f32.mrb[0].mxu0
    %1359 = vdwg.mxu0
    %1360 = vmatprep.subr.bf16.mxu0 %v962
    %1361 = vmatpush1.bf16.msra.mxu0 %v961
    %1362 = vmatprep.subr.bf16.mxu0 %v966
    %1363 = vmatpush1.bf16.msra.mxu0 %v965
    %1364 = vmatprep.subr.bf16.mxu0 %v970
    %1365 = vmatpush1.bf16.msra.mxu0 %v969
    %1366 = vmatprep.subr.bf16.mxu0 %v974
    %1367 = vmatpush1.bf16.msra.mxu0 %v973
    %1368 = vmatprep.subr.bf16.mxu0 %v978
    %1369 = vmatpush1.bf16.msra.mxu0 %v977
    %1370 = vmatprep.subr.bf16.mxu0 %v982
    %1371 = vmatpush1.bf16.msra.mxu0 %v981
    %1372 = vmatprep.subr.bf16.mxu0 %v986
    %1373 = vmatpush1.bf16.msra.mxu0 %v985
    %1374 = vmatprep.subr.bf16.mxu0 %v990
    %1375 = vmatpush1.bf16.msra.mxu0 %v989
    %1376 = vmatprep.subr.bf16.mxu0 %v994
    %1377 = vmatpush1.bf16.msra.mxu0 %v993
    %1378 = vmatprep.subr.bf16.mxu0 %v998
    %1379 = vmatpush1.bf16.msra.mxu0 %v997
    %1380 = vmatprep.subr.bf16.mxu0 %v1002
    %1381 = vmatpush1.bf16.msra.mxu0 %v1001
    %1382 = vmatprep.subr.bf16.mxu0 %v1006
    %1383 = vmatpush1.bf16.msra.mxu0 %v1005
    %1384 = vmatprep.subr.bf16.mxu0 %v1010
    %1385 = vmatpush1.bf16.msra.mxu0 %v1009
    %1386 = vmatprep.subr.bf16.mxu0 %v1014
    %1387 = vmatpush1.bf16.msra.mxu0 %v1013
    %1388 = vmatprep.subr.bf16.mxu0 %v1018
    %1389 = vmatpush1.bf16.msra.mxu0 %v1017
    %1390 = vmatprep.subr.bf16.mxu0 %v1022
    %1391 = vmatpush1.bf16.msra.mxu0 %v1021
    %1392 = vmatprep.mubr.bf16.mxu0 %v1316
    %1393 = vmatmul.mubr.bf16.gmra.mrb[0].mxu0 %v1315
    %v1394 = vpop.f32.mrb[0].mxu0
    %v1395 = vadd.f32 %v469, %v1394
    %v1396 = vpop.f32.mrb[0].mxu0
    %v1397 = vadd.f32 %v473, %v1396
    %v1398 = vpop.f32.mrb[0].mxu0
    %v1399 = vpop.f32.mrb[0].mxu0
    %1400 = vdwg.mxu0
    %v1401 = vxor.u32 %v1354, 2147483648
    %v1402 = vxor.u32 %v1356, 2147483648
    %v1403 = vxor.u32 %v1395, 2147483648
    %v1404 = vmul.f32 %v1401, 1.442695
    %v1405 = vpow.pop %v1404
    %v1406 = vmul.f32 %v1402, 1.442695
    %v1407 = vpow.pop %v1406
    %v1408 = vmul.f32 %v1403, 1.442695
    %v1409 = vpow.pop %v1408
    %v1410 = vadd.f32 %v1405, 1.0
    %v1411 = vadd.f32 %v1407, 1.0
    %v1412 = vadd.f32 %v1409, 1.0
    %v1413 = vrcp.pop %v1410
    %v1414 = vmul.f32 1.0, %v1413
    %v1415 = vrcp.pop %v1411
    %v1416 = vmul.f32 1.0, %v1415
    %v1417 = vrcp.pop %v1412
    %v1418 = vmul.f32 1.0, %v1417
    %v1419 = vtanh.pop %v1397
    %v1420 = vmul.f32 %v1416, %v1190
    %v1421 = vmul.f32 %v1414, %v1419
    %v1422 = vadd.f32 %v1420, %v1421
    %v1423 = vtanh.pop %v1422
    %v1424 = vmul.f32 %v1418, %v1423
    %v1425 = vpack.c.bf16 %v1424, %v1424
    %1426 = vst [vmem:[#allocation3 + $0x4] sm:$0xf] %v1425
    %v1427 = vxor.u32 %v1307, 2147483648
    %v1428 = vxor.u32 %v1308, 2147483648
    %v1429 = vxor.u32 %v1309, 2147483648
    %v1430 = vmul.f32 %v1427, 1.442695
    %v1431 = vpow.pop %v1430
    %v1432 = vmul.f32 %v1428, 1.442695
    %v1433 = vpow.pop %v1432
    %v1434 = vmul.f32 %v1429, 1.442695
    %v1435 = vpow.pop %v1434
    %v1436 = vadd.f32 %v1431, 1.0
    %v1437 = vadd.f32 %v1433, 1.0
    %v1438 = vadd.f32 %v1435, 1.0
    %v1439 = vrcp.pop %v1436
    %v1440 = vmul.f32 1.0, %v1439
    %v1441 = vrcp.pop %v1437
    %v1442 = vmul.f32 1.0, %v1441
    %v1443 = vrcp.pop %v1438
    %v1444 = vmul.f32 1.0, %v1443
    %v1445 = vtanh.pop %v1310
    %v1446 = vmul.f32 %v1442, %v1216
    %v1447 = vmul.f32 %v1440, %v1445
    %v1448 = vadd.f32 %v1446, %v1447
    %v1449 = vtanh.pop %v1448
    %v1450 = vmul.f32 %v1444, %v1449
    %v1451 = vpack.c.bf16 %v1450, %v1450
    %1452 = vst [vmem:[#allocation3] sm:$0xf] %v1451
    %v1453 = vld [vmem:[#allocation2 + $0x60] sm:$0xff]
    %v1454 = vld [vmem:[#allocation2 + $0x68] sm:$0xff]
    %v1455 = vld [vmem:[#allocation2 + $0x70] sm:$0xff]
    %v1456 = vld [vmem:[#allocation2 + $0x78] sm:$0xff]
    %1457 = vmatprep.subr.bf16.mxu0 %v610
    %1458 = vmatpush1.bf16.msra.mxu0 %v609
    %1459 = vmatprep.subr.bf16.mxu0 %v614
    %1460 = vmatpush1.bf16.msra.mxu0 %v613
    %1461 = vmatprep.subr.bf16.mxu0 %v618
    %1462 = vmatpush1.bf16.msra.mxu0 %v617
    %1463 = vmatprep.subr.bf16.mxu0 %v622
    %1464 = vmatpush1.bf16.msra.mxu0 %v621
    %1465 = vmatprep.subr.bf16.mxu0 %v626
    %1466 = vmatpush1.bf16.msra.mxu0 %v625
    %1467 = vmatprep.subr.bf16.mxu0 %v630
    %1468 = vmatpush1.bf16.msra.mxu0 %v629
    %1469 = vmatprep.subr.bf16.mxu0 %v634
    %1470 = vmatpush1.bf16.msra.mxu0 %v633
    %1471 = vmatprep.subr.bf16.mxu0 %v638
    %1472 = vmatpush1.bf16.msra.mxu0 %v637
    %1473 = vmatprep.subr.bf16.mxu0 0
    %1474 = vmatpush1.bf16.msra.mxu0 0
    %1475 = vmatprep.subr.bf16.mxu0 0
    %1476 = vmatpush1.bf16.msra.mxu0 0
    %1477 = vmatprep.subr.bf16.mxu0 0
    %1478 = vmatpush1.bf16.msra.mxu0 0
    %1479 = vmatprep.subr.bf16.mxu0 0
    %1480 = vmatpush1.bf16.msra.mxu0 0
    %1481 = vmatprep.subr.bf16.mxu0 0
    %1482 = vmatpush1.bf16.msra.mxu0 0
    %1483 = vmatprep.subr.bf16.mxu0 0
    %1484 = vmatpush1.bf16.msra.mxu0 0
    %1485 = vmatprep.subr.bf16.mxu0 0
    %1486 = vmatpush1.bf16.msra.mxu0 0
    %1487 = vmatprep.subr.bf16.mxu0 0
    %1488 = vmatpush1.bf16.msra.mxu0 0
    %1489 = vmatprep.mubr.bf16.mxu0 0
    %1490 = vmatmul.mubr.bf16.gmra.mrb[0].mxu0 %v1451
    %v1491 = vpop.f32.mrb[0].mxu0
    %v1492 = vadd.f32 0.0, %v1491
    %v1493 = vpop.f32.mrb[0].mxu0
    %v1494 = vadd.f32 0.0, %v1493
    %v1495 = vpop.f32.mrb[0].mxu0
    %v1496 = vpop.f32.mrb[0].mxu0
    %1497 = vdwg.mxu0
    %1498 = vmatprep.subr.bf16.mxu0 %v612
    %1499 = vmatpush1.bf16.msra.mxu0 %v611
    %1500 = vmatprep.subr.bf16.mxu0 %v616
    %1501 = vmatpush1.bf16.msra.mxu0 %v615
    %1502 = vmatprep.subr.bf16.mxu0 %v620
    %1503 = vmatpush1.bf16.msra.mxu0 %v619
    %1504 = vmatprep.subr.bf16.mxu0 %v624
    %1505 = vmatpush1.bf16.msra.mxu0 %v623
    %1506 = vmatprep.subr.bf16.mxu0 %v628
    %1507 = vmatpush1.bf16.msra.mxu0 %v627
    %1508 = vmatprep.subr.bf16.mxu0 %v632
    %1509 = vmatpush1.bf16.msra.mxu0 %v631
    %1510 = vmatprep.subr.bf16.mxu0 %v636
    %1511 = vmatpush1.bf16.msra.mxu0 %v635
    %1512 = vmatprep.subr.bf16.mxu0 %v640
    %1513 = vmatpush1.bf16.msra.mxu0 %v639
    %1514 = vmatprep.subr.bf16.mxu0 0
    %1515 = vmatpush1.bf16.msra.mxu0 0
    %1516 = vmatprep.subr.bf16.mxu0 0
    %1517 = vmatpush1.bf16.msra.mxu0 0
    %1518 = vmatprep.subr.bf16.mxu0 0
    %1519 = vmatpush1.bf16.msra.mxu0 0
    %1520 = vmatprep.subr.bf16.mxu0 0
    %1521 = vmatpush1.bf16.msra.mxu0 0
    %1522 = vmatprep.subr.bf16.mxu0 0
    %1523 = vmatpush1.bf16.msra.mxu0 0
    %1524 = vmatprep.subr.bf16.mxu0 0
    %1525 = vmatpush1.bf16.msra.mxu0 0
    %1526 = vmatprep.subr.bf16.mxu0 0
    %1527 = vmatpush1.bf16.msra.mxu0 0
    %1528 = vmatprep.subr.bf16.mxu0 0
    %1529 = vmatpush1.bf16.msra.mxu0 0
    %1530 = vmatprep.mubr.bf16.mxu0 0
    %1531 = vmatmul.mubr.bf16.gmra.mrb[0].mxu0 %v1451
    %v1532 = vpop.f32.mrb[0].mxu0
    %v1533 = vadd.f32 0.0, %v1532
    %v1534 = vpop.f32.mrb[0].mxu0
    %v1535 = vadd.f32 0.0, %v1534
    %v1536 = vpop.f32.mrb[0].mxu0
    %v1537 = vpop.f32.mrb[0].mxu0
    %1538 = vdwg.mxu0
    %v1539 = vadd.f32 %v1453, %v1492
    %v1540 = vadd.f32 %v1454, %v1494
    %v1541 = vadd.f32 %v1455, %v1533
    %v1542 = vadd.f32 %v1456, %v1535
    %v1543 = vld [vmem:[#allocation3] sm:$0xff]
    %v1545 = vunpack.c.l.b16 %v1543
    %v1546 = vunpack.c.h.b16 %v1543
    %v1547 = vpack.c.b16 %v1545, %v1545
    %v1548 = vpack.c.b16 %v1546, %v1546
    %1551 = vmatprep.subr.bf16.mxu0 %v960
    %1552 = vmatpush1.bf16.msra.mxu0 %v959
    %1553 = vmatprep.subr.bf16.mxu0 %v964
    %1554 = vmatpush1.bf16.msra.mxu0 %v963
    %1555 = vmatprep.subr.bf16.mxu0 %v968
    %1556 = vmatpush1.bf16.msra.mxu0 %v967
    %1557 = vmatprep.subr.bf16.mxu0 %v972
    %1558 = vmatpush1.bf16.msra.mxu0 %v971
    %1559 = vmatprep.subr.bf16.mxu0 %v976
    %1560 = vmatpush1.bf16.msra.mxu0 %v975
    %1561 = vmatprep.subr.bf16.mxu0 %v980
    %1562 = vmatpush1.bf16.msra.mxu0 %v979
    %1563 = vmatprep.subr.bf16.mxu0 %v984
    %1564 = vmatpush1.bf16.msra.mxu0 %v983
    %1565 = vmatprep.subr.bf16.mxu0 %v988
    %1566 = vmatpush1.bf16.msra.mxu0 %v987
    %1567 = vmatprep.subr.bf16.mxu0 %v992
    %1568 = vmatpush1.bf16.msra.mxu0 %v991
    %1569 = vmatprep.subr.bf16.mxu0 %v996
    %1570 = vmatpush1.bf16.msra.mxu0 %v995
    %1571 = vmatprep.subr.bf16.mxu0 %v1000
    %1572 = vmatpush1.bf16.msra.mxu0 %v999
    %1573 = vmatprep.subr.bf16.mxu0 %v1004
    %1574 = vmatpush1.bf16.msra.mxu0 %v1003
    %1575 = vmatprep.subr.bf16.mxu0 %v1008
    %1576 = vmatpush1.bf16.msra.mxu0 %v1007
    %1577 = vmatprep.subr.bf16.mxu0 %v1012
    %1578 = vmatpush1.bf16.msra.mxu0 %v1011
    %1579 = vmatprep.subr.bf16.mxu0 %v1016
    %1580 = vmatpush1.bf16.msra.mxu0 %v1015
    %1581 = vmatprep.subr.bf16.mxu0 %v1020
    %1582 = vmatpush1.bf16.msra.mxu0 %v1019
    %1583 = vmatprep.mubr.bf16.mxu0 %v1548
    %1584 = vmatmul.mubr.bf16.gmra.mrb[0].mxu0 %v1547
    %v1585 = vpop.f32.mrb[0].mxu0
    %v1586 = vadd.f32 %v461, %v1585
    %v1587 = vpop.f32.mrb[0].mxu0
    %v1588 = vadd.f32 %v465, %v1587
    %v1589 = vpop.f32.mrb[0].mxu0
    %v1590 = vpop.f32.mrb[0].mxu0
    %1591 = vdwg.mxu0
    %1592 = vmatprep.subr.bf16.mxu0 %v962
    %1593 = vmatpush1.bf16.msra.mxu0 %v961
    %1594 = vmatprep.subr.bf16.mxu0 %v966
    %1595 = vmatpush1.bf16.msra.mxu0 %v965
    %1596 = vmatprep.subr.bf16.mxu0 %v970
    %1597 = vmatpush1.bf16.msra.mxu0 %v969
    %1598 = vmatprep.subr.bf16.mxu0 %v974
    %1599 = vmatpush1.bf16.msra.mxu0 %v973
    %1600 = vmatprep.subr.bf16.mxu0 %v978
    %1601 = vmatpush1.bf16.msra.mxu0 %v977
    %1602 = vmatprep.subr.bf16.mxu0 %v982
    %1603 = vmatpush1.bf16.msra.mxu0 %v981
    %1604 = vmatprep.subr.bf16.mxu0 %v986
    %1605 = vmatpush1.bf16.msra.mxu0 %v985
    %1606 = vmatprep.subr.bf16.mxu0 %v990
    %1607 = vmatpush1.bf16.msra.mxu0 %v989
    %1608 = vmatprep.subr.bf16.mxu0 %v994
    %1609 = vmatpush1.bf16.msra.mxu0 %v993
    %1610 = vmatprep.subr.bf16.mxu0 %v998
    %1611 = vmatpush1.bf16.msra.mxu0 %v997
    %1612 = vmatprep.subr.bf16.mxu0 %v1002
    %1613 = vmatpush1.bf16.msra.mxu0 %v1001
    %1614 = vmatprep.subr.bf16.mxu0 %v1006
    %1615 = vmatpush1.bf16.msra.mxu0 %v1005
    %1616 = vmatprep.subr.bf16.mxu0 %v1010
    %1617 = vmatpush1.bf16.msra.mxu0 %v1009
    %1618 = vmatprep.subr.bf16.mxu0 %v1014
    %1619 = vmatpush1.bf16.msra.mxu0 %v1013
    %1620 = vmatprep.subr.bf16.mxu0 %v1018
    %1621 = vmatpush1.bf16.msra.mxu0 %v1017
    %1622 = vmatprep.subr.bf16.mxu0 %v1022
    %1623 = vmatpush1.bf16.msra.mxu0 %v1021
    %1624 = vmatprep.mubr.bf16.mxu0 %v1548
    %1625 = vmatmul.mubr.bf16.gmra.mrb[0].mxu0 %v1547
    %v1626 = vpop.f32.mrb[0].mxu0
    %v1627 = vadd.f32 %v469, %v1626
    %v1628 = vpop.f32.mrb[0].mxu0
    %v1629 = vadd.f32 %v473, %v1628
    %v1630 = vpop.f32.mrb[0].mxu0
    %v1631 = vpop.f32.mrb[0].mxu0
    %1632 = vdwg.mxu0
    %v1633 = vxor.u32 %v1586, 2147483648
    %v1634 = vxor.u32 %v1588, 2147483648
    %v1635 = vxor.u32 %v1627, 2147483648
    %v1636 = vmul.f32 %v1633, 1.442695
    %v1637 = vpow.pop %v1636
    %v1638 = vmul.f32 %v1634, 1.442695
    %v1639 = vpow.pop %v1638
    %v1640 = vmul.f32 %v1635, 1.442695
    %v1641 = vpow.pop %v1640
    %v1642 = vadd.f32 %v1637, 1.0
    %v1643 = vadd.f32 %v1639, 1.0
    %v1644 = vadd.f32 %v1641, 1.0
    %v1645 = vrcp.pop %v1642
    %v1646 = vmul.f32 1.0, %v1645
    %v1647 = vrcp.pop %v1643
    %v1648 = vmul.f32 1.0, %v1647
    %v1649 = vrcp.pop %v1644
    %v1650 = vmul.f32 1.0, %v1649
    %v1651 = vtanh.pop %v1629
    %v1652 = vmul.f32 %v1648, %v1422
    %v1653 = vmul.f32 %v1646, %v1651
    %v1654 = vadd.f32 %v1652, %v1653
    %v1655 = vtanh.pop %v1654
    %v1656 = vmul.f32 %v1650, %v1655
    %v1657 = vpack.c.bf16 %v1656, %v1656
    %1658 = vst [vmem:[#allocation3 + $0x4] sm:$0xf] %v1657
    %v1659 = vxor.u32 %v1539, 2147483648
    %v1660 = vxor.u32 %v1540, 2147483648
    %v1661 = vxor.u32 %v1541, 2147483648
    %v1662 = vmul.f32 %v1659, 1.442695
    %v1663 = vpow.pop %v1662
    %v1664 = vmul.f32 %v1660, 1.442695
    %v1665 = vpow.pop %v1664
    %v1666 = vmul.f32 %v1661, 1.442695
    %v1667 = vpow.pop %v1666
    %v1668 = vadd.f32 %v1663, 1.0
    %v1669 = vadd.f32 %v1665, 1.0
    %v1670 = vadd.f32 %v1667, 1.0
    %v1671 = vrcp.pop %v1668
    %v1672 = vmul.f32 1.0, %v1671
    %v1673 = vrcp.pop %v1669
    %v1674 = vmul.f32 1.0, %v1673
    %v1675 = vrcp.pop %v1670
    %v1676 = vmul.f32 1.0, %v1675
    %v1677 = vtanh.pop %v1542
    %v1678 = vmul.f32 %v1674, %v1448
    %v1679 = vmul.f32 %v1672, %v1677
    %v1680 = vadd.f32 %v1678, %v1679
    %v1681 = vtanh.pop %v1680
    %v1682 = vmul.f32 %v1676, %v1681
    %v1683 = vpack.c.bf16 %v1682, %v1682
    %1684 = vst [vmem:[#allocation3] sm:$0xf] %v1683
    %v1685 = vld [vmem:[#allocation2 + $0x80] sm:$0xff]
    %v1686 = vld [vmem:[#allocation2 + $0x88] sm:$0xff]
    %v1687 = vld [vmem:[#allocation2 + $0x90] sm:$0xff]
    %v1688 = vld [vmem:[#allocation2 + $0x98] sm:$0xff]
    %1689 = vmatprep.subr.bf16.mxu0 %v610
    %1690 = vmatpush1.bf16.msra.mxu0 %v609
    %1691 = vmatprep.subr.bf16.mxu0 %v614
    %1692 = vmatpush1.bf16.msra.mxu0 %v613
    %1693 = vmatprep.subr.bf16.mxu0 %v618
    %1694 = vmatpush1.bf16.msra.mxu0 %v617
    %1695 = vmatprep.subr.bf16.mxu0 %v622
    %1696 = vmatpush1.bf16.msra.mxu0 %v621
    %1697 = vmatprep.subr.bf16.mxu0 %v626
    %1698 = vmatpush1.bf16.msra.mxu0 %v625
    %1699 = vmatprep.subr.bf16.mxu0 %v630
    %1700 = vmatpush1.bf16.msra.mxu0 %v629
    %1701 = vmatprep.subr.bf16.mxu0 %v634
    %1702 = vmatpush1.bf16.msra.mxu0 %v633
    %1703 = vmatprep.subr.bf16.mxu0 %v638
    %1704 = vmatpush1.bf16.msra.mxu0 %v637
    %1705 = vmatprep.subr.bf16.mxu0 0
    %1706 = vmatpush1.bf16.msra.mxu0 0
    %1707 = vmatprep.subr.bf16.mxu0 0
    %1708 = vmatpush1.bf16.msra.mxu0 0
    %1709 = vmatprep.subr.bf16.mxu0 0
    %1710 = vmatpush1.bf16.msra.mxu0 0
    %1711 = vmatprep.subr.bf16.mxu0 0
    %1712 = vmatpush1.bf16.msra.mxu0 0
    %1713 = vmatprep.subr.bf16.mxu0 0
    %1714 = vmatpush1.bf16.msra.mxu0 0
    %1715 = vmatprep.subr.bf16.mxu0 0
    %1716 = vmatpush1.bf16.msra.mxu0 0
    %1717 = vmatprep.subr.bf16.mxu0 0
    %1718 = vmatpush1.bf16.msra.mxu0 0
    %1719 = vmatprep.subr.bf16.mxu0 0
    %1720 = vmatpush1.bf16.msra.mxu0 0
    %1721 = vmatprep.mubr.bf16.mxu0 0
    %1722 = vmatmul.mubr.bf16.gmra.mrb[0].mxu0 %v1683
    %v1723 = vpop.f32.mrb[0].mxu0
    %v1724 = vadd.f32 0.0, %v1723
    %v1725 = vpop.f32.mrb[0].mxu0
    %v1726 = vadd.f32 0.0, %v1725
    %v1727 = vpop.f32.mrb[0].mxu0
    %v1728 = vpop.f32.mrb[0].mxu0
    %1729 = vdwg.mxu0
    %1730 = vmatprep.subr.bf16.mxu0 %v612
    %1731 = vmatpush1.bf16.msra.mxu0 %v611
    %1732 = vmatprep.subr.bf16.mxu0 %v616
    %1733 = vmatpush1.bf16.msra.mxu0 %v615
    %1734 = vmatprep.subr.bf16.mxu0 %v620
    %1735 = vmatpush1.bf16.msra.mxu0 %v619
    %1736 = vmatprep.subr.bf16.mxu0 %v624
    %1737 = vmatpush1.bf16.msra.mxu0 %v623
    %1738 = vmatprep.subr.bf16.mxu0 %v628
    %1739 = vmatpush1.bf16.msra.mxu0 %v627
    %1740 = vmatprep.subr.bf16.mxu0 %v632
    %1741 = vmatpush1.bf16.msra.mxu0 %v631
    %1742 = vmatprep.subr.bf16.mxu0 %v636
    %1743 = vmatpush1.bf16.msra.mxu0 %v635
    %1744 = vmatprep.subr.bf16.mxu0 %v640
    %1745 = vmatpush1.bf16.msra.mxu0 %v639
    %1746 = vmatprep.subr.bf16.mxu0 0
    %1747 = vmatpush1.bf16.msra.mxu0 0
    %1748 = vmatprep.subr.bf16.mxu0 0
    %1749 = vmatpush1.bf16.msra.mxu0 0
    %1750 = vmatprep.subr.bf16.mxu0 0
    %1751 = vmatpush1.bf16.msra.mxu0 0
    %1752 = vmatprep.subr.bf16.mxu0 0
    %1753 = vmatpush1.bf16.msra.mxu0 0
    %1754 = vmatprep.subr.bf16.mxu0 0
    %1755 = vmatpush1.bf16.msra.mxu0 0
    %1756 = vmatprep.subr.bf16.mxu0 0
    %1757 = vmatpush1.bf16.msra.mxu0 0
    %1758 = vmatprep.subr.bf16.mxu0 0
    %1759 = vmatpush1.bf16.msra.mxu0 0
    %1760 = vmatprep.subr.bf16.mxu0 0
    %1761 = vmatpush1.bf16.msra.mxu0 0
    %1762 = vmatprep.mubr.bf16.mxu0 0
    %1763 = vmatmul.mubr.bf16.gmra.mrb[0].mxu0 %v1683
    %v1764 = vpop.f32.mrb[0].mxu0
    %v1765 = vadd.f32 0.0, %v1764
    %v1766 = vpop.f32.mrb[0].mxu0
    %v1767 = vadd.f32 0.0, %v1766
    %v1768 = vpop.f32.mrb[0].mxu0
    %v1769 = vpop.f32.mrb[0].mxu0
    %1770 = vdwg.mxu0
    %v1771 = vadd.f32 %v1685, %v1724
    %v1772 = vadd.f32 %v1686, %v1726
    %v1773 = vadd.f32 %v1687, %v1765
    %v1774 = vadd.f32 %v1688, %v1767
    %v1775 = vld [vmem:[#allocation3] sm:$0xff]
    %v1777 = vunpack.c.l.b16 %v1775
    %v1778 = vunpack.c.h.b16 %v1775
    %v1779 = vpack.c.b16 %v1777, %v1777
    %v1780 = vpack.c.b16 %v1778, %v1778
    %1783 = vmatprep.subr.bf16.mxu0 %v960
    %1784 = vmatpush1.bf16.msra.mxu0 %v959
    %1785 = vmatprep.subr.bf16.mxu0 %v964
    %1786 = vmatpush1.bf16.msra.mxu0 %v963
    %1787 = vmatprep.subr.bf16.mxu0 %v968
    %1788 = vmatpush1.bf16.msra.mxu0 %v967
    %1789 = vmatprep.subr.bf16.mxu0 %v972
    %1790 = vmatpush1.bf16.msra.mxu0 %v971
    %1791 = vmatprep.subr.bf16.mxu0 %v976
    %1792 = vmatpush1.bf16.msra.mxu0 %v975
    %1793 = vmatprep.subr.bf16.mxu0 %v980
    %1794 = vmatpush1.bf16.msra.mxu0 %v979
    %1795 = vmatprep.subr.bf16.mxu0 %v984
    %1796 = vmatpush1.bf16.msra.mxu0 %v983
    %1797 = vmatprep.subr.bf16.mxu0 %v988
    %1798 = vmatpush1.bf16.msra.mxu0 %v987
    %1799 = vmatprep.subr.bf16.mxu0 %v992
    %1800 = vmatpush1.bf16.msra.mxu0 %v991
    %1801 = vmatprep.subr.bf16.mxu0 %v996
    %1802 = vmatpush1.bf16.msra.mxu0 %v995
    %1803 = vmatprep.subr.bf16.mxu0 %v1000
    %1804 = vmatpush1.bf16.msra.mxu0 %v999
    %1805 = vmatprep.subr.bf16.mxu0 %v1004
    %1806 = vmatpush1.bf16.msra.mxu0 %v1003
    %1807 = vmatprep.subr.bf16.mxu0 %v1008
    %1808 = vmatpush1.bf16.msra.mxu0 %v1007
    %1809 = vmatprep.subr.bf16.mxu0 %v1012
    %1810 = vmatpush1.bf16.msra.mxu0 %v1011
    %1811 = vmatprep.subr.bf16.mxu0 %v1016
    %1812 = vmatpush1.bf16.msra.mxu0 %v1015
    %1813 = vmatprep.subr.bf16.mxu0 %v1020
    %1814 = vmatpush1.bf16.msra.mxu0 %v1019
    %1815 = vmatprep.mubr.bf16.mxu0 %v1780
    %1816 = vmatmul.mubr.bf16.gmra.mrb[0].mxu0 %v1779
    %v1817 = vpop.f32.mrb[0].mxu0
    %v1818 = vadd.f32 %v461, %v1817
    %v1819 = vpop.f32.mrb[0].mxu0
    %v1820 = vadd.f32 %v465, %v1819
    %v1821 = vpop.f32.mrb[0].mxu0
    %v1822 = vpop.f32.mrb[0].mxu0
    %1823 = vdwg.mxu0
    %1824 = vmatprep.subr.bf16.mxu0 %v962
    %1825 = vmatpush1.bf16.msra.mxu0 %v961
    %1826 = vmatprep.subr.bf16.mxu0 %v966
    %1827 = vmatpush1.bf16.msra.mxu0 %v965
    %1828 = vmatprep.subr.bf16.mxu0 %v970
    %1829 = vmatpush1.bf16.msra.mxu0 %v969
    %1830 = vmatprep.subr.bf16.mxu0 %v974
    %1831 = vmatpush1.bf16.msra.mxu0 %v973
    %1832 = vmatprep.subr.bf16.mxu0 %v978
    %1833 = vmatpush1.bf16.msra.mxu0 %v977
    %1834 = vmatprep.subr.bf16.mxu0 %v982
    %1835 = vmatpush1.bf16.msra.mxu0 %v981
    %1836 = vmatprep.subr.bf16.mxu0 %v986
    %1837 = vmatpush1.bf16.msra.mxu0 %v985
    %1838 = vmatprep.subr.bf16.mxu0 %v990
    %1839 = vmatpush1.bf16.msra.mxu0 %v989
    %1840 = vmatprep.subr.bf16.mxu0 %v994
    %1841 = vmatpush1.bf16.msra.mxu0 %v993
    %1842 = vmatprep.subr.bf16.mxu0 %v998
    %1843 = vmatpush1.bf16.msra.mxu0 %v997
    %1844 = vmatprep.subr.bf16.mxu0 %v1002
    %1845 = vmatpush1.bf16.msra.mxu0 %v1001
    %1846 = vmatprep.subr.bf16.mxu0 %v1006
    %1847 = vmatpush1.bf16.msra.mxu0 %v1005
    %1848 = vmatprep.subr.bf16.mxu0 %v1010
    %1849 = vmatpush1.bf16.msra.mxu0 %v1009
    %1850 = vmatprep.subr.bf16.mxu0 %v1014
    %1851 = vmatpush1.bf16.msra.mxu0 %v1013
    %1852 = vmatprep.subr.bf16.mxu0 %v1018
    %1853 = vmatpush1.bf16.msra.mxu0 %v1017
    %1854 = vmatprep.subr.bf16.mxu0 %v1022
    %1855 = vmatpush1.bf16.msra.mxu0 %v1021
    %1856 = vmatprep.mubr.bf16.mxu0 %v1780
    %1857 = vmatmul.mubr.bf16.gmra.mrb[0].mxu0 %v1779
    %v1858 = vpop.f32.mrb[0].mxu0
    %v1859 = vadd.f32 %v469, %v1858
    %v1860 = vpop.f32.mrb[0].mxu0
    %v1861 = vadd.f32 %v473, %v1860
    %v1862 = vpop.f32.mrb[0].mxu0
    %v1863 = vpop.f32.mrb[0].mxu0
    %1864 = vdwg.mxu0
    %v1865 = vxor.u32 %v1818, 2147483648
    %v1866 = vxor.u32 %v1820, 2147483648
    %v1867 = vxor.u32 %v1859, 2147483648
    %v1868 = vmul.f32 %v1865, 1.442695
    %v1869 = vpow.pop %v1868
    %v1870 = vmul.f32 %v1866, 1.442695
    %v1871 = vpow.pop %v1870
    %v1872 = vmul.f32 %v1867, 1.442695
    %v1873 = vpow.pop %v1872
    %v1874 = vadd.f32 %v1869, 1.0
    %v1875 = vadd.f32 %v1871, 1.0
    %v1876 = vadd.f32 %v1873, 1.0
    %v1877 = vrcp.pop %v1874
    %v1878 = vmul.f32 1.0, %v1877
    %v1879 = vrcp.pop %v1875
    %v1880 = vmul.f32 1.0, %v1879
    %v1881 = vrcp.pop %v1876
    %v1882 = vmul.f32 1.0, %v1881
    %v1883 = vtanh.pop %v1861
    %v1884 = vmul.f32 %v1880, %v1654
    %v1885 = vmul.f32 %v1878, %v1883
    %v1886 = vadd.f32 %v1884, %v1885
    %v1887 = vtanh.pop %v1886
    %v1888 = vmul.f32 %v1882, %v1887
    %v1889 = vpack.c.bf16 %v1888, %v1888
    %1890 = vst [vmem:[#allocation3 + $0x4] sm:$0xf] %v1889
    %v1891 = vxor.u32 %v1771, 2147483648
    %v1892 = vxor.u32 %v1772, 2147483648
    %v1893 = vxor.u32 %v1773, 2147483648
    %v1894 = vmul.f32 %v1891, 1.442695
    %v1895 = vpow.pop %v1894
    %v1896 = vmul.f32 %v1892, 1.442695
    %v1897 = vpow.pop %v1896
    %v1898 = vmul.f32 %v1893, 1.442695
    %v1899 = vpow.pop %v1898
    %v1900 = vadd.f32 %v1895, 1.0
    %v1901 = vadd.f32 %v1897, 1.0
    %v1902 = vadd.f32 %v1899, 1.0
    %v1903 = vrcp.pop %v1900
    %v1904 = vmul.f32 1.0, %v1903
    %v1905 = vrcp.pop %v1901
    %v1906 = vmul.f32 1.0, %v1905
    %v1907 = vrcp.pop %v1902
    %v1908 = vmul.f32 1.0, %v1907
    %v1909 = vtanh.pop %v1774
    %v1910 = vmul.f32 %v1906, %v1680
    %v1911 = vmul.f32 %v1904, %v1909
    %v1912 = vadd.f32 %v1910, %v1911
    %v1913 = vtanh.pop %v1912
    %v1914 = vmul.f32 %v1908, %v1913
    %v1915 = vpack.c.bf16 %v1914, %v1914
    %1916 = vst [vmem:[#allocation3] sm:$0xf] %v1915
    %v1917 = vld [vmem:[#allocation2 + $0xa0] sm:$0xff]
    %v1918 = vld [vmem:[#allocation2 + $0xa8] sm:$0xff]
    %v1919 = vld [vmem:[#allocation2 + $0xb0] sm:$0xff]
    %v1920 = vld [vmem:[#allocation2 + $0xb8] sm:$0xff]
    %1921 = vmatprep.subr.bf16.mxu0 %v610
    %1922 = vmatpush1.bf16.msra.mxu0 %v609
    %1923 = vmatprep.subr.bf16.mxu0 %v614
    %1924 = vmatpush1.bf16.msra.mxu0 %v613
    %1925 = vmatprep.subr.bf16.mxu0 %v618
    %1926 = vmatpush1.bf16.msra.mxu0 %v617
    %1927 = vmatprep.subr.bf16.mxu0 %v622
    %1928 = vmatpush1.bf16.msra.mxu0 %v621
    %1929 = vmatprep.subr.bf16.mxu0 %v626
    %1930 = vmatpush1.bf16.msra.mxu0 %v625
    %1931 = vmatprep.subr.bf16.mxu0 %v630
    %1932 = vmatpush1.bf16.msra.mxu0 %v629
    %1933 = vmatprep.subr.bf16.mxu0 %v634
    %1934 = vmatpush1.bf16.msra.mxu0 %v633
    %1935 = vmatprep.subr.bf16.mxu0 %v638
    %1936 = vmatpush1.bf16.msra.mxu0 %v637
    %1937 = vmatprep.subr.bf16.mxu0 0
    %1938 = vmatpush1.bf16.msra.mxu0 0
    %1939 = vmatprep.subr.bf16.mxu0 0
    %1940 = vmatpush1.bf16.msra.mxu0 0
    %1941 = vmatprep.subr.bf16.mxu0 0
    %1942 = vmatpush1.bf16.msra.mxu0 0
    %1943 = vmatprep.subr.bf16.mxu0 0
    %1944 = vmatpush1.bf16.msra.mxu0 0
    %1945 = vmatprep.subr.bf16.mxu0 0
    %1946 = vmatpush1.bf16.msra.mxu0 0
    %1947 = vmatprep.subr.bf16.mxu0 0
    %1948 = vmatpush1.bf16.msra.mxu0 0
    %1949 = vmatprep.subr.bf16.mxu0 0
    %1950 = vmatpush1.bf16.msra.mxu0 0
    %1951 = vmatprep.subr.bf16.mxu0 0
    %1952 = vmatpush1.bf16.msra.mxu0 0
    %1953 = vmatprep.mubr.bf16.mxu0 0
    %1954 = vmatmul.mubr.bf16.gmra.mrb[0].mxu0 %v1915
    %v1955 = vpop.f32.mrb[0].mxu0
    %v1956 = vadd.f32 0.0, %v1955
    %v1957 = vpop.f32.mrb[0].mxu0
    %v1958 = vadd.f32 0.0, %v1957
    %v1959 = vpop.f32.mrb[0].mxu0
    %v1960 = vpop.f32.mrb[0].mxu0
    %1961 = vdwg.mxu0
    %1962 = vmatprep.subr.bf16.mxu0 %v612
    %1963 = vmatpush1.bf16.msra.mxu0 %v611
    %1964 = vmatprep.subr.bf16.mxu0 %v616
    %1965 = vmatpush1.bf16.msra.mxu0 %v615
    %1966 = vmatprep.subr.bf16.mxu0 %v620
    %1967 = vmatpush1.bf16.msra.mxu0 %v619
    %1968 = vmatprep.subr.bf16.mxu0 %v624
    %1969 = vmatpush1.bf16.msra.mxu0 %v623
    %1970 = vmatprep.subr.bf16.mxu0 %v628
    %1971 = vmatpush1.bf16.msra.mxu0 %v627
    %1972 = vmatprep.subr.bf16.mxu0 %v632
    %1973 = vmatpush1.bf16.msra.mxu0 %v631
    %1974 = vmatprep.subr.bf16.mxu0 %v636
    %1975 = vmatpush1.bf16.msra.mxu0 %v635
    %1976 = vmatprep.subr.bf16.mxu0 %v640
    %1977 = vmatpush1.bf16.msra.mxu0 %v639
    %1978 = vmatprep.subr.bf16.mxu0 0
    %1979 = vmatpush1.bf16.msra.mxu0 0
    %1980 = vmatprep.subr.bf16.mxu0 0
    %1981 = vmatpush1.bf16.msra.mxu0 0
    %1982 = vmatprep.subr.bf16.mxu0 0
    %1983 = vmatpush1.bf16.msra.mxu0 0
    %1984 = vmatprep.subr.bf16.mxu0 0
    %1985 = vmatpush1.bf16.msra.mxu0 0
    %1986 = vmatprep.subr.bf16.mxu0 0
    %1987 = vmatpush1.bf16.msra.mxu0 0
    %1988 = vmatprep.subr.bf16.mxu0 0
    %1989 = vmatpush1.bf16.msra.mxu0 0
    %1990 = vmatprep.subr.bf16.mxu0 0
    %1991 = vmatpush1.bf16.msra.mxu0 0
    %1992 = vmatprep.subr.bf16.mxu0 0
    %1993 = vmatpush1.bf16.msra.mxu0 0
    %1994 = vmatprep.mubr.bf16.mxu0 0
    %1995 = vmatmul.mubr.bf16.gmra.mrb[0].mxu0 %v1915
    %v1996 = vpop.f32.mrb[0].mxu0
    %v1997 = vadd.f32 0.0, %v1996
    %v1998 = vpop.f32.mrb[0].mxu0
    %v1999 = vadd.f32 0.0, %v1998
    %v2000 = vpop.f32.mrb[0].mxu0
    %v2001 = vpop.f32.mrb[0].mxu0
    %2002 = vdwg.mxu0
    %v2003 = vadd.f32 %v1917, %v1956
    %v2004 = vadd.f32 %v1918, %v1958
    %v2005 = vadd.f32 %v1919, %v1997
    %v2006 = vadd.f32 %v1920, %v1999
    %v2007 = vld [vmem:[#allocation3] sm:$0xff]
    %v2009 = vunpack.c.l.b16 %v2007
    %v2010 = vunpack.c.h.b16 %v2007
    %v2011 = vpack.c.b16 %v2009, %v2009
    %v2012 = vpack.c.b16 %v2010, %v2010
    %2015 = vmatprep.subr.bf16.mxu0 %v960
    %2016 = vmatpush1.bf16.msra.mxu0 %v959
    %2017 = vmatprep.subr.bf16.mxu0 %v964
    %2018 = vmatpush1.bf16.msra.mxu0 %v963
    %2019 = vmatprep.subr.bf16.mxu0 %v968
    %2020 = vmatpush1.bf16.msra.mxu0 %v967
    %2021 = vmatprep.subr.bf16.mxu0 %v972
    %2022 = vmatpush1.bf16.msra.mxu0 %v971
    %2023 = vmatprep.subr.bf16.mxu0 %v976
    %2024 = vmatpush1.bf16.msra.mxu0 %v975
    %2025 = vmatprep.subr.bf16.mxu0 %v980
    %2026 = vmatpush1.bf16.msra.mxu0 %v979
    %2027 = vmatprep.subr.bf16.mxu0 %v984
    %2028 = vmatpush1.bf16.msra.mxu0 %v983
    %2029 = vmatprep.subr.bf16.mxu0 %v988
    %2030 = vmatpush1.bf16.msra.mxu0 %v987
    %2031 = vmatprep.subr.bf16.mxu0 %v992
    %2032 = vmatpush1.bf16.msra.mxu0 %v991
    %2033 = vmatprep.subr.bf16.mxu0 %v996
    %2034 = vmatpush1.bf16.msra.mxu0 %v995
    %2035 = vmatprep.subr.bf16.mxu0 %v1000
    %2036 = vmatpush1.bf16.msra.mxu0 %v999
    %2037 = vmatprep.subr.bf16.mxu0 %v1004
    %2038 = vmatpush1.bf16.msra.mxu0 %v1003
    %2039 = vmatprep.subr.bf16.mxu0 %v1008
    %2040 = vmatpush1.bf16.msra.mxu0 %v1007
    %2041 = vmatprep.subr.bf16.mxu0 %v1012
    %2042 = vmatpush1.bf16.msra.mxu0 %v1011
    %2043 = vmatprep.subr.bf16.mxu0 %v1016
    %2044 = vmatpush1.bf16.msra.mxu0 %v1015
    %2045 = vmatprep.subr.bf16.mxu0 %v1020
    %2046 = vmatpush1.bf16.msra.mxu0 %v1019
    %2047 = vmatprep.mubr.bf16.mxu0 %v2012
    %2048 = vmatmul.mubr.bf16.gmra.mrb[0].mxu0 %v2011
    %v2049 = vpop.f32.mrb[0].mxu0
    %v2050 = vadd.f32 %v461, %v2049
    %v2051 = vpop.f32.mrb[0].mxu0
    %v2052 = vadd.f32 %v465, %v2051
    %v2053 = vpop.f32.mrb[0].mxu0
    %v2054 = vpop.f32.mrb[0].mxu0
    %2055 = vdwg.mxu0
    %2056 = vmatprep.subr.bf16.mxu0 %v962
    %2057 = vmatpush1.bf16.msra.mxu0 %v961
    %2058 = vmatprep.subr.bf16.mxu0 %v966
    %2059 = vmatpush1.bf16.msra.mxu0 %v965
    %2060 = vmatprep.subr.bf16.mxu0 %v970
    %2061 = vmatpush1.bf16.msra.mxu0 %v969
    %2062 = vmatprep.subr.bf16.mxu0 %v974
    %2063 = vmatpush1.bf16.msra.mxu0 %v973
    %2064 = vmatprep.subr.bf16.mxu0 %v978
    %2065 = vmatpush1.bf16.msra.mxu0 %v977
    %2066 = vmatprep.subr.bf16.mxu0 %v982
    %2067 = vmatpush1.bf16.msra.mxu0 %v981
    %2068 = vmatprep.subr.bf16.mxu0 %v986
    %2069 = vmatpush1.bf16.msra.mxu0 %v985
    %2070 = vmatprep.subr.bf16.mxu0 %v990
    %2071 = vmatpush1.bf16.msra.mxu0 %v989
    %2072 = vmatprep.subr.bf16.mxu0 %v994
    %2073 = vmatpush1.bf16.msra.mxu0 %v993
    %2074 = vmatprep.subr.bf16.mxu0 %v998
    %2075 = vmatpush1.bf16.msra.mxu0 %v997
    %2076 = vmatprep.subr.bf16.mxu0 %v1002
    %2077 = vmatpush1.bf16.msra.mxu0 %v1001
    %2078 = vmatprep.subr.bf16.mxu0 %v1006
    %2079 = vmatpush1.bf16.msra.mxu0 %v1005
    %2080 = vmatprep.subr.bf16.mxu0 %v1010
    %2081 = vmatpush1.bf16.msra.mxu0 %v1009
    %2082 = vmatprep.subr.bf16.mxu0 %v1014
    %2083 = vmatpush1.bf16.msra.mxu0 %v1013
    %2084 = vmatprep.subr.bf16.mxu0 %v1018
    %2085 = vmatpush1.bf16.msra.mxu0 %v1017
    %2086 = vmatprep.subr.bf16.mxu0 %v1022
    %2087 = vmatpush1.bf16.msra.mxu0 %v1021
    %2088 = vmatprep.mubr.bf16.mxu0 %v2012
    %2089 = vmatmul.mubr.bf16.gmra.mrb[0].mxu0 %v2011
    %v2090 = vpop.f32.mrb[0].mxu0
    %v2091 = vadd.f32 %v469, %v2090
    %v2092 = vpop.f32.mrb[0].mxu0
    %v2093 = vadd.f32 %v473, %v2092
    %v2094 = vpop.f32.mrb[0].mxu0
    %v2095 = vpop.f32.mrb[0].mxu0
    %2096 = vdwg.mxu0
    %v2097 = vxor.u32 %v2050, 2147483648
    %v2098 = vxor.u32 %v2052, 2147483648
    %v2099 = vxor.u32 %v2091, 2147483648
    %v2100 = vmul.f32 %v2097, 1.442695
    %v2101 = vpow.pop %v2100
    %v2102 = vmul.f32 %v2098, 1.442695
    %v2103 = vpow.pop %v2102
    %v2104 = vmul.f32 %v2099, 1.442695
    %v2105 = vpow.pop %v2104
    %v2106 = vadd.f32 %v2101, 1.0
    %v2107 = vadd.f32 %v2103, 1.0
    %v2108 = vadd.f32 %v2105, 1.0
    %v2109 = vrcp.pop %v2106
    %v2110 = vmul.f32 1.0, %v2109
    %v2111 = vrcp.pop %v2107
    %v2112 = vmul.f32 1.0, %v2111
    %v2113 = vrcp.pop %v2108
    %v2114 = vmul.f32 1.0, %v2113
    %v2115 = vtanh.pop %v2093
    %v2116 = vmul.f32 %v2112, %v1886
    %v2117 = vmul.f32 %v2110, %v2115
    %v2118 = vadd.f32 %v2116, %v2117
    %v2119 = vtanh.pop %v2118
    %v2120 = vmul.f32 %v2114, %v2119
    %v2121 = vpack.c.bf16 %v2120, %v2120
    %2122 = vst [vmem:[#allocation3 + $0x4] sm:$0xf] %v2121
    %v2123 = vxor.u32 %v2003, 2147483648
    %v2124 = vxor.u32 %v2004, 2147483648
    %v2125 = vxor.u32 %v2005, 2147483648
    %v2126 = vmul.f32 %v2123, 1.442695
    %v2127 = vpow.pop %v2126
    %v2128 = vmul.f32 %v2124, 1.442695
    %v2129 = vpow.pop %v2128
    %v2130 = vmul.f32 %v2125, 1.442695
    %v2131 = vpow.pop %v2130
    %v2132 = vadd.f32 %v2127, 1.0
    %v2133 = vadd.f32 %v2129, 1.0
    %v2134 = vadd.f32 %v2131, 1.0
    %v2135 = vrcp.pop %v2132
    %v2136 = vmul.f32 1.0, %v2135
    %v2137 = vrcp.pop %v2133
    %v2138 = vmul.f32 1.0, %v2137
    %v2139 = vrcp.pop %v2134
    %v2140 = vmul.f32 1.0, %v2139
    %v2141 = vtanh.pop %v2006
    %v2142 = vmul.f32 %v2138, %v1912
    %v2143 = vmul.f32 %v2136, %v2141
    %v2144 = vadd.f32 %v2142, %v2143
    %v2145 = vtanh.pop %v2144
    %v2146 = vmul.f32 %v2140, %v2145
    %v2147 = vpack.c.bf16 %v2146, %v2146
    %2148 = vst [vmem:[#allocation3] sm:$0xf] %v2147
    %v2149 = vld [vmem:[#allocation2 + $0xc0] sm:$0xff]
    %v2150 = vld [vmem:[#allocation2 + $0xc8] sm:$0xff]
    %v2151 = vld [vmem:[#allocation2 + $0xd0] sm:$0xff]
    %v2152 = vld [vmem:[#allocation2 + $0xd8] sm:$0xff]
    %2153 = vmatprep.subr.bf16.mxu0 %v610
    %2154 = vmatpush1.bf16.msra.mxu0 %v609
    %2155 = vmatprep.subr.bf16.mxu0 %v614
    %2156 = vmatpush1.bf16.msra.mxu0 %v613
    %2157 = vmatprep.subr.bf16.mxu0 %v618
    %2158 = vmatpush1.bf16.msra.mxu0 %v617
    %2159 = vmatprep.subr.bf16.mxu0 %v622
    %2160 = vmatpush1.bf16.msra.mxu0 %v621
    %2161 = vmatprep.subr.bf16.mxu0 %v626
    %2162 = vmatpush1.bf16.msra.mxu0 %v625
    %2163 = vmatprep.subr.bf16.mxu0 %v630
    %2164 = vmatpush1.bf16.msra.mxu0 %v629
    %2165 = vmatprep.subr.bf16.mxu0 %v634
    %2166 = vmatpush1.bf16.msra.mxu0 %v633
    %2167 = vmatprep.subr.bf16.mxu0 %v638
    %2168 = vmatpush1.bf16.msra.mxu0 %v637
    %2169 = vmatprep.subr.bf16.mxu0 0
    %2170 = vmatpush1.bf16.msra.mxu0 0
    %2171 = vmatprep.subr.bf16.mxu0 0
    %2172 = vmatpush1.bf16.msra.mxu0 0
    %2173 = vmatprep.subr.bf16.mxu0 0
    %2174 = vmatpush1.bf16.msra.mxu0 0
    %2175 = vmatprep.subr.bf16.mxu0 0
    %2176 = vmatpush1.bf16.msra.mxu0 0
    %2177 = vmatprep.subr.bf16.mxu0 0
    %2178 = vmatpush1.bf16.msra.mxu0 0
    %2179 = vmatprep.subr.bf16.mxu0 0
    %2180 = vmatpush1.bf16.msra.mxu0 0
    %2181 = vmatprep.subr.bf16.mxu0 0
    %2182 = vmatpush1.bf16.msra.mxu0 0
    %2183 = vmatprep.subr.bf16.mxu0 0
    %2184 = vmatpush1.bf16.msra.mxu0 0
    %2185 = vmatprep.mubr.bf16.mxu0 0
    %2186 = vmatmul.mubr.bf16.gmra.mrb[0].mxu0 %v2147
    %v2187 = vpop.f32.mrb[0].mxu0
    %v2188 = vadd.f32 0.0, %v2187
    %v2189 = vpop.f32.mrb[0].mxu0
    %v2190 = vadd.f32 0.0, %v2189
    %v2191 = vpop.f32.mrb[0].mxu0
    %v2192 = vpop.f32.mrb[0].mxu0
    %2193 = vdwg.mxu0
    %2194 = vmatprep.subr.bf16.mxu0 %v612
    %2195 = vmatpush1.bf16.msra.mxu0 %v611
    %2196 = vmatprep.subr.bf16.mxu0 %v616
    %2197 = vmatpush1.bf16.msra.mxu0 %v615
    %2198 = vmatprep.subr.bf16.mxu0 %v620
    %2199 = vmatpush1.bf16.msra.mxu0 %v619
    %2200 = vmatprep.subr.bf16.mxu0 %v624
    %2201 = vmatpush1.bf16.msra.mxu0 %v623
    %2202 = vmatprep.subr.bf16.mxu0 %v628
    %2203 = vmatpush1.bf16.msra.mxu0 %v627
    %2204 = vmatprep.subr.bf16.mxu0 %v632
    %2205 = vmatpush1.bf16.msra.mxu0 %v631
    %2206 = vmatprep.subr.bf16.mxu0 %v636
    %2207 = vmatpush1.bf16.msra.mxu0 %v635
    %2208 = vmatprep.subr.bf16.mxu0 %v640
    %2209 = vmatpush1.bf16.msra.mxu0 %v639
    %2210 = vmatprep.subr.bf16.mxu0 0
    %2211 = vmatpush1.bf16.msra.mxu0 0
    %2212 = vmatprep.subr.bf16.mxu0 0
    %2213 = vmatpush1.bf16.msra.mxu0 0
    %2214 = vmatprep.subr.bf16.mxu0 0
    %2215 = vmatpush1.bf16.msra.mxu0 0
    %2216 = vmatprep.subr.bf16.mxu0 0
    %2217 = vmatpush1.bf16.msra.mxu0 0
    %2218 = vmatprep.subr.bf16.mxu0 0
    %2219 = vmatpush1.bf16.msra.mxu0 0
    %2220 = vmatprep.subr.bf16.mxu0 0
    %2221 = vmatpush1.bf16.msra.mxu0 0
    %2222 = vmatprep.subr.bf16.mxu0 0
    %2223 = vmatpush1.bf16.msra.mxu0 0
    %2224 = vmatprep.subr.bf16.mxu0 0
    %2225 = vmatpush1.bf16.msra.mxu0 0
    %2226 = vmatprep.mubr.bf16.mxu0 0
    %2227 = vmatmul.mubr.bf16.gmra.mrb[0].mxu0 %v2147
    %v2228 = vpop.f32.mrb[0].mxu0
    %v2229 = vadd.f32 0.0, %v2228
    %v2230 = vpop.f32.mrb[0].mxu0
    %v2231 = vadd.f32 0.0, %v2230
    %v2232 = vpop.f32.mrb[0].mxu0
    %v2233 = vpop.f32.mrb[0].mxu0
    %2234 = vdwg.mxu0
    %v2235 = vadd.f32 %v2149, %v2188
    %v2236 = vadd.f32 %v2150, %v2190
    %v2237 = vadd.f32 %v2151, %v2229
    %v2238 = vadd.f32 %v2152, %v2231
    %v2239 = vld [vmem:[#allocation3] sm:$0xff]
    %v2241 = vunpack.c.l.b16 %v2239
    %v2242 = vunpack.c.h.b16 %v2239
    %v2243 = vpack.c.b16 %v2241, %v2241
    %v2244 = vpack.c.b16 %v2242, %v2242
    %2247 = vmatprep.subr.bf16.mxu0 %v960
    %2248 = vmatpush1.bf16.msra.mxu0 %v959
    %2249 = vmatprep.subr.bf16.mxu0 %v964
    %2250 = vmatpush1.bf16.msra.mxu0 %v963
    %2251 = vmatprep.subr.bf16.mxu0 %v968
    %2252 = vmatpush1.bf16.msra.mxu0 %v967
    %2253 = vmatprep.subr.bf16.mxu0 %v972
    %2254 = vmatpush1.bf16.msra.mxu0 %v971
    %2255 = vmatprep.subr.bf16.mxu0 %v976
    %2256 = vmatpush1.bf16.msra.mxu0 %v975
    %2257 = vmatprep.subr.bf16.mxu0 %v980
    %2258 = vmatpush1.bf16.msra.mxu0 %v979
    %2259 = vmatprep.subr.bf16.mxu0 %v984
    %2260 = vmatpush1.bf16.msra.mxu0 %v983
    %2261 = vmatprep.subr.bf16.mxu0 %v988
    %2262 = vmatpush1.bf16.msra.mxu0 %v987
    %2263 = vmatprep.subr.bf16.mxu0 %v992
    %2264 = vmatpush1.bf16.msra.mxu0 %v991
    %2265 = vmatprep.subr.bf16.mxu0 %v996
    %2266 = vmatpush1.bf16.msra.mxu0 %v995
    %2267 = vmatprep.subr.bf16.mxu0 %v1000
    %2268 = vmatpush1.bf16.msra.mxu0 %v999
    %2269 = vmatprep.subr.bf16.mxu0 %v1004
    %2270 = vmatpush1.bf16.msra.mxu0 %v1003
    %2271 = vmatprep.subr.bf16.mxu0 %v1008
    %2272 = vmatpush1.bf16.msra.mxu0 %v1007
    %2273 = vmatprep.subr.bf16.mxu0 %v1012
    %2274 = vmatpush1.bf16.msra.mxu0 %v1011
    %2275 = vmatprep.subr.bf16.mxu0 %v1016
    %2276 = vmatpush1.bf16.msra.mxu0 %v1015
    %2277 = vmatprep.subr.bf16.mxu0 %v1020
    %2278 = vmatpush1.bf16.msra.mxu0 %v1019
    %2279 = vmatprep.mubr.bf16.mxu0 %v2244
    %2280 = vmatmul.mubr.bf16.gmra.mrb[0].mxu0 %v2243
    %v2281 = vpop.f32.mrb[0].mxu0
    %v2282 = vadd.f32 %v461, %v2281
    %v2283 = vpop.f32.mrb[0].mxu0
    %v2284 = vadd.f32 %v465, %v2283
    %v2285 = vpop.f32.mrb[0].mxu0
    %v2286 = vpop.f32.mrb[0].mxu0
    %2287 = vdwg.mxu0
    %2288 = vmatprep.subr.bf16.mxu0 %v962
    %2289 = vmatpush1.bf16.msra.mxu0 %v961
    %2290 = vmatprep.subr.bf16.mxu0 %v966
    %2291 = vmatpush1.bf16.msra.mxu0 %v965
    %2292 = vmatprep.subr.bf16.mxu0 %v970
    %2293 = vmatpush1.bf16.msra.mxu0 %v969
    %2294 = vmatprep.subr.bf16.mxu0 %v974
    %2295 = vmatpush1.bf16.msra.mxu0 %v973
    %2296 = vmatprep.subr.bf16.mxu0 %v978
    %2297 = vmatpush1.bf16.msra.mxu0 %v977
    %2298 = vmatprep.subr.bf16.mxu0 %v982
    %2299 = vmatpush1.bf16.msra.mxu0 %v981
    %2300 = vmatprep.subr.bf16.mxu0 %v986
    %2301 = vmatpush1.bf16.msra.mxu0 %v985
    %2302 = vmatprep.subr.bf16.mxu0 %v990
    %2303 = vmatpush1.bf16.msra.mxu0 %v989
    %2304 = vmatprep.subr.bf16.mxu0 %v994
    %2305 = vmatpush1.bf16.msra.mxu0 %v993
    %2306 = vmatprep.subr.bf16.mxu0 %v998
    %2307 = vmatpush1.bf16.msra.mxu0 %v997
    %2308 = vmatprep.subr.bf16.mxu0 %v1002
    %2309 = vmatpush1.bf16.msra.mxu0 %v1001
    %2310 = vmatprep.subr.bf16.mxu0 %v1006
    %2311 = vmatpush1.bf16.msra.mxu0 %v1005
    %2312 = vmatprep.subr.bf16.mxu0 %v1010
    %2313 = vmatpush1.bf16.msra.mxu0 %v1009
    %2314 = vmatprep.subr.bf16.mxu0 %v1014
    %2315 = vmatpush1.bf16.msra.mxu0 %v1013
    %2316 = vmatprep.subr.bf16.mxu0 %v1018
    %2317 = vmatpush1.bf16.msra.mxu0 %v1017
    %2318 = vmatprep.subr.bf16.mxu0 %v1022
    %2319 = vmatpush1.bf16.msra.mxu0 %v1021
    %2320 = vmatprep.mubr.bf16.mxu0 %v2244
    %2321 = vmatmul.mubr.bf16.gmra.mrb[0].mxu0 %v2243
    %v2322 = vpop.f32.mrb[0].mxu0
    %v2323 = vadd.f32 %v469, %v2322
    %v2324 = vpop.f32.mrb[0].mxu0
    %v2325 = vadd.f32 %v473, %v2324
    %v2326 = vpop.f32.mrb[0].mxu0
    %v2327 = vpop.f32.mrb[0].mxu0
    %2328 = vdwg.mxu0
    %v2329 = vxor.u32 %v2282, 2147483648
    %v2330 = vxor.u32 %v2284, 2147483648
    %v2331 = vxor.u32 %v2323, 2147483648
    %v2332 = vmul.f32 %v2329, 1.442695
    %v2333 = vpow.pop %v2332
    %v2334 = vmul.f32 %v2330, 1.442695
    %v2335 = vpow.pop %v2334
    %v2336 = vmul.f32 %v2331, 1.442695
    %v2337 = vpow.pop %v2336
    %v2338 = vadd.f32 %v2333, 1.0
    %v2339 = vadd.f32 %v2335, 1.0
    %v2340 = vadd.f32 %v2337, 1.0
    %v2341 = vrcp.pop %v2338
    %v2342 = vmul.f32 1.0, %v2341
    %v2343 = vrcp.pop %v2339
    %v2344 = vmul.f32 1.0, %v2343
    %v2345 = vrcp.pop %v2340
    %v2346 = vmul.f32 1.0, %v2345
    %v2347 = vtanh.pop %v2325
    %v2348 = vmul.f32 %v2344, %v2118
    %v2349 = vmul.f32 %v2342, %v2347
    %v2350 = vadd.f32 %v2348, %v2349
    %v2351 = vtanh.pop %v2350
    %v2352 = vmul.f32 %v2346, %v2351
    %v2353 = vpack.c.bf16 %v2352, %v2352
    %2354 = vst [vmem:[#allocation3 + $0x4] sm:$0xf] %v2353
    %v2355 = vxor.u32 %v2235, 2147483648
    %v2356 = vxor.u32 %v2236, 2147483648
    %v2357 = vxor.u32 %v2237, 2147483648
    %v2358 = vmul.f32 %v2355, 1.442695
    %v2359 = vpow.pop %v2358
    %v2360 = vmul.f32 %v2356, 1.442695
    %v2361 = vpow.pop %v2360
    %v2362 = vmul.f32 %v2357, 1.442695
    %v2363 = vpow.pop %v2362
    %v2364 = vadd.f32 %v2359, 1.0
    %v2365 = vadd.f32 %v2361, 1.0
    %v2366 = vadd.f32 %v2363, 1.0
    %v2367 = vrcp.pop %v2364
    %v2368 = vmul.f32 1.0, %v2367
    %v2369 = vrcp.pop %v2365
    %v2370 = vmul.f32 1.0, %v2369
    %v2371 = vrcp.pop %v2366
    %v2372 = vmul.f32 1.0, %v2371
    %v2373 = vtanh.pop %v2238
    %v2374 = vmul.f32 %v2370, %v2144
    %v2375 = vmul.f32 %v2368, %v2373
    %v2376 = vadd.f32 %v2374, %v2375
    %v2377 = vtanh.pop %v2376
    %v2378 = vmul.f32 %v2372, %v2377
    %v2379 = vpack.c.bf16 %v2378, %v2378
    %2380 = vst [vmem:[#allocation3] sm:$0xf] %v2379
    %v2381 = vld [vmem:[#allocation2 + $0xe0] sm:$0xff]
    %v2382 = vld [vmem:[#allocation2 + $0xe8] sm:$0xff]
    %v2383 = vld [vmem:[#allocation2 + $0xf0] sm:$0xff]
    %v2384 = vld [vmem:[#allocation2 + $0xf8] sm:$0xff]
    %2385 = vmatprep.subr.bf16.mxu0 %v610
    %2386 = vmatpush1.bf16.msra.mxu0 %v609
    %2387 = vmatprep.subr.bf16.mxu0 %v614
    %2388 = vmatpush1.bf16.msra.mxu0 %v613
    %2389 = vmatprep.subr.bf16.mxu0 %v618
    %2390 = vmatpush1.bf16.msra.mxu0 %v617
    %2391 = vmatprep.subr.bf16.mxu0 %v622
    %2392 = vmatpush1.bf16.msra.mxu0 %v621
    %2393 = vmatprep.subr.bf16.mxu0 %v626
    %2394 = vmatpush1.bf16.msra.mxu0 %v625
    %2395 = vmatprep.subr.bf16.mxu0 %v630
    %2396 = vmatpush1.bf16.msra.mxu0 %v629
    %2397 = vmatprep.subr.bf16.mxu0 %v634
    %2398 = vmatpush1.bf16.msra.mxu0 %v633
    %2399 = vmatprep.subr.bf16.mxu0 %v638
    %2400 = vmatpush1.bf16.msra.mxu0 %v637
    %2401 = vmatprep.subr.bf16.mxu0 0
    %2402 = vmatpush1.bf16.msra.mxu0 0
    %2403 = vmatprep.subr.bf16.mxu0 0
    %2404 = vmatpush1.bf16.msra.mxu0 0
    %2405 = vmatprep.subr.bf16.mxu0 0
    %2406 = vmatpush1.bf16.msra.mxu0 0
    %2407 = vmatprep.subr.bf16.mxu0 0
    %2408 = vmatpush1.bf16.msra.mxu0 0
    %2409 = vmatprep.subr.bf16.mxu0 0
    %2410 = vmatpush1.bf16.msra.mxu0 0
    %2411 = vmatprep.subr.bf16.mxu0 0
    %2412 = vmatpush1.bf16.msra.mxu0 0
    %2413 = vmatprep.subr.bf16.mxu0 0
    %2414 = vmatpush1.bf16.msra.mxu0 0
    %2415 = vmatprep.subr.bf16.mxu0 0
    %2416 = vmatpush1.bf16.msra.mxu0 0
    %2417 = vmatprep.mubr.bf16.mxu0 0
    %2418 = vmatmul.mubr.bf16.gmra.mrb[0].mxu0 %v2379
    %v2419 = vpop.f32.mrb[0].mxu0
    %v2420 = vadd.f32 0.0, %v2419
    %v2421 = vpop.f32.mrb[0].mxu0
    %v2422 = vadd.f32 0.0, %v2421
    %v2423 = vpop.f32.mrb[0].mxu0
    %v2424 = vpop.f32.mrb[0].mxu0
    %2425 = vdwg.mxu0
    %2426 = vmatprep.subr.bf16.mxu0 %v612
    %2427 = vmatpush1.bf16.msra.mxu0 %v611
    %2428 = vmatprep.subr.bf16.mxu0 %v616
    %2429 = vmatpush1.bf16.msra.mxu0 %v615
    %2430 = vmatprep.subr.bf16.mxu0 %v620
    %2431 = vmatpush1.bf16.msra.mxu0 %v619
    %2432 = vmatprep.subr.bf16.mxu0 %v624
    %2433 = vmatpush1.bf16.msra.mxu0 %v623
    %2434 = vmatprep.subr.bf16.mxu0 %v628
    %2435 = vmatpush1.bf16.msra.mxu0 %v627
    %2436 = vmatprep.subr.bf16.mxu0 %v632
    %2437 = vmatpush1.bf16.msra.mxu0 %v631
    %2438 = vmatprep.subr.bf16.mxu0 %v636
    %2439 = vmatpush1.bf16.msra.mxu0 %v635
    %2440 = vmatprep.subr.bf16.mxu0 %v640
    %2441 = vmatpush1.bf16.msra.mxu0 %v639
    %2442 = vmatprep.subr.bf16.mxu0 0
    %2443 = vmatpush1.bf16.msra.mxu0 0
    %2444 = vmatprep.subr.bf16.mxu0 0
    %2445 = vmatpush1.bf16.msra.mxu0 0
    %2446 = vmatprep.subr.bf16.mxu0 0
    %2447 = vmatpush1.bf16.msra.mxu0 0
    %2448 = vmatprep.subr.bf16.mxu0 0
    %2449 = vmatpush1.bf16.msra.mxu0 0
    %2450 = vmatprep.subr.bf16.mxu0 0
    %2451 = vmatpush1.bf16.msra.mxu0 0
    %2452 = vmatprep.subr.bf16.mxu0 0
    %2453 = vmatpush1.bf16.msra.mxu0 0
    %2454 = vmatprep.subr.bf16.mxu0 0
    %2455 = vmatpush1.bf16.msra.mxu0 0
    %2456 = vmatprep.subr.bf16.mxu0 0
    %2457 = vmatpush1.bf16.msra.mxu0 0
    %2458 = vmatprep.mubr.bf16.mxu0 0
    %2459 = vmatmul.mubr.bf16.gmra.mrb[0].mxu0 %v2379
    %v2460 = vpop.f32.mrb[0].mxu0
    %v2461 = vadd.f32 0.0, %v2460
    %v2462 = vpop.f32.mrb[0].mxu0
    %v2463 = vadd.f32 0.0, %v2462
    %v2464 = vpop.f32.mrb[0].mxu0
    %v2465 = vpop.f32.mrb[0].mxu0
    %2466 = vdwg.mxu0
    %v2467 = vadd.f32 %v2381, %v2420
    %v2468 = vadd.f32 %v2382, %v2422
    %v2469 = vadd.f32 %v2383, %v2461
    %v2470 = vadd.f32 %v2384, %v2463
    %v2471 = vld [vmem:[#allocation3] sm:$0xff]
    %v2473 = vunpack.c.l.b16 %v2471
    %v2474 = vunpack.c.h.b16 %v2471
    %v2475 = vpack.c.b16 %v2473, %v2473
    %v2476 = vpack.c.b16 %v2474, %v2474
    %2479 = vmatprep.subr.bf16.mxu0 %v960
    %2480 = vmatpush1.bf16.msra.mxu0 %v959
    %2481 = vmatprep.subr.bf16.mxu0 %v964
    %2482 = vmatpush1.bf16.msra.mxu0 %v963
    %2483 = vmatprep.subr.bf16.mxu0 %v968
    %2484 = vmatpush1.bf16.msra.mxu0 %v967
    %2485 = vmatprep.subr.bf16.mxu0 %v972
    %2486 = vmatpush1.bf16.msra.mxu0 %v971
    %2487 = vmatprep.subr.bf16.mxu0 %v976
    %2488 = vmatpush1.bf16.msra.mxu0 %v975
    %2489 = vmatprep.subr.bf16.mxu0 %v980
    %2490 = vmatpush1.bf16.msra.mxu0 %v979
    %2491 = vmatprep.subr.bf16.mxu0 %v984
    %2492 = vmatpush1.bf16.msra.mxu0 %v983
    %2493 = vmatprep.subr.bf16.mxu0 %v988
    %2494 = vmatpush1.bf16.msra.mxu0 %v987
    %2495 = vmatprep.subr.bf16.mxu0 %v992
    %2496 = vmatpush1.bf16.msra.mxu0 %v991
    %2497 = vmatprep.subr.bf16.mxu0 %v996
    %2498 = vmatpush1.bf16.msra.mxu0 %v995
    %2499 = vmatprep.subr.bf16.mxu0 %v1000
    %2500 = vmatpush1.bf16.msra.mxu0 %v999
    %2501 = vmatprep.subr.bf16.mxu0 %v1004
    %2502 = vmatpush1.bf16.msra.mxu0 %v1003
    %2503 = vmatprep.subr.bf16.mxu0 %v1008
    %2504 = vmatpush1.bf16.msra.mxu0 %v1007
    %2505 = vmatprep.subr.bf16.mxu0 %v1012
    %2506 = vmatpush1.bf16.msra.mxu0 %v1011
    %2507 = vmatprep.subr.bf16.mxu0 %v1016
    %2508 = vmatpush1.bf16.msra.mxu0 %v1015
    %2509 = vmatprep.subr.bf16.mxu0 %v1020
    %2510 = vmatpush1.bf16.msra.mxu0 %v1019
    %2511 = vmatprep.mubr.bf16.mxu0 %v2476
    %2512 = vmatmul.mubr.bf16.gmra.mrb[0].mxu0 %v2475
    %v2513 = vpop.f32.mrb[0].mxu0
    %v2514 = vadd.f32 %v461, %v2513
    %v2515 = vpop.f32.mrb[0].mxu0
    %v2516 = vadd.f32 %v465, %v2515
    %v2517 = vpop.f32.mrb[0].mxu0
    %v2518 = vpop.f32.mrb[0].mxu0
    %2519 = vdwg.mxu0
    %2520 = vmatprep.subr.bf16.mxu0 %v962
    %2521 = vmatpush1.bf16.msra.mxu0 %v961
    %2522 = vmatprep.subr.bf16.mxu0 %v966
    %2523 = vmatpush1.bf16.msra.mxu0 %v965
    %2524 = vmatprep.subr.bf16.mxu0 %v970
    %2525 = vmatpush1.bf16.msra.mxu0 %v969
    %2526 = vmatprep.subr.bf16.mxu0 %v974
    %2527 = vmatpush1.bf16.msra.mxu0 %v973
    %2528 = vmatprep.subr.bf16.mxu0 %v978
    %2529 = vmatpush1.bf16.msra.mxu0 %v977
    %2530 = vmatprep.subr.bf16.mxu0 %v982
    %2531 = vmatpush1.bf16.msra.mxu0 %v981
    %2532 = vmatprep.subr.bf16.mxu0 %v986
    %2533 = vmatpush1.bf16.msra.mxu0 %v985
    %2534 = vmatprep.subr.bf16.mxu0 %v990
    %2535 = vmatpush1.bf16.msra.mxu0 %v989
    %2536 = vmatprep.subr.bf16.mxu0 %v994
    %2537 = vmatpush1.bf16.msra.mxu0 %v993
    %2538 = vmatprep.subr.bf16.mxu0 %v998
    %2539 = vmatpush1.bf16.msra.mxu0 %v997
    %2540 = vmatprep.subr.bf16.mxu0 %v1002
    %2541 = vmatpush1.bf16.msra.mxu0 %v1001
    %2542 = vmatprep.subr.bf16.mxu0 %v1006
    %2543 = vmatpush1.bf16.msra.mxu0 %v1005
    %2544 = vmatprep.subr.bf16.mxu0 %v1010
    %2545 = vmatpush1.bf16.msra.mxu0 %v1009
    %2546 = vmatprep.subr.bf16.mxu0 %v1014
    %2547 = vmatpush1.bf16.msra.mxu0 %v1013
    %2548 = vmatprep.subr.bf16.mxu0 %v1018
    %2549 = vmatpush1.bf16.msra.mxu0 %v1017
    %2550 = vmatprep.subr.bf16.mxu0 %v1022
    %2551 = vmatpush1.bf16.msra.mxu0 %v1021
    %2552 = vmatprep.mubr.bf16.mxu0 %v2476
    %2553 = vmatmul.mubr.bf16.gmra.mrb[0].mxu0 %v2475
    %v2554 = vpop.f32.mrb[0].mxu0
    %v2555 = vadd.f32 %v469, %v2554
    %v2556 = vpop.f32.mrb[0].mxu0
    %v2557 = vadd.f32 %v473, %v2556
    %v2558 = vpop.f32.mrb[0].mxu0
    %v2559 = vpop.f32.mrb[0].mxu0
    %2560 = vdwg.mxu0
    %v2561 = vxor.u32 %v2514, 2147483648
    %v2562 = vxor.u32 %v2516, 2147483648
    %v2563 = vxor.u32 %v2555, 2147483648
    %v2564 = vmul.f32 %v2561, 1.442695
    %v2565 = vpow.pop %v2564
    %v2566 = vmul.f32 %v2562, 1.442695
    %v2567 = vpow.pop %v2566
    %v2568 = vmul.f32 %v2563, 1.442695
    %v2569 = vpow.pop %v2568
    %v2570 = vadd.f32 %v2565, 1.0
    %v2571 = vadd.f32 %v2567, 1.0
    %v2572 = vadd.f32 %v2569, 1.0
    %v2573 = vrcp.pop %v2570
    %v2574 = vmul.f32 1.0, %v2573
    %v2575 = vrcp.pop %v2571
    %v2576 = vmul.f32 1.0, %v2575
    %v2577 = vrcp.pop %v2572
    %v2578 = vmul.f32 1.0, %v2577
    %v2579 = vtanh.pop %v2557
    %v2580 = vmul.f32 %v2576, %v2350
    %v2581 = vmul.f32 %v2574, %v2579
    %v2582 = vadd.f32 %v2580, %v2581
    %v2583 = vtanh.pop %v2582
    %v2584 = vmul.f32 %v2578, %v2583
    %v2585 = vpack.c.bf16 %v2584, %v2584
    %2586 = vst [vmem:[#allocation3 + $0x4] sm:$0xf] %v2585
    %v2587 = vxor.u32 %v2467, 2147483648
    %v2588 = vxor.u32 %v2468, 2147483648
    %v2589 = vxor.u32 %v2469, 2147483648
    %v2590 = vmul.f32 %v2587, 1.442695
    %v2591 = vpow.pop %v2590
    %v2592 = vmul.f32 %v2588, 1.442695
    %v2593 = vpow.pop %v2592
    %v2594 = vmul.f32 %v2589, 1.442695
    %v2595 = vpow.pop %v2594
    %v2596 = vadd.f32 %v2591, 1.0
    %v2597 = vadd.f32 %v2593, 1.0
    %v2598 = vadd.f32 %v2595, 1.0
    %v2599 = vrcp.pop %v2596
    %v2600 = vmul.f32 1.0, %v2599
    %v2601 = vrcp.pop %v2597
    %v2602 = vmul.f32 1.0, %v2601
    %v2603 = vrcp.pop %v2598
    %v2604 = vmul.f32 1.0, %v2603
    %v2605 = vtanh.pop %v2470
    %v2606 = vmul.f32 %v2602, %v2376
    %v2607 = vmul.f32 %v2600, %v2605
    %v2608 = vadd.f32 %v2606, %v2607
    %v2609 = vtanh.pop %v2608
    %v2610 = vmul.f32 %v2604, %v2609
    %v2611 = vpack.c.bf16 %v2610, %v2610
    %2612 = vst [vmem:[#allocation3] sm:$0xf] %v2611
    %v2613 = vld [vmem:[#allocation3] sm:$0xff]
    %v2615 = vunpack.c.l.b16 %v2613
    %v2616 = vunpack.c.h.b16 %v2613
    %v2617 = vpack.c.b16 %v2615, %v2615
    %v2618 = vpack.c.b16 %v2616, %v2616
    %2621 = vmatprep.subr.bf16.mxu0 %v960
    %2622 = vmatpush1.bf16.msra.mxu0 %v959
    %2623 = vmatprep.subr.bf16.mxu0 %v964
    %2624 = vmatpush1.bf16.msra.mxu0 %v963
    %2625 = vmatprep.subr.bf16.mxu0 %v968
    %2626 = vmatpush1.bf16.msra.mxu0 %v967
    %2627 = vmatprep.subr.bf16.mxu0 %v972
    %2628 = vmatpush1.bf16.msra.mxu0 %v971
    %2629 = vmatprep.subr.bf16.mxu0 %v976
    %2630 = vmatpush1.bf16.msra.mxu0 %v975
    %2631 = vmatprep.subr.bf16.mxu0 %v980
    %2632 = vmatpush1.bf16.msra.mxu0 %v979
    %2633 = vmatprep.subr.bf16.mxu0 %v984
    %2634 = vmatpush1.bf16.msra.mxu0 %v983
    %2635 = vmatprep.subr.bf16.mxu0 %v988
    %2636 = vmatpush1.bf16.msra.mxu0 %v987
    %2637 = vmatprep.subr.bf16.mxu0 %v992
    %2638 = vmatpush1.bf16.msra.mxu0 %v991
    %2639 = vmatprep.subr.bf16.mxu0 %v996
    %2640 = vmatpush1.bf16.msra.mxu0 %v995
    %2641 = vmatprep.subr.bf16.mxu0 %v1000
    %2642 = vmatpush1.bf16.msra.mxu0 %v999
    %2643 = vmatprep.subr.bf16.mxu0 %v1004
    %2644 = vmatpush1.bf16.msra.mxu0 %v1003
    %2645 = vmatprep.subr.bf16.mxu0 %v1008
    %2646 = vmatpush1.bf16.msra.mxu0 %v1007
    %2647 = vmatprep.subr.bf16.mxu0 %v1012
    %2648 = vmatpush1.bf16.msra.mxu0 %v1011
    %2649 = vmatprep.subr.bf16.mxu0 %v1016
    %2650 = vmatpush1.bf16.msra.mxu0 %v1015
    %2651 = vmatprep.subr.bf16.mxu0 %v1020
    %2652 = vmatpush1.bf16.msra.mxu0 %v1019
    %2653 = vmatprep.mubr.bf16.mxu0 %v2618
    %2654 = vmatmul.mubr.bf16.gmra.mrb[0].mxu0 %v2617
    %v2655 = vpop.f32.mrb[0].mxu0
    %v2656 = vadd.f32 %v461, %v2655
    %v2657 = vpop.f32.mrb[0].mxu0
    %v2658 = vadd.f32 %v465, %v2657
    %v2659 = vpop.f32.mrb[0].mxu0
    %v2660 = vpop.f32.mrb[0].mxu0
    %2661 = vdwg.mxu0
    %2662 = vmatprep.subr.bf16.mxu0 %v962
    %2663 = vmatpush1.bf16.msra.mxu0 %v961
    %2664 = vmatprep.subr.bf16.mxu0 %v966
    %2665 = vmatpush1.bf16.msra.mxu0 %v965
    %2666 = vmatprep.subr.bf16.mxu0 %v970
    %2667 = vmatpush1.bf16.msra.mxu0 %v969
    %2668 = vmatprep.subr.bf16.mxu0 %v974
    %2669 = vmatpush1.bf16.msra.mxu0 %v973
    %2670 = vmatprep.subr.bf16.mxu0 %v978
    %2671 = vmatpush1.bf16.msra.mxu0 %v977
    %2672 = vmatprep.subr.bf16.mxu0 %v982
    %2673 = vmatpush1.bf16.msra.mxu0 %v981
    %2674 = vmatprep.subr.bf16.mxu0 %v986
    %2675 = vmatpush1.bf16.msra.mxu0 %v985
    %2676 = vmatprep.subr.bf16.mxu0 %v990
    %2677 = vmatpush1.bf16.msra.mxu0 %v989
    %2678 = vmatprep.subr.bf16.mxu0 %v994
    %2679 = vmatpush1.bf16.msra.mxu0 %v993
    %2680 = vmatprep.subr.bf16.mxu0 %v998
    %2681 = vmatpush1.bf16.msra.mxu0 %v997
    %2682 = vmatprep.subr.bf16.mxu0 %v1002
    %2683 = vmatpush1.bf16.msra.mxu0 %v1001
    %2684 = vmatprep.subr.bf16.mxu0 %v1006
    %2685 = vmatpush1.bf16.msra.mxu0 %v1005
    %2686 = vmatprep.subr.bf16.mxu0 %v1010
    %2687 = vmatpush1.bf16.msra.mxu0 %v1009
    %2688 = vmatprep.subr.bf16.mxu0 %v1014
    %2689 = vmatpush1.bf16.msra.mxu0 %v1013
    %2690 = vmatprep.subr.bf16.mxu0 %v1018
    %2691 = vmatpush1.bf16.msra.mxu0 %v1017
    %2692 = vmatprep.subr.bf16.mxu0 %v1022
    %2693 = vmatpush1.bf16.msra.mxu0 %v1021
    %2694 = vmatprep.mubr.bf16.mxu0 %v2618
    %2695 = vmatmul.mubr.bf16.gmra.mrb[0].mxu0 %v2617
    %v2696 = vpop.f32.mrb[0].mxu0
    %v2697 = vadd.f32 %v469, %v2696
    %v2698 = vpop.f32.mrb[0].mxu0
    %v2699 = vadd.f32 %v473, %v2698
    %v2700 = vpop.f32.mrb[0].mxu0
    %v2701 = vpop.f32.mrb[0].mxu0
    %2702 = vdwg.mxu0
    %v2703 = vxor.u32 %v2656, 2147483648
    %v2704 = vxor.u32 %v2658, 2147483648
    %v2705 = vxor.u32 %v2697, 2147483648
    %v2706 = vmul.f32 %v2703, 1.442695
    %v2707 = vpow.pop %v2706
    %v2708 = vmul.f32 %v2704, 1.442695
    %v2709 = vpow.pop %v2708
    %v2710 = vmul.f32 %v2705, 1.442695
    %v2711 = vpow.pop %v2710
    %v2712 = vadd.f32 %v2707, 1.0
    %v2713 = vadd.f32 %v2709, 1.0
    %v2714 = vadd.f32 %v2711, 1.0
    %v2715 = vrcp.pop %v2712
    %v2716 = vmul.f32 1.0, %v2715
    %v2717 = vrcp.pop %v2713
    %v2718 = vmul.f32 1.0, %v2717
    %v2719 = vrcp.pop %v2714
    %v2720 = vmul.f32 1.0, %v2719
    %v2721 = vtanh.pop %v2699
    %v2722 = vmul.f32 %v2718, %v2582
    %v2723 = vmul.f32 %v2716, %v2721
    %v2724 = vadd.f32 %v2722, %v2723
    %v2725 = vtanh.pop %v2724
    %v2726 = vmul.f32 %v2720, %v2725
    %v2727 = vld [vmem:[%s6] sm:$0xff]
    %v2728 = vld [vmem:[%s6 + $0x8] sm:$0xff]
    %v2729 = vld [vmem:[%s6 + $0x10] sm:$0xff]
    %v2730 = vld [vmem:[%s6 + $0x18] sm:$0xff]
    %v2731 = vld [vmem:[%s6 + $0x20] sm:$0xff]
    %v2732 = vld [vmem:[%s6 + $0x28] sm:$0xff]
    %v2733 = vld [vmem:[%s6 + $0x30] sm:$0xff]
    %v2734 = vld [vmem:[%s6 + $0x38] sm:$0xff]
    %v2735 = vld [vmem:[%s6 + $0x40] sm:$0xff]
    %v2736 = vld [vmem:[%s6 + $0x48] sm:$0xff]
    %v2737 = vld [vmem:[%s6 + $0x50] sm:$0xff]
    %v2738 = vld [vmem:[%s6 + $0x58] sm:$0xff]
    %v2739 = vld [vmem:[%s6 + $0x60] sm:$0xff]
    %v2740 = vld [vmem:[%s6 + $0x68] sm:$0xff]
    %v2741 = vld [vmem:[%s6 + $0x70] sm:$0xff]
    %v2742 = vld [vmem:[%s6 + $0x78] sm:$0xff]
    %v2743 = vld [vmem:[%s7] sm:$0x1]
    %v2745 = vlaneseq
    %v2746 = vshrl.u32 %v2745, 7
    %v2747 = vsub.s32 0, %v2746
    %v2748 = vrot.slane %v2743, %v2747
    %2750 = vmatprep.subr.mxu0 0.0
    %2751 = vmatpush1.msra.mxu0 %v2727
    %2752 = vmatprep.subr.mxu0 0.0
    %2753 = vmatpush1.msra.mxu0 %v2728
    %2754 = vmatprep.subr.mxu0 0.0
    %2755 = vmatpush1.msra.mxu0 %v2729
    %2756 = vmatprep.subr.mxu0 0.0
    %2757 = vmatpush1.msra.mxu0 %v2730
    %2758 = vmatprep.subr.mxu0 0.0
    %2759 = vmatpush1.msra.mxu0 %v2731
    %2760 = vmatprep.subr.mxu0 0.0
    %2761 = vmatpush1.msra.mxu0 %v2732
    %2762 = vmatprep.subr.mxu0 0.0
    %2763 = vmatpush1.msra.mxu0 %v2733
    %2764 = vmatprep.subr.mxu0 0.0
    %2765 = vmatpush1.msra.mxu0 %v2734
    %2766 = vmatprep.subr.mxu0 0.0
    %2767 = vmatpush1.msra.mxu0 %v2735
    %2768 = vmatprep.subr.mxu0 0.0
    %2769 = vmatpush1.msra.mxu0 %v2736
    %2770 = vmatprep.subr.mxu0 0.0
    %2771 = vmatpush1.msra.mxu0 %v2737
    %2772 = vmatprep.subr.mxu0 0.0
    %2773 = vmatpush1.msra.mxu0 %v2738
    %2774 = vmatprep.subr.mxu0 0.0
    %2775 = vmatpush1.msra.mxu0 %v2739
    %2776 = vmatprep.subr.mxu0 0.0
    %2777 = vmatpush1.msra.mxu0 %v2740
    %2778 = vmatprep.subr.mxu0 0.0
    %2779 = vmatpush1.msra.mxu0 %v2741
    %2780 = vmatprep.subr.mxu0 0.0
    %2781 = vmatpush1.msra.mxu0 %v2742
    %2782 = vmatprep.subr.mxu0 0.0
    %2783 = vmatpush1.msra.mxu0 0.0
    %2784 = vmatprep.subr.mxu0 0.0
    %2785 = vmatpush1.msra.mxu0 0.0
    %2786 = vmatprep.subr.mxu0 0.0
    %2787 = vmatpush1.msra.mxu0 0.0
    %2788 = vmatprep.subr.mxu0 0.0
    %2789 = vmatpush1.msra.mxu0 0.0
    %2790 = vmatprep.subr.mxu0 0.0
    %2791 = vmatpush1.msra.mxu0 0.0
    %2792 = vmatprep.subr.mxu0 0.0
    %2793 = vmatpush1.msra.mxu0 0.0
    %2794 = vmatprep.subr.mxu0 0.0
    %2795 = vmatpush1.msra.mxu0 0.0
    %2796 = vmatprep.subr.mxu0 0.0
    %2797 = vmatpush1.msra.mxu0 0.0
    %2798 = vmatprep.subr.mxu0 0.0
    %2799 = vmatpush1.msra.mxu0 0.0
    %2800 = vmatprep.subr.mxu0 0.0
    %2801 = vmatpush1.msra.mxu0 0.0
    %2802 = vmatprep.subr.mxu0 0.0
    %2803 = vmatpush1.msra.mxu0 0.0
    %2804 = vmatprep.subr.mxu0 0.0
    %2805 = vmatpush1.msra.mxu0 0.0
    %2806 = vmatprep.subr.mxu0 0.0
    %2807 = vmatpush1.msra.mxu0 0.0
    %2808 = vmatprep.subr.mxu0 0.0
    %2809 = vmatpush1.msra.mxu0 0.0
    %2810 = vmatprep.subr.mxu0 0.0
    %2811 = vmatpush1.msra.mxu0 0.0
    %2812 = vmatprep.subr.mxu0 0.0
    %2813 = vmatpush1.msra.mxu0 0.0
    %2814 = vmatprep.mubr.f32.mxu0 0.0
    %2815 = vmatmul.mubr.f32.gmra.mrb[0].mxu0 %v2726
    %v2816 = vpop.f32.mrb[0].mxu0
    %v2817 = vadd.f32 %v2748, %v2816
    %v2818 = vpop.f32.mrb[0].mxu0
    %2819 = vdwg.mxu0
    %vm2820 = vcmp.ge.f32.partialorder %v2817, 0.0
    %v2821 = vmul.f32 %v2817, 0.01
    %v2822 = vsel %vm2820, %v2817, %v2821
    %v2823 = vld [vmem:[%s8] sm:$0xff]
    %v2824 = vld [vmem:[%s8 + $0x8] sm:$0xff]
    %v2825 = vld [vmem:[%s9] sm:$0x1]
    %v2827 = vlaneseq
    %v2828 = vshrl.u32 %v2827, 7
    %v2829 = vsub.s32 0, %v2828
    %v2830 = vrot.slane %v2825, %v2829
    %vm2832 = vcmask 130048
    %v2834 = vsel %vm2832, %v2822, 0
    %2836 = vmatprep.subr.mxu0 0.0
    %2837 = vmatpush1.msra.mxu0 %v2823
    %2838 = vmatprep.subr.mxu0 0.0
    %2839 = vmatpush1.msra.mxu0 %v2824
    %2840 = vmatprep.subr.mxu0 0.0
    %2841 = vmatpush1.msra.mxu0 0.0
    %2842 = vmatprep.subr.mxu0 0.0
    %2843 = vmatpush1.msra.mxu0 0.0
    %2844 = vmatprep.subr.mxu0 0.0
    %2845 = vmatpush1.msra.mxu0 0.0
    %2846 = vmatprep.subr.mxu0 0.0
    %2847 = vmatpush1.msra.mxu0 0.0
    %2848 = vmatprep.subr.mxu0 0.0
    %2849 = vmatpush1.msra.mxu0 0.0
    %2850 = vmatprep.subr.mxu0 0.0
    %2851 = vmatpush1.msra.mxu0 0.0
    %2852 = vmatprep.subr.mxu0 0.0
    %2853 = vmatpush1.msra.mxu0 0.0
    %2854 = vmatprep.subr.mxu0 0.0
    %2855 = vmatpush1.msra.mxu0 0.0
    %2856 = vmatprep.subr.mxu0 0.0
    %2857 = vmatpush1.msra.mxu0 0.0
    %2858 = vmatprep.subr.mxu0 0.0
    %2859 = vmatpush1.msra.mxu0 0.0
    %2860 = vmatprep.subr.mxu0 0.0
    %2861 = vmatpush1.msra.mxu0 0.0
    %2862 = vmatprep.subr.mxu0 0.0
    %2863 = vmatpush1.msra.mxu0 0.0
    %2864 = vmatprep.subr.mxu0 0.0
    %2865 = vmatpush1.msra.mxu0 0.0
    %2866 = vmatprep.subr.mxu0 0.0
    %2867 = vmatpush1.msra.mxu0 0.0
    %2868 = vmatprep.subr.mxu0 0.0
    %2869 = vmatpush1.msra.mxu0 0.0
    %2870 = vmatprep.subr.mxu0 0.0
    %2871 = vmatpush1.msra.mxu0 0.0
    %2872 = vmatprep.subr.mxu0 0.0
    %2873 = vmatpush1.msra.mxu0 0.0
    %2874 = vmatprep.subr.mxu0 0.0
    %2875 = vmatpush1.msra.mxu0 0.0
    %2876 = vmatprep.subr.mxu0 0.0
    %2877 = vmatpush1.msra.mxu0 0.0
    %2878 = vmatprep.subr.mxu0 0.0
    %2879 = vmatpush1.msra.mxu0 0.0
    %2880 = vmatprep.subr.mxu0 0.0
    %2881 = vmatpush1.msra.mxu0 0.0
    %2882 = vmatprep.subr.mxu0 0.0
    %2883 = vmatpush1.msra.mxu0 0.0
    %2884 = vmatprep.subr.mxu0 0.0
    %2885 = vmatpush1.msra.mxu0 0.0
    %2886 = vmatprep.subr.mxu0 0.0
    %2887 = vmatpush1.msra.mxu0 0.0
    %2888 = vmatprep.subr.mxu0 0.0
    %2889 = vmatpush1.msra.mxu0 0.0
    %2890 = vmatprep.subr.mxu0 0.0
    %2891 = vmatpush1.msra.mxu0 0.0
    %2892 = vmatprep.subr.mxu0 0.0
    %2893 = vmatpush1.msra.mxu0 0.0
    %2894 = vmatprep.subr.mxu0 0.0
    %2895 = vmatpush1.msra.mxu0 0.0
    %2896 = vmatprep.subr.mxu0 0.0
    %2897 = vmatpush1.msra.mxu0 0.0
    %2898 = vmatprep.subr.mxu0 0.0
    %2899 = vmatpush1.msra.mxu0 0.0
    %2900 = vmatprep.mubr.f32.mxu0 0.0
    %2901 = vmatmul.mubr.f32.gmra.mrb[0].mxu0 %v2834
    %v2902 = vpop.f32.mrb[0].mxu0
    %v2903 = vadd.f32 %v2830, %v2902
    %v2904 = vpop.f32.mrb[0].mxu0
    %2905 = vdwg.mxu0
    %2906 = vst [vmem:[%s10] sm:$0xff] %v2903
    // Predicated region
    $region58: #{lstm_cat_forward.1} parent=1 // pred_check
      _
    $region59: #{lstm_cat_forward.1} parent=1 // pred_check_branch
      %2908 = sbr.rel (0) target = $region61
    $region60: #{lstm_cat_forward.1} parent=1 // pred_region
      _
    $region61: #{lstm_cat_forward.1} parent=1 // pred_fallthru
      _
    // Predicated region
    $region62: #{lstm_cat_forward.1} parent=1 // pred_check
      _
    $region63: #{lstm_cat_forward.1} parent=1 // pred_check_branch
      %2910 = sbr.rel (0) target = $region65
    $region64: #{lstm_cat_forward.1} parent=1 // pred_region
      _
    $region65: #{lstm_cat_forward.1} parent=1 // pred_fallthru
      _
    %2911 = vsyncpa [#allocation5], 1
    %2912 = vsyncpa [#allocation7], 1
    %2913 = vsyncpa [#allocation10], 1

</llo_original>
